<compile_context>
chip_gen: v6e
topology: v6e:2x2x1
jax: 0.10.0
libtpu: 0.0.40
codegen_flags: <defaults>
</compile_context>

<pallas_src>
import math
from functools import partial

import jax
import jax.numpy as jnp
from jax.experimental import pallas as pl
from jax.experimental.pallas import tpu as pltpu


_STATS_CHUNK = 512  # rows per partial-stats reduction chunk (bounds f32 temporaries)


# --------------------------------------------------------------------------------------
# Kernel 1: conv (kw-grouped im2col, 3 MXU matmuls) + per-tile partial BN statistics
# --------------------------------------------------------------------------------------
def conv_stats_kernel(x_ref, w_ref, conv_ref, sum_ref, ssq_ref, xpad_ref):
    # x_ref:    (TN, H, W, Cin)       NHWC input tile (MXU dtype), unpadded
    # w_ref:    (3, 3*Cin, Cout)      weights grouped by kw: w[kw, kh*Cin + i, o]
    # conv_ref: (TN, H*W, Cout)       conv activations (pre-BN), bf16 (or f32 in check mode)
    # sum_ref:  (1, 1, Cout)          per-tile  sum_{n,h,w} conv   (f32)
    # ssq_ref:  (1, 1, Cout)          per-tile  sum_{n,h,w} conv^2 (f32)
    # xpad_ref: VMEM (TN, H+2, W+2, Cin) scratch: zero-padded tile (halo built in-kernel)
    TN, H, W, Cin = x_ref.shape
    Cout = conv_ref.shape[-1]
    rows = TN * H * W

    # Build the pad=1 halo in VMEM (no padded HBM copy of x).
    xpad_ref[...] = jnp.zeros_like(xpad_ref)
    xpad_ref[:, 1:H + 1, 1:W + 1, :] = x_ref[...]

    # im2col grouped by kw: 3 matmuls with K = 3*Cin, f32 accumulation.
    # Only the kw = 1, 2 slices touch the sublane (W) axis at unaligned offsets; the kh
    # taps are major-dim slices (free) and the col buffer is 3x the tile, not 9x.
    acc = jnp.zeros((rows, Cout), jnp.float32)
    for kw in range(3):
        x_kw = xpad_ref[:, :, kw:kw + W, :]                              # (TN, H+2, W, Cin)
        col = jnp.concatenate([x_kw[:, kh:kh + H] for kh in range(3)],
                              axis=-1)                                   # (TN, H, W, 3*Cin)
        col = col.reshape(rows, 3 * Cin)
        acc = acc + jnp.dot(col, w_ref[kw], preferred_element_type=jnp.float32)

    # Store the (pre-BN) conv activations in the narrow intermediate dtype.
    conv_ref[...] = acc.reshape(TN, H * W, Cout).astype(conv_ref.dtype)

    # Exact f32 per-tile statistics, reduced in bounded chunks.
    s = jnp.zeros((1, Cout), jnp.float32)
    q = jnp.zeros((1, Cout), jnp.float32)
    for r0 in range(0, rows, _STATS_CHUNK):
        blk = acc[r0:min(r0 + _STATS_CHUNK, rows)]
        s = s + jnp.sum(blk, axis=0, keepdims=True)
        q = q + jnp.sum(blk * blk, axis=0, keepdims=True)
    sum_ref[...] = s.reshape(1, 1, Cout)
    ssq_ref[...] = q.reshape(1, 1, Cout)


# --------------------------------------------------------------------------------------
# Kernel 2: fused BN affine (scale/shift from global stats) + ReLU + MaxPool2d(2)
# --------------------------------------------------------------------------------------
def bn_relu_pool_kernel(conv_ref, scale_ref, shift_ref, o_ref, *, H, W):
    # conv_ref:  (TN, H*W, Cout)      conv activations (bf16 or f32), upcast to f32 here
    # scale_ref: (1, Cout)            gamma * rsqrt(var + eps)
    # shift_ref: (1, Cout)            beta  - mean * scale
    # o_ref:     (TN, H2*W2, Cout)    pooled output (bf16 or f32)
    TN = conv_ref.shape[0]
    Cout = conv_ref.shape[-1]
    H2, W2 = H // 2, W // 2

    y = conv_ref[...].astype(jnp.float32).reshape(TN * H * W, Cout)
    y = jnp.maximum(y * scale_ref[...] + shift_ref[...], 0.0)        # BN affine + ReLU (VPU)

    # MaxPool2d(2) as two reshape+max steps; no scratch round trip, no selection matmuls.
    # W-pool: rows are (n, h, w) with w fastest -> pair even/odd w.
    yw = y.reshape(TN * H * W2, 2, Cout)
    wmax = jnp.maximum(yw[:, 0], yw[:, 1])                            # (TN*H*W2, Cout)
    # H-pool: rows are (n, h, w2) -> pair h / h+1.
    th = wmax.reshape(TN * H2, 2, W2, Cout)
    pooled = jnp.maximum(th[:, 0], th[:, 1])                          # (TN*H2, W2, Cout)

    o_ref[...] = pooled.reshape(TN, H2 * W2, Cout).astype(o_ref.dtype)


# --------------------------------------------------------------------------------------
# Wrapper: layout plumbing + cross-tile BN stat reduction, all inside one jit
# --------------------------------------------------------------------------------------
@partial(jax.jit, static_argnames=("mxu_dtype", "out_dtype", "tile_n", "vmem_limit_bytes"))
def conv_block_forward(x_nchw, w_oihw, b, gamma, beta,
                       mxu_dtype=jnp.bfloat16, out_dtype=jnp.bfloat16,
                       tile_n=1, vmem_limit_bytes=None):
    """ConvBlock forward. x_nchw: (N, Cin, H, W) -> (N, Cout, H//2, W//2) (NCHW)."""
    N, Cin, H, W = x_nchw.shape
    Cout = w_oihw.shape[0]
    assert H % 2 == 0 and W % 2 == 0, "MaxPool2d(2) path assumes even H, W"
    assert N % tile_n == 0, "tile_n must divide the batch"
    H2, W2 = H // 2, W // 2
    TN = tile_n
    num_tiles = N // TN
    eps = 1e-5

    # Intermediate conv activations: bf16 on the fast path, f32 only for the tight check.
    conv_dtype = jnp.float32 if mxu_dtype == jnp.float32 else jnp.bfloat16

    # NCHW -> NHWC + cast: a single fused XLA pass over x (boundary-only; no pad pass).
    x = jnp.transpose(x_nchw, (0, 2, 3, 1)).astype(mxu_dtype)

    # Weights grouped by kw so the kernel's K-axis layout matches its col build.
    # (O, I, KH, KW) -> (KW, KH, I, O) -> (3, 3*Cin, Cout)
    w2 = jnp.transpose(w_oihw, (3, 2, 1, 0)).reshape(3, 3 * Cin, Cout).astype(mxu_dtype)
    del b  # conv bias cancels exactly under train-mode BatchNorm (see header note)

    cparams = pltpu.CompilerParams(
        dimension_semantics=("parallel",),
        vmem_limit_bytes=vmem_limit_bytes,
    )

    # Pass 1: conv + per-tile partial sums (grid over N, "parallel" for megacore / v7x).
    conv, psum, pssq = pl.pallas_call(
        conv_stats_kernel,
        grid=(num_tiles,),
        in_specs=[
            pl.BlockSpec((TN, H, W, Cin), lambda i: (i, 0, 0, 0)),
            pl.BlockSpec((3, 3 * Cin, Cout), lambda i: (0, 0, 0)),
        ],
        out_specs=(
            pl.BlockSpec((TN, H * W, Cout), lambda i: (i, 0, 0)),
            pl.BlockSpec((1, 1, Cout), lambda i: (i, 0, 0)),
            pl.BlockSpec((1, 1, Cout), lambda i: (i, 0, 0)),
        ),
        out_shape=(
            jax.ShapeDtypeStruct((N, H * W, Cout), conv_dtype),
            jax.ShapeDtypeStruct((num_tiles, 1, Cout), jnp.float32),
            jax.ShapeDtypeStruct((num_tiles, 1, Cout), jnp.float32),
        ),
        scratch_shapes=[pltpu.VMEM((TN, H + 2, W + 2, Cin), mxu_dtype)],
        compiler_params=cparams,
    )(x, w2)

    # Global (cross-tile) batch statistics + folded BN affine — tiny, fused by XLA.
    cnt = float(N * H * W)
    mean = jnp.sum(psum, axis=(0, 1)) / cnt
    var = jnp.sum(pssq, axis=(0, 1)) / cnt - mean * mean
    var = jnp.maximum(var, 0.0)
    inv = jax.lax.rsqrt(var + eps)
    scale = (gamma * inv).reshape(1, Cout).astype(jnp.float32)
    shift = (beta - mean * gamma * inv).reshape(1, Cout).astype(jnp.float32)

    # Pass 2: normalize + ReLU + MaxPool2d(2) (grid over N, "parallel").
    out = pl.pallas_call(
        partial(bn_relu_pool_kernel, H=H, W=W),
        grid=(num_tiles,),
        in_specs=[
            pl.BlockSpec((TN, H * W, Cout), lambda i: (i, 0, 0)),
            pl.BlockSpec((1, Cout), lambda i: (0, 0)),
            pl.BlockSpec((1, Cout), lambda i: (0, 0)),
        ],
        out_specs=pl.BlockSpec((TN, H2 * W2, Cout), lambda i: (i, 0, 0)),
        out_shape=jax.ShapeDtypeStruct((N, H2 * W2, Cout), out_dtype),
        compiler_params=cparams,
    )(conv, scale, shift)

    out = out.reshape(N, H2, W2, Cout)
    return jnp.transpose(out, (0, 3, 1, 2))              # NHWC -> NCHW (module boundary)


def _default_vmem_limit_bytes():
    """Raise the scoped-VMEM ceiling, capped safely below physical capacity per chip."""
    try:
        cap = int(pltpu.get_tpu_info().vmem_capacity_bytes)
        if cap <= 0:
            return None
        return min(96 * 1024 * 1024, int(cap * 3 // 4))
    except Exception:
        return None


# --------------------------------------------------------------------------------------
# Params / reference
# --------------------------------------------------------------------------------------
def init_convblock_params(key, indim, outdim):
    """Deterministic params matching ConvBlock.__init__ + init_layer."""
    k1, k2 = jax.random.split(key)
    n = 3 * 3 * outdim
    w = jax.random.normal(k1, (outdim, indim, 3, 3), jnp.float32) * math.sqrt(2.0 / n)
    bound = 1.0 / math.sqrt(indim * 3 * 3)               # PyTorch default conv bias init
    b = jax.random.uniform(k2, (outdim,), jnp.float32, -bound, bound)
    gamma = jnp.ones((outdim,), jnp.float32)              # BN weight = 1
    beta = jnp.zeros((outdim,), jnp.float32)               # BN bias = 0
    return w, b, gamma, beta


def reference_forward(x_nchw, w_oihw, b, gamma, beta, eps=1e-5):
    """Plain-JAX reference (same semantics as the PyTorch trunk in train mode)."""
    conv = jax.lax.conv_general_dilated(
        x_nchw, w_oihw, window_strides=(1, 1), padding=((1, 1), (1, 1)),
        dimension_numbers=("NCHW", "OIHW", "NCHW"),
        precision=jax.lax.Precision.HIGHEST)
    conv = conv + b.reshape(1, -1, 1, 1)
    mean = jnp.mean(conv, axis=(0, 2, 3), keepdims=True)
    var = jnp.mean((conv - mean) ** 2, axis=(0, 2, 3), keepdims=True)
    y = (conv - mean) * jax.lax.rsqrt(var + eps)
    y = y * gamma.reshape(1, -1, 1, 1) + beta.reshape(1, -1, 1, 1)
    y = jnp.maximum(y, 0.0)
    return jax.lax.reduce_window(y, -jnp.inf, jax.lax.max,
                                 (1, 1, 2, 2), (1, 1, 2, 2), "VALID")


if __name__ == "__main__":
    key = jax.random.PRNGKey(0)
    kx, kp = jax.random.split(key)

    N, Cin, H, W, Cout = 2, 4, 16, 16, 8
    x = jax.random.normal(kx, (N, Cin, H, W), jnp.float32)
    w, b, gamma, beta = init_convblock_params(kp, Cin, Cout)

    ref = reference_forward(x, w, b, gamma, beta)
    vmem_limit = _default_vmem_limit_bytes()

    # f32 MXU operands + f32 intermediate/output: tight numerical check (tiled grid=(2,)).
    out_f32 = jax.block_until_ready(
        conv_block_forward(x, w, b, gamma, beta,
                           mxu_dtype=jnp.float32, out_dtype=jnp.float32,
                           tile_n=1, vmem_limit_bytes=vmem_limit))
    assert out_f32.shape == (N, Cout, H // 2, W // 2), out_f32.shape
    err_f32 = float(jnp.max(jnp.abs(out_f32 - ref)))
    assert err_f32 < 1e-2, f"f32 max abs err {err_f32}"

    # Fast path: bf16 MXU operands, bf16 conv intermediate + bf16 output
    # (BN statistics / accumulation stay f32).  Tolerance = bf16 quantization level.
    out_bf16 = jax.block_until_ready(
        conv_block_forward(x, w, b, gamma, beta,
                           mxu_dtype=jnp.bfloat16, out_dtype=jnp.bfloat16,
                           tile_n=1, vmem_limit_bytes=vmem_limit))
    assert out_bf16.shape == (N, Cout, H // 2, W // 2), out_bf16.shape
    diff = jnp.abs(out_bf16.astype(jnp.float32) - ref)
    err_max = float(jnp.max(diff))
    err_mean = float(jnp.mean(diff))
    assert err_max < 2e-1 and err_mean < 3e-2, f"bf16 err max {err_max} mean {err_mean}"

    print("KERNEL_OK")
</pallas_src>

<mosaic_0001>
module attributes {stable_mosaic.version = 11 : i64} {
  func.func @conv_stats_kernel(%arg0: i32, %arg1: memref<1x16x16x4xf32, #tpu.memory_space<vmem>>, %arg2: memref<3x12x8xf32, #tpu.memory_space<vmem>>, %arg3: memref<1x256x8xf32, #tpu.memory_space<vmem>>, %arg4: memref<1x1x8xf32, #tpu.memory_space<vmem>>, %arg5: memref<1x1x8xf32, #tpu.memory_space<vmem>>, %arg6: memref<1x18x18x4xf32, #tpu.memory_space<vmem>>) attributes {dimension_semantics = [#tpu.dimension_semantics<parallel>], iteration_bounds = array<i64: 2>, scalar_prefetch = 0 : i64, scratch_operands = 1 : i64, tpu.core_type = #tpu.core_type<tc>, window_params = [{transform_indices = @transform_0, window_bounds = array<i64: 1, 16, 16, 4>}, {pipeline_mode = #tpu.pipeline_mode<synchronous>, transform_indices = @transform_1, window_bounds = array<i64: 3, 12, 8>}, {transform_indices = @transform_2, window_bounds = array<i64: 1, 256, 8>}, {transform_indices = @transform_3, window_bounds = array<i64: 1, 1, 8>}, {transform_indices = @transform_4, window_bounds = array<i64: 1, 1, 8>}]} {
    %cst = arith.constant 0.000000e+00 : f32
    %0 = vector.broadcast %cst : f32 to vector<1x18x18x4xf32>
    %c0 = arith.constant 0 : index
    %c0_0 = arith.constant 0 : index
    %c0_1 = arith.constant 0 : index
    %c0_2 = arith.constant 0 : index
    %1 = vector.load %arg6[%c0, %c0_0, %c0_1, %c0_2] : memref<1x18x18x4xf32, #tpu.memory_space<vmem>>, vector<1x18x18x4xf32>
    tpu.vector_store %arg6[%c0, %c0_0, %c0_1, %c0_2], %0 {strides = array<i32>} : memref<1x18x18x4xf32, #tpu.memory_space<vmem>>, vector<1x18x18x4xf32>,
    %c0_3 = arith.constant 0 : index
    %c0_4 = arith.constant 0 : index
    %c0_5 = arith.constant 0 : index
    %c0_6 = arith.constant 0 : index
    %2 = vector.load %arg1[%c0_3, %c0_4, %c0_5, %c0_6] : memref<1x16x16x4xf32, #tpu.memory_space<vmem>>, vector<1x16x16x4xf32>
    %c0_7 = arith.constant 0 : index
    %c1 = arith.constant 1 : index
    %c1_8 = arith.constant 1 : index
    %c0_9 = arith.constant 0 : index
    %3 = vector.load %arg6[%c0_7, %c1, %c1_8, %c0_9] : memref<1x18x18x4xf32, #tpu.memory_space<vmem>>, vector<1x16x16x4xf32>
    tpu.vector_store %arg6[%c0_7, %c1, %c1_8, %c0_9], %2 {strides = array<i32>} : memref<1x18x18x4xf32, #tpu.memory_space<vmem>>, vector<1x16x16x4xf32>,
    %cst_10 = arith.constant 0.000000e+00 : f32
    %4 = vector.broadcast %cst_10 : f32 to vector<256x8xf32>
    %c0_11 = arith.constant 0 : index
    %c0_12 = arith.constant 0 : index
    %c0_13 = arith.constant 0 : index
    %c0_14 = arith.constant 0 : index
    %5 = vector.load %arg6[%c0_11, %c0_12, %c0_13, %c0_14] : memref<1x18x18x4xf32, #tpu.memory_space<vmem>>, vector<1x18x16x4xf32>
    %6 = vector.extract_strided_slice %5 {offsets = [0, 0, 0, 0], sizes = [1, 16, 16, 4], strides = [1, 1, 1, 1]} : vector<1x18x16x4xf32> to vector<1x16x16x4xf32>
    %7 = vector.extract_strided_slice %5 {offsets = [0, 1, 0, 0], sizes = [1, 16, 16, 4], strides = [1, 1, 1, 1]} : vector<1x18x16x4xf32> to vector<1x16x16x4xf32>
    %8 = vector.extract_strided_slice %5 {offsets = [0, 2, 0, 0], sizes = [1, 16, 16, 4], strides = [1, 1, 1, 1]} : vector<1x18x16x4xf32> to vector<1x16x16x4xf32>
    %9 = tpu.concatenate %6, %7, %8 in 3 : vector<1x16x16x4xf32>, vector<1x16x16x4xf32>, vector<1x16x16x4xf32> -> vector<1x16x16x12xf32>
    %10 = vector.shape_cast %9 : vector<1x16x16x12xf32> to vector<256x12xf32>
    %c0_15 = arith.constant 0 : index
    %c0_16 = arith.constant 0 : index
    %c0_17 = arith.constant 0 : index
    %11 = vector.load %arg2[%c0_15, %c0_16, %c0_17] : memref<3x12x8xf32, #tpu.memory_space<vmem>>, vector<1x12x8xf32>
    %12 = vector.shape_cast %11 : vector<1x12x8xf32> to vector<12x8xf32>
    %cst_18 = arith.constant dense<0.000000e+00> : vector<256x8xf32>
    %13 = tpu.matmul %10, %12, %cst_18 {dimension_numbers = #tpu.dot_dimension_numbers<[1], [0], [0], [1], [0, 0, 1, 1], [], []>} : vector<256x12xf32>, vector<12x8xf32>, vector<256x8xf32> -> vector<256x8xf32>
    %14 = arith.addf %4, %13 : vector<256x8xf32>
    %c0_19 = arith.constant 0 : index
    %c0_20 = arith.constant 0 : index
    %c1_21 = arith.constant 1 : index
    %c0_22 = arith.constant 0 : index
    %15 = vector.load %arg6[%c0_19, %c0_20, %c1_21, %c0_22] : memref<1x18x18x4xf32, #tpu.memory_space<vmem>>, vector<1x18x16x4xf32>
    %16 = vector.extract_strided_slice %15 {offsets = [0, 0, 0, 0], sizes = [1, 16, 16, 4], strides = [1, 1, 1, 1]} : vector<1x18x16x4xf32> to vector<1x16x16x4xf32>
    %17 = vector.extract_strided_slice %15 {offsets = [0, 1, 0, 0], sizes = [1, 16, 16, 4], strides = [1, 1, 1, 1]} : vector<1x18x16x4xf32> to vector<1x16x16x4xf32>
    %18 = vector.extract_strided_slice %15 {offsets = [0, 2, 0, 0], sizes = [1, 16, 16, 4], strides = [1, 1, 1, 1]} : vector<1x18x16x4xf32> to vector<1x16x16x4xf32>
    %19 = tpu.concatenate %16, %17, %18 in 3 : vector<1x16x16x4xf32>, vector<1x16x16x4xf32>, vector<1x16x16x4xf32> -> vector<1x16x16x12xf32>
    %20 = vector.shape_cast %19 : vector<1x16x16x12xf32> to vector<256x12xf32>
    %c1_23 = arith.constant 1 : index
    %c0_24 = arith.constant 0 : index
    %c0_25 = arith.constant 0 : index
    %21 = vector.load %arg2[%c1_23, %c0_24, %c0_25] : memref<3x12x8xf32, #tpu.memory_space<vmem>>, vector<1x12x8xf32>
    %22 = vector.shape_cast %21 : vector<1x12x8xf32> to vector<12x8xf32>
    %cst_26 = arith.constant dense<0.000000e+00> : vector<256x8xf32>
    %23 = tpu.matmul %20, %22, %cst_26 {dimension_numbers = #tpu.dot_dimension_numbers<[1], [0], [0], [1], [0, 0, 1, 1], [], []>} : vector<256x12xf32>, vector<12x8xf32>, vector<256x8xf32> -> vector<256x8xf32>
    %24 = arith.addf %14, %23 : vector<256x8xf32>
    %c0_27 = arith.constant 0 : index
    %c0_28 = arith.constant 0 : index
    %c2 = arith.constant 2 : index
    %c0_29 = arith.constant 0 : index
    %25 = vector.load %arg6[%c0_27, %c0_28, %c2, %c0_29] : memref<1x18x18x4xf32, #tpu.memory_space<vmem>>, vector<1x18x16x4xf32>
    %26 = vector.extract_strided_slice %25 {offsets = [0, 0, 0, 0], sizes = [1, 16, 16, 4], strides = [1, 1, 1, 1]} : vector<1x18x16x4xf32> to vector<1x16x16x4xf32>
    %27 = vector.extract_strided_slice %25 {offsets = [0, 1, 0, 0], sizes = [1, 16, 16, 4], strides = [1, 1, 1, 1]} : vector<1x18x16x4xf32> to vector<1x16x16x4xf32>
    %28 = vector.extract_strided_slice %25 {offsets = [0, 2, 0, 0], sizes = [1, 16, 16, 4], strides = [1, 1, 1, 1]} : vector<1x18x16x4xf32> to vector<1x16x16x4xf32>
    %29 = tpu.concatenate %26, %27, %28 in 3 : vector<1x16x16x4xf32>, vector<1x16x16x4xf32>, vector<1x16x16x4xf32> -> vector<1x16x16x12xf32>
    %30 = vector.shape_cast %29 : vector<1x16x16x12xf32> to vector<256x12xf32>
    %c2_30 = arith.constant 2 : index
    %c0_31 = arith.constant 0 : index
    %c0_32 = arith.constant 0 : index
    %31 = vector.load %arg2[%c2_30, %c0_31, %c0_32] : memref<3x12x8xf32, #tpu.memory_space<vmem>>, vector<1x12x8xf32>
    %32 = vector.shape_cast %31 : vector<1x12x8xf32> to vector<12x8xf32>
    %cst_33 = arith.constant dense<0.000000e+00> : vector<256x8xf32>
    %33 = tpu.matmul %30, %32, %cst_33 {dimension_numbers = #tpu.dot_dimension_numbers<[1], [0], [0], [1], [0, 0, 1, 1], [], []>} : vector<256x12xf32>, vector<12x8xf32>, vector<256x8xf32> -> vector<256x8xf32>
    %34 = arith.addf %24, %33 : vector<256x8xf32>
    %35 = vector.shape_cast %34 : vector<256x8xf32> to vector<1x256x8xf32>
    %c0_34 = arith.constant 0 : index
    %c0_35 = arith.constant 0 : index
    %c0_36 = arith.constant 0 : index
    %36 = vector.load %arg3[%c0_34, %c0_35, %c0_36] : memref<1x256x8xf32, #tpu.memory_space<vmem>>, vector<1x256x8xf32>
    tpu.vector_store %arg3[%c0_34, %c0_35, %c0_36], %35 {strides = array<i32>} : memref<1x256x8xf32, #tpu.memory_space<vmem>>, vector<1x256x8xf32>,
    %cst_37 = arith.constant 0.000000e+00 : f32
    %37 = vector.broadcast %cst_37 : f32 to vector<1x8xf32>
    %cst_38 = arith.constant 0.000000e+00 : f32
    %38 = vector.broadcast %cst_38 : f32 to vector<1x8xf32>
    %cst_39 = arith.constant dense<0.000000e+00> : vector<8xf32>
    %39 = vector.multi_reduction <add>, %34, %cst_39 [0] : vector<256x8xf32> to vector<8xf32>
    %40 = vector.shape_cast %39 : vector<8xf32> to vector<1x8xf32>
    %41 = arith.addf %37, %40 : vector<1x8xf32>
    %42 = arith.mulf %34, %34 : vector<256x8xf32>
    %cst_40 = arith.constant dense<0.000000e+00> : vector<8xf32>
    %43 = vector.multi_reduction <add>, %42, %cst_40 [0] : vector<256x8xf32> to vector<8xf32>
    %44 = vector.shape_cast %43 : vector<8xf32> to vector<1x8xf32>
    %45 = arith.addf %38, %44 : vector<1x8xf32>
    %46 = vector.shape_cast %41 : vector<1x8xf32> to vector<1x1x8xf32>
    %c0_41 = arith.constant 0 : index
    %c0_42 = arith.constant 0 : index
    %c0_43 = arith.constant 0 : index
    %47 = vector.load %arg4[%c0_41, %c0_42, %c0_43] : memref<1x1x8xf32, #tpu.memory_space<vmem>>, vector<1x1x8xf32>
    tpu.vector_store %arg4[%c0_41, %c0_42, %c0_43], %46 {strides = array<i32>} : memref<1x1x8xf32, #tpu.memory_space<vmem>>, vector<1x1x8xf32>,
    %48 = vector.shape_cast %45 : vector<1x8xf32> to vector<1x1x8xf32>
    %c0_44 = arith.constant 0 : index
    %c0_45 = arith.constant 0 : index
    %c0_46 = arith.constant 0 : index
    %49 = vector.load %arg5[%c0_44, %c0_45, %c0_46] : memref<1x1x8xf32, #tpu.memory_space<vmem>>, vector<1x1x8xf32>
    tpu.vector_store %arg5[%c0_44, %c0_45, %c0_46], %48 {strides = array<i32>} : memref<1x1x8xf32, #tpu.memory_space<vmem>>, vector<1x1x8xf32>,
    return
  }
  func.func @transform_0(%arg0: i32) -> (i32, i32, i32, i32) {
    %c0_i32 = arith.constant 0 : i32
    %c0_i32_0 = arith.constant 0 : i32
    %c0_i32_1 = arith.constant 0 : i32
    %c0_i32_2 = arith.constant 0 : i32
    return %arg0, %c0_i32, %c0_i32_0, %c0_i32_1 : i32, i32, i32, i32
  }
  func.func @transform_1(%arg0: i32) -> (i32, i32, i32) {
    %c0_i32 = arith.constant 0 : i32
    %c0_i32_0 = arith.constant 0 : i32
    %c0_i32_1 = arith.constant 0 : i32
    %c0_i32_2 = arith.constant 0 : i32
    return %c0_i32, %c0_i32_0, %c0_i32_1 : i32, i32, i32
  }
  func.func @transform_2(%arg0: i32) -> (i32, i32, i32) {
    %c0_i32 = arith.constant 0 : i32
    %c0_i32_0 = arith.constant 0 : i32
    %c0_i32_1 = arith.constant 0 : i32
    return %arg0, %c0_i32, %c0_i32_0 : i32, i32, i32
  }
  func.func @transform_3(%arg0: i32) -> (i32, i32, i32) {
    %c0_i32 = arith.constant 0 : i32
    %c0_i32_0 = arith.constant 0 : i32
    %c0_i32_1 = arith.constant 0 : i32
    return %arg0, %c0_i32, %c0_i32_0 : i32, i32, i32
  }
  func.func @transform_4(%arg0: i32) -> (i32, i32, i32) {
    %c0_i32 = arith.constant 0 : i32
    %c0_i32_0 = arith.constant 0 : i32
    %c0_i32_1 = arith.constant 0 : i32
    return %arg0, %c0_i32, %c0_i32_0 : i32, i32, i32
  }
}

module attributes {stable_mosaic.version = 11 : i64} {
  func.func @bn_relu_pool_kernel(%arg0: i32, %arg1: memref<1x256x8xf32, #tpu.memory_space<vmem>>, %arg2: memref<1x8xf32, #tpu.memory_space<vmem>>, %arg3: memref<1x8xf32, #tpu.memory_space<vmem>>, %arg4: memref<1x64x8xf32, #tpu.memory_space<vmem>>) attributes {dimension_semantics = [#tpu.dimension_semantics<parallel>], iteration_bounds = array<i64: 2>, scalar_prefetch = 0 : i64, scratch_operands = 0 : i64, tpu.core_type = #tpu.core_type<tc>, window_params = [{transform_indices = @transform_0, window_bounds = array<i64: 1, 256, 8>}, {pipeline_mode = #tpu.pipeline_mode<synchronous>, transform_indices = @transform_1, window_bounds = array<i64: 1, 8>}, {pipeline_mode = #tpu.pipeline_mode<synchronous>, transform_indices = @transform_2, window_bounds = array<i64: 1, 8>}, {transform_indices = @transform_3, window_bounds = array<i64: 1, 64, 8>}]} {
    %c0 = arith.constant 0 : index
    %c0_0 = arith.constant 0 : index
    %c0_1 = arith.constant 0 : index
    %0 = vector.load %arg1[%c0, %c0_0, %c0_1] : memref<1x256x8xf32, #tpu.memory_space<vmem>>, vector<1x256x8xf32>
    %1 = vector.shape_cast %0 : vector<1x256x8xf32> to vector<256x8xf32>
    %c0_2 = arith.constant 0 : index
    %c0_3 = arith.constant 0 : index
    %2 = vector.load %arg2[%c0_2, %c0_3] : memref<1x8xf32, #tpu.memory_space<vmem>>, vector<1x8xf32>
    %3 = vector.broadcast %2 : vector<1x8xf32> to vector<256x8xf32>
    %4 = arith.mulf %1, %3 : vector<256x8xf32>
    %c0_4 = arith.constant 0 : index
    %c0_5 = arith.constant 0 : index
    %5 = vector.load %arg3[%c0_4, %c0_5] : memref<1x8xf32, #tpu.memory_space<vmem>>, vector<1x8xf32>
    %6 = vector.broadcast %5 : vector<1x8xf32> to vector<256x8xf32>
    %7 = arith.addf %4, %6 : vector<256x8xf32>
    %cst = arith.constant 0.000000e+00 : f32
    %8 = vector.broadcast %cst : f32 to vector<256x8xf32>
    %9 = arith.maximumf %7, %8 : vector<256x8xf32>
    %10 = vector.shape_cast %9 : vector<256x8xf32> to vector<128x2x8xf32>
    %11 = vector.extract_strided_slice %10 {offsets = [0, 0, 0], sizes = [128, 1, 8], strides = [1, 1, 1]} : vector<128x2x8xf32> to vector<128x1x8xf32>
    %12 = vector.shape_cast %11 : vector<128x1x8xf32> to vector<128x8xf32>
    %13 = vector.extract_strided_slice %10 {offsets = [0, 1, 0], sizes = [128, 1, 8], strides = [1, 1, 1]} : vector<128x2x8xf32> to vector<128x1x8xf32>
    %14 = vector.shape_cast %13 : vector<128x1x8xf32> to vector<128x8xf32>
    %15 = arith.maximumf %12, %14 : vector<128x8xf32>
    %16 = vector.shape_cast %15 : vector<128x8xf32> to vector<8x2x8x8xf32>
    %17 = vector.extract_strided_slice %16 {offsets = [0, 0, 0, 0], sizes = [8, 1, 8, 8], strides = [1, 1, 1, 1]} : vector<8x2x8x8xf32> to vector<8x1x8x8xf32>
    %18 = vector.shape_cast %17 : vector<8x1x8x8xf32> to vector<8x8x8xf32>
    %19 = vector.extract_strided_slice %16 {offsets = [0, 1, 0, 0], sizes = [8, 1, 8, 8], strides = [1, 1, 1, 1]} : vector<8x2x8x8xf32> to vector<8x1x8x8xf32>
    %20 = vector.shape_cast %19 : vector<8x1x8x8xf32> to vector<8x8x8xf32>
    %21 = arith.maximumf %18, %20 : vector<8x8x8xf32>
    %22 = vector.shape_cast %21 : vector<8x8x8xf32> to vector<1x64x8xf32>
    %c0_6 = arith.constant 0 : index
    %c0_7 = arith.constant 0 : index
    %c0_8 = arith.constant 0 : index
    %23 = vector.load %arg4[%c0_6, %c0_7, %c0_8] : memref<1x64x8xf32, #tpu.memory_space<vmem>>, vector<1x64x8xf32>
    tpu.vector_store %arg4[%c0_6, %c0_7, %c0_8], %22 {strides = array<i32>} : memref<1x64x8xf32, #tpu.memory_space<vmem>>, vector<1x64x8xf32>,
    return
  }
  func.func @transform_0(%arg0: i32) -> (i32, i32, i32) {
    %c0_i32 = arith.constant 0 : i32
    %c0_i32_0 = arith.constant 0 : i32
    %c0_i32_1 = arith.constant 0 : i32
    return %arg0, %c0_i32, %c0_i32_0 : i32, i32, i32
  }
  func.func @transform_1(%arg0: i32) -> (i32, i32) {
    %c0_i32 = arith.constant 0 : i32
    %c0_i32_0 = arith.constant 0 : i32
    %c0_i32_1 = arith.constant 0 : i32
    return %c0_i32, %c0_i32_0 : i32, i32
  }
  func.func @transform_2(%arg0: i32) -> (i32, i32) {
    %c0_i32 = arith.constant 0 : i32
    %c0_i32_0 = arith.constant 0 : i32
    %c0_i32_1 = arith.constant 0 : i32
    return %c0_i32, %c0_i32_0 : i32, i32
  }
  func.func @transform_3(%arg0: i32) -> (i32, i32, i32) {
    %c0_i32 = arith.constant 0 : i32
    %c0_i32_0 = arith.constant 0 : i32
    %c0_i32_1 = arith.constant 0 : i32
    return %arg0, %c0_i32, %c0_i32_0 : i32, i32, i32
  }
}

</mosaic_0001>

<llo_original>
// kernel: conv_block_forward.3
$region0: #{conv_block_forward.3}
  #allocation0 [shape = 'u32[]', space=smem, size = 0x4, offset = 0x4, fixed_abs, tag = 'smem constant byte address 0x4 - core index']
  #allocation1 [shape = 'u32[144,128]{1,0:T(1,128)}', space=vmem, size = 0x12000, scoped, tag = 'internal scratch']
  %s0 = inlined_call_operand.vmem [shape: f32[2,256,8], index: 0, kind: input, shape index: {}]
  %s1 = inlined_call_operand.vmem [shape: f32[1,8], index: 1, kind: input, shape index: {}]
  %s2 = inlined_call_operand.vmem [shape: f32[1,8], index: 2, kind: input, shape index: {}]
  %s3 = inlined_call_operand.vmem [shape: f32[2,64,8], index: 3, kind: output, shape index: {}]
  %s4 = sld [smem:[#allocation0]]
  $region45: #{conv_block_forward.3} parent=0
    _
  %s6 = ssub.s32 1, %s4
  %s7 = scalar_select 0, %s6, %s4
  loop: start=0, step=1, limit=4
  $region2: #{conv_block_forward.3} parent=0 // loop_pre_header
    _
  $region3: #{conv_block_forward.3} parent=0 // loop_header
    %s9 = sphi 0, %s13
    %p10 = scmp.ge.s32.totalorder %s9, 4
    %s19 = sphi 0, %s21
    %s22 = sphi 0, %s19
    %s23 = sphi 0, %s22
    %s39 = sphi 0, %s23
    %s43 = sphi 0, %s43
    %s45 = sphi 0, %s43
    %s46 = sphi 0, %s45
    %s60 = sphi 0, %s46
    %s64 = sphi 0, %s64
    %s66 = sphi 0, %s64
    %s67 = sphi 0, %s66
    %s81 = sphi 0, %s67
    %s87 = sphi 0, %s89
    %s90 = sphi 0, %s87
    %s91 = sphi 0, %s90
    %s107 = sphi 0, %s91
  $region4: #{conv_block_forward.3} parent=0 // loop_header_branch
    %12 = sbr.rel (%p10) target = $region8
  $region5: #{conv_block_forward.3} parent=0 // loop_body
    %s14 = ssub.s32 %s9, 1
    %s15 = ssub.s32 %s9, 2
    %s16 = sadd.s32 %s9, 1
    %s17 = ssub.s32 %s9, %s16
    %p18 = scmp.eq.s32.totalorder %s17, 0
    %s20 = sadd.s32 %s19, 1
    %s21 = scalar_select %p18, %s19, %s20
    %p24 = pneg %p18
    %p25 = scmp.eq.s32.totalorder %s9, 1
    %p26 = por %p24, %p25
    %p27 = scmp.ne.s32.totalorder %s19, %s22
    %p28 = scmp.eq.s32.totalorder %s9, 0
    %p29 = por %p27, %p28
    %p30 = scmp.ne.s32.totalorder %s19, %s22
    %p31 = scmp.eq.s32.totalorder %s14, 1
    %p32 = por %p30, %p31
    %p33 = scmp.ne.s32.totalorder %s22, %s23
    %p34 = scmp.eq.s32.totalorder %s14, 0
    %p35 = por %p33, %p34
    %p36 = scmp.ne.s32.totalorder %s22, %s23
    %p37 = scmp.eq.s32.totalorder %s15, 1
    %p38 = por %p36, %p37
    %p40 = scmp.ne.s32.totalorder %s23, %s39
    %p41 = scmp.eq.s32.totalorder %s15, 0
    %p42 = por %p40, %p41
    %s44 = sadd.s32 %s43, 1
    %p47 = scmp.eq.s32.totalorder %s9, 1
    %p48 = scmp.ne.s32.totalorder %s43, %s45
    %p49 = scmp.eq.s32.totalorder %s9, 0
    %p50 = por %p48, %p49
    %p51 = scmp.ne.s32.totalorder %s43, %s45
    %p52 = scmp.eq.s32.totalorder %s14, 1
    %p53 = por %p51, %p52
    %p54 = scmp.ne.s32.totalorder %s45, %s46
    %p55 = scmp.eq.s32.totalorder %s14, 0
    %p56 = por %p54, %p55
    %p57 = scmp.ne.s32.totalorder %s45, %s46
    %p58 = scmp.eq.s32.totalorder %s15, 1
    %p59 = por %p57, %p58
    %p61 = scmp.ne.s32.totalorder %s46, %s60
    %p62 = scmp.eq.s32.totalorder %s15, 0
    %p63 = por %p61, %p62
    %s65 = sadd.s32 %s64, 1
    %p68 = scmp.eq.s32.totalorder %s9, 1
    %p69 = scmp.ne.s32.totalorder %s64, %s66
    %p70 = scmp.eq.s32.totalorder %s9, 0
    %p71 = por %p69, %p70
    %p72 = scmp.ne.s32.totalorder %s64, %s66
    %p73 = scmp.eq.s32.totalorder %s14, 1
    %p74 = por %p72, %p73
    %p75 = scmp.ne.s32.totalorder %s66, %s67
    %p76 = scmp.eq.s32.totalorder %s14, 0
    %p77 = por %p75, %p76
    %p78 = scmp.ne.s32.totalorder %s66, %s67
    %p79 = scmp.eq.s32.totalorder %s15, 1
    %p80 = por %p78, %p79
    %p82 = scmp.ne.s32.totalorder %s67, %s81
    %p83 = scmp.eq.s32.totalorder %s15, 0
    %p84 = por %p82, %p83
    %s85 = ssub.s32 %s9, %s16
    %p86 = scmp.eq.s32.totalorder %s85, 0
    %s88 = sadd.s32 %s87, 1
    %s89 = scalar_select %p86, %s87, %s88
    %p92 = pneg %p86
    %p93 = scmp.eq.s32.totalorder %s9, 1
    %p94 = por %p92, %p93
    %p95 = scmp.ne.s32.totalorder %s87, %s90
    %p96 = scmp.eq.s32.totalorder %s9, 0
    %p97 = por %p95, %p96
    %p98 = scmp.ne.s32.totalorder %s87, %s90
    %p99 = scmp.eq.s32.totalorder %s14, 1
    %p100 = por %p98, %p99
    %p101 = scmp.ne.s32.totalorder %s90, %s91
    %p102 = scmp.eq.s32.totalorder %s14, 0
    %p103 = por %p101, %p102
    %p104 = scmp.ne.s32.totalorder %s90, %s91
    %p105 = scmp.eq.s32.totalorder %s15, 1
    %p106 = por %p104, %p105
    %p108 = scmp.ne.s32.totalorder %s91, %s107
    %p109 = scmp.eq.s32.totalorder %s15, 0
    %p110 = por %p108, %p109
    %p111 = scmp.le.s32.totalorder 1, %s9
    %p112 = scmp.lt.s32.totalorder %s9, 3
    %p113 = pnand %p111, %p112
    %p114 = pneg %p113
    // Predicated region
    $region9: #{conv_block_forward.3} parent=5 // pred_check
      _
    $region10: #{conv_block_forward.3} parent=5 // pred_check_branch
      %116 = sbr.rel (%p113) target = $region12
    $region11: #{conv_block_forward.3} parent=5 // pred_region
      %s117 = ssub.s32 %s9, 1
      // Predicated region
      $region13: #{conv_block_forward.3} parent=11 // pred_check
        %p118 = pneg %p56
      $region14: #{conv_block_forward.3} parent=11 // pred_check_branch
        %120 = sbr.rel (%p118) target = $region16
      $region15: #{conv_block_forward.3} parent=11 // pred_region
        _
      $region16: #{conv_block_forward.3} parent=11 // pred_fallthru
        _
      // Predicated region
      $region17: #{conv_block_forward.3} parent=11 // pred_check
        %p121 = pneg %p77
      $region18: #{conv_block_forward.3} parent=11 // pred_check_branch
        %123 = sbr.rel (%p121) target = $region20
      $region19: #{conv_block_forward.3} parent=11 // pred_region
        _
      $region20: #{conv_block_forward.3} parent=11 // pred_fallthru
        _
    $region12: #{conv_block_forward.3} parent=5 // pred_fallthru
      _
    %p124 = scmp.lt.s32.totalorder %s9, 2
    // Predicated region
    $region21: #{conv_block_forward.3} parent=5 // pred_check
      %p125 = pneg %p124
    $region22: #{conv_block_forward.3} parent=5 // pred_check_branch
      %127 = sbr.rel (%p125) target = $region24
    $region23: #{conv_block_forward.3} parent=5 // pred_region
      // Predicated region
      $region25: #{conv_block_forward.3} parent=23 // pred_check
        %p128 = pneg %p29
      $region26: #{conv_block_forward.3} parent=23 // pred_check_branch
        %130 = sbr.rel (%p128) target = $region28
      $region27: #{conv_block_forward.3} parent=23 // pred_region
        %p131 = scmp.lt.s32.totalorder %s9, 1
        %s132 = scalar_select %p131, %s9, 1
        %s133 = smul.addr %s132, 32
        %s134 = smul.addr %s133, 8
        %s135 = scalar_lea.vmem %s0, %s134
      $region28: #{conv_block_forward.3} parent=23 // pred_fallthru
        _
    $region24: #{conv_block_forward.3} parent=5 // pred_fallthru
      _
    %p136 = scmp.le.s32.totalorder 1, %s9
    %p137 = scmp.lt.s32.totalorder %s9, 3
    %p138 = pnand %p136, %p137
    %p139 = pneg %p138
    // Predicated region
    $region29: #{conv_block_forward.3} parent=5 // pred_check
      _
    $region30: #{conv_block_forward.3} parent=5 // pred_check_branch
      %141 = sbr.rel (%p138) target = $region32
    $region31: #{conv_block_forward.3} parent=5 // pred_region
      %s142 = ssub.s32 %s9, 1
      %p143 = scmp.lt.s32.totalorder %s14, 1
      %s144 = scalar_select %p143, %s14, 1
      %s145 = smul.addr %s144, 32
      %s146 = smul.addr %s145, 8
      %s147 = scalar_lea.vmem %s0, %s146
      %p148 = pneg %p35
      %p149 = pneg %p32
      %p150 = pneg %p56
      %p151 = pneg %p53
      %p152 = pneg %p77
      %p153 = pneg %p74
      %p154 = pneg %p103
      %p155 = pneg %p100
      %p156 = scmp.lt.s32.totalorder %s14, 1
      %s157 = scalar_select %p156, %s14, 1
      %s158 = smul.addr %s157, 8
      %s159 = smul.addr %s158, 8
      %s160 = scalar_lea.vmem %s3, %s159
      %p161 = scmp.lt.s32.totalorder %s14, 1
      %s162 = scalar_select %p161, %s14, 1
      %s163 = smul.addr %s162, 32
      %s164 = smul.addr %s163, 8
      %s165 = scalar_lea.vmem %s0, %s164
      %p166 = scmp.lt.s32.totalorder %s14, 1
      %s167 = scalar_select %p166, %s14, 1
      %s168 = smul.addr %s167, 8
      %s169 = smul.addr %s168, 8
      %s170 = scalar_lea.vmem %s3, %s169
      %v171 = vld [vmem:[%s165] sm:$0xff]
      %v172 = vld [vmem:[%s165 + $0x8] sm:$0xff]
      %v173 = vld [vmem:[%s165 + $0x10] sm:$0xff]
      %v174 = vld [vmem:[%s165 + $0x18] sm:$0xff]
      %v175 = vld [vmem:[%s165 + $0x20] sm:$0xff]
      %v176 = vld [vmem:[%s165 + $0x28] sm:$0xff]
      %v177 = vld [vmem:[%s165 + $0x30] sm:$0xff]
      %v178 = vld [vmem:[%s165 + $0x38] sm:$0xff]
      %v179 = vld [vmem:[%s165 + $0x40] sm:$0xff]
      %v180 = vld [vmem:[%s165 + $0x48] sm:$0xff]
      %v181 = vld [vmem:[%s165 + $0x50] sm:$0xff]
      %v182 = vld [vmem:[%s165 + $0x58] sm:$0xff]
      %v183 = vld [vmem:[%s165 + $0x60] sm:$0xff]
      %v184 = vld [vmem:[%s165 + $0x68] sm:$0xff]
      %v185 = vld [vmem:[%s165 + $0x70] sm:$0xff]
      %v186 = vld [vmem:[%s165 + $0x78] sm:$0xff]
      %v187 = vld [vmem:[%s165 + $0x80] sm:$0xff]
      %v188 = vld [vmem:[%s165 + $0x88] sm:$0xff]
      %v189 = vld [vmem:[%s165 + $0x90] sm:$0xff]
      %v190 = vld [vmem:[%s165 + $0x98] sm:$0xff]
      %v191 = vld [vmem:[%s165 + $0xa0] sm:$0xff]
      %v192 = vld [vmem:[%s165 + $0xa8] sm:$0xff]
      %v193 = vld [vmem:[%s165 + $0xb0] sm:$0xff]
      %v194 = vld [vmem:[%s165 + $0xb8] sm:$0xff]
      %v195 = vld [vmem:[%s165 + $0xc0] sm:$0xff]
      %v196 = vld [vmem:[%s165 + $0xc8] sm:$0xff]
      %v197 = vld [vmem:[%s165 + $0xd0] sm:$0xff]
      %v198 = vld [vmem:[%s165 + $0xd8] sm:$0xff]
      %v199 = vld [vmem:[%s165 + $0xe0] sm:$0xff]
      %v200 = vld [vmem:[%s165 + $0xe8] sm:$0xff]
      %v201 = vld [vmem:[%s165 + $0xf0] sm:$0xff]
      %v202 = vld [vmem:[%s165 + $0xf8] sm:$0xff]
      %v203 = vld [vmem:[%s1] sm:$0x1]
      %v205 = vlaneseq
      %v206 = vshrl.u32 %v205, 7
      %v207 = vsub.s32 0, %v206
      %v208 = vrot.slane %v203, %v207
      %v210 = vmul.f32 %v171, %v208
      %v211 = vmul.f32 %v172, %v208
      %v212 = vmul.f32 %v173, %v208
      %v213 = vmul.f32 %v174, %v208
      %v214 = vmul.f32 %v175, %v208
      %v215 = vmul.f32 %v176, %v208
      %v216 = vmul.f32 %v177, %v208
      %v217 = vmul.f32 %v178, %v208
      %v218 = vmul.f32 %v179, %v208
      %v219 = vmul.f32 %v180, %v208
      %v220 = vmul.f32 %v181, %v208
      %v221 = vmul.f32 %v182, %v208
      %v222 = vmul.f32 %v183, %v208
      %v223 = vmul.f32 %v184, %v208
      %v224 = vmul.f32 %v185, %v208
      %v225 = vmul.f32 %v186, %v208
      %v226 = vmul.f32 %v187, %v208
      %v227 = vmul.f32 %v188, %v208
      %v228 = vmul.f32 %v189, %v208
      %v229 = vmul.f32 %v190, %v208
      %v230 = vmul.f32 %v191, %v208
      %v231 = vmul.f32 %v192, %v208
      %v232 = vmul.f32 %v193, %v208
      %v233 = vmul.f32 %v194, %v208
      %v234 = vmul.f32 %v195, %v208
      %v235 = vmul.f32 %v196, %v208
      %v236 = vmul.f32 %v197, %v208
      %v237 = vmul.f32 %v198, %v208
      %v238 = vmul.f32 %v199, %v208
      %v239 = vmul.f32 %v200, %v208
      %v240 = vmul.f32 %v201, %v208
      %v241 = vmul.f32 %v202, %v208
      %v242 = vld [vmem:[%s2] sm:$0x1]
      %v244 = vlaneseq
      %v245 = vshrl.u32 %v244, 7
      %v246 = vsub.s32 0, %v245
      %v247 = vrot.slane %v242, %v246
      %v249 = vadd.f32 %v210, %v247
      %v250 = vadd.f32 %v211, %v247
      %v251 = vadd.f32 %v212, %v247
      %v252 = vadd.f32 %v213, %v247
      %v253 = vadd.f32 %v214, %v247
      %v254 = vadd.f32 %v215, %v247
      %v255 = vadd.f32 %v216, %v247
      %v256 = vadd.f32 %v217, %v247
      %v257 = vadd.f32 %v218, %v247
      %v258 = vadd.f32 %v219, %v247
      %v259 = vadd.f32 %v220, %v247
      %v260 = vadd.f32 %v221, %v247
      %v261 = vadd.f32 %v222, %v247
      %v262 = vadd.f32 %v223, %v247
      %v263 = vadd.f32 %v224, %v247
      %v264 = vadd.f32 %v225, %v247
      %v265 = vadd.f32 %v226, %v247
      %v266 = vadd.f32 %v227, %v247
      %v267 = vadd.f32 %v228, %v247
      %v268 = vadd.f32 %v229, %v247
      %v269 = vadd.f32 %v230, %v247
      %v270 = vadd.f32 %v231, %v247
      %v271 = vadd.f32 %v232, %v247
      %v272 = vadd.f32 %v233, %v247
      %v273 = vadd.f32 %v234, %v247
      %v274 = vadd.f32 %v235, %v247
      %v275 = vadd.f32 %v236, %v247
      %v276 = vadd.f32 %v237, %v247
      %v277 = vadd.f32 %v238, %v247
      %v278 = vadd.f32 %v239, %v247
      %v279 = vadd.f32 %v240, %v247
      %v280 = vadd.f32 %v241, %v247
      %v281 = vmax.f32 %v249, 0.0
      %v282 = vmax.f32 %v250, 0.0
      %v283 = vmax.f32 %v251, 0.0
      %v284 = vmax.f32 %v252, 0.0
      %v285 = vmax.f32 %v253, 0.0
      %v286 = vmax.f32 %v254, 0.0
      %v287 = vmax.f32 %v255, 0.0
      %v288 = vmax.f32 %v256, 0.0
      %v289 = vmax.f32 %v257, 0.0
      %v290 = vmax.f32 %v258, 0.0
      %v291 = vmax.f32 %v259, 0.0
      %v292 = vmax.f32 %v260, 0.0
      %v293 = vmax.f32 %v261, 0.0
      %v294 = vmax.f32 %v262, 0.0
      %v295 = vmax.f32 %v263, 0.0
      %v296 = vmax.f32 %v264, 0.0
      %v297 = vmax.f32 %v265, 0.0
      %v298 = vmax.f32 %v266, 0.0
      %v299 = vmax.f32 %v267, 0.0
      %v300 = vmax.f32 %v268, 0.0
      %v301 = vmax.f32 %v269, 0.0
      %v302 = vmax.f32 %v270, 0.0
      %v303 = vmax.f32 %v271, 0.0
      %v304 = vmax.f32 %v272, 0.0
      %v305 = vmax.f32 %v273, 0.0
      %v306 = vmax.f32 %v274, 0.0
      %v307 = vmax.f32 %v275, 0.0
      %v308 = vmax.f32 %v276, 0.0
      %v309 = vmax.f32 %v277, 0.0
      %v310 = vmax.f32 %v278, 0.0
      %v311 = vmax.f32 %v279, 0.0
      %v312 = vmax.f32 %v280, 0.0
      %v345 = vcombine.high %v281, %v281
      %v347 = vunpack.c.l.s4 1983009808
      %v348 = vunpack.c.0.s8 %v347
      %v349 = vlaneseq
      %v350 = vshrl.u32 %v349, 7
      %v351 = vsub.s32 %v348, %v350
      %v352 = vrot.slane %v281, %v351
      %v354 = vunpack.c.l.s4 1983009808
      %v355 = vunpack.c.0.s8 %v354
      %v356 = vlaneseq
      %v357 = vshrl.u32 %v356, 7
      %v358 = vsub.s32 %v355, %v357
      %v359 = vrot.slane %v345, %v358
      %v360 = vcombine.high %v352, %v352
      %v361 = vcombine.high %v359, %v359
      %v362 = vcombine.high %v282, %v282
      %v364 = vunpack.c.l.s4 1983009808
      %v365 = vunpack.c.0.s8 %v364
      %v366 = vlaneseq
      %v367 = vshrl.u32 %v366, 7
      %v368 = vsub.s32 %v365, %v367
      %v369 = vrot.slane %v282, %v368
      %v371 = vunpack.c.l.s4 1983009808
      %v372 = vunpack.c.0.s8 %v371
      %v373 = vlaneseq
      %v374 = vshrl.u32 %v373, 7
      %v375 = vsub.s32 %v372, %v374
      %v376 = vrot.slane %v362, %v375
      %v377 = vcombine.high %v369, %v369
      %v378 = vcombine.high %v376, %v376
      %v379 = vcombine.high %v283, %v283
      %v381 = vunpack.c.l.s4 1983009808
      %v382 = vunpack.c.0.s8 %v381
      %v383 = vlaneseq
      %v384 = vshrl.u32 %v383, 7
      %v385 = vsub.s32 %v382, %v384
      %v386 = vrot.slane %v283, %v385
      %v388 = vunpack.c.l.s4 1983009808
      %v389 = vunpack.c.0.s8 %v388
      %v390 = vlaneseq
      %v391 = vshrl.u32 %v390, 7
      %v392 = vsub.s32 %v389, %v391
      %v393 = vrot.slane %v379, %v392
      %v394 = vcombine.high %v386, %v386
      %v395 = vcombine.high %v393, %v393
      %v396 = vcombine.high %v284, %v284
      %v398 = vunpack.c.l.s4 1983009808
      %v399 = vunpack.c.0.s8 %v398
      %v400 = vlaneseq
      %v401 = vshrl.u32 %v400, 7
      %v402 = vsub.s32 %v399, %v401
      %v403 = vrot.slane %v284, %v402
      %v405 = vunpack.c.l.s4 1983009808
      %v406 = vunpack.c.0.s8 %v405
      %v407 = vlaneseq
      %v408 = vshrl.u32 %v407, 7
      %v409 = vsub.s32 %v406, %v408
      %v410 = vrot.slane %v396, %v409
      %v411 = vcombine.high %v403, %v403
      %v412 = vcombine.high %v410, %v410
      %v413 = vcombine.high %v285, %v285
      %v415 = vunpack.c.l.s4 1983009808
      %v416 = vunpack.c.0.s8 %v415
      %v417 = vlaneseq
      %v418 = vshrl.u32 %v417, 7
      %v419 = vsub.s32 %v416, %v418
      %v420 = vrot.slane %v285, %v419
      %v422 = vunpack.c.l.s4 1983009808
      %v423 = vunpack.c.0.s8 %v422
      %v424 = vlaneseq
      %v425 = vshrl.u32 %v424, 7
      %v426 = vsub.s32 %v423, %v425
      %v427 = vrot.slane %v413, %v426
      %v428 = vcombine.high %v420, %v420
      %v429 = vcombine.high %v427, %v427
      %v430 = vcombine.high %v286, %v286
      %v432 = vunpack.c.l.s4 1983009808
      %v433 = vunpack.c.0.s8 %v432
      %v434 = vlaneseq
      %v435 = vshrl.u32 %v434, 7
      %v436 = vsub.s32 %v433, %v435
      %v437 = vrot.slane %v286, %v436
      %v439 = vunpack.c.l.s4 1983009808
      %v440 = vunpack.c.0.s8 %v439
      %v441 = vlaneseq
      %v442 = vshrl.u32 %v441, 7
      %v443 = vsub.s32 %v440, %v442
      %v444 = vrot.slane %v430, %v443
      %v445 = vcombine.high %v437, %v437
      %v446 = vcombine.high %v444, %v444
      %v447 = vcombine.high %v287, %v287
      %v449 = vunpack.c.l.s4 1983009808
      %v450 = vunpack.c.0.s8 %v449
      %v451 = vlaneseq
      %v452 = vshrl.u32 %v451, 7
      %v453 = vsub.s32 %v450, %v452
      %v454 = vrot.slane %v287, %v453
      %v456 = vunpack.c.l.s4 1983009808
      %v457 = vunpack.c.0.s8 %v456
      %v458 = vlaneseq
      %v459 = vshrl.u32 %v458, 7
      %v460 = vsub.s32 %v457, %v459
      %v461 = vrot.slane %v447, %v460
      %v462 = vcombine.high %v454, %v454
      %v463 = vcombine.high %v461, %v461
      %v464 = vcombine.high %v288, %v288
      %v466 = vunpack.c.l.s4 1983009808
      %v467 = vunpack.c.0.s8 %v466
      %v468 = vlaneseq
      %v469 = vshrl.u32 %v468, 7
      %v470 = vsub.s32 %v467, %v469
      %v471 = vrot.slane %v288, %v470
      %v473 = vunpack.c.l.s4 1983009808
      %v474 = vunpack.c.0.s8 %v473
      %v475 = vlaneseq
      %v476 = vshrl.u32 %v475, 7
      %v477 = vsub.s32 %v474, %v476
      %v478 = vrot.slane %v464, %v477
      %v479 = vcombine.high %v471, %v471
      %v480 = vcombine.high %v478, %v478
      %v481 = vcombine.high %v289, %v289
      %v483 = vunpack.c.l.s4 1983009808
      %v484 = vunpack.c.0.s8 %v483
      %v485 = vlaneseq
      %v486 = vshrl.u32 %v485, 7
      %v487 = vsub.s32 %v484, %v486
      %v488 = vrot.slane %v289, %v487
      %v490 = vunpack.c.l.s4 1983009808
      %v491 = vunpack.c.0.s8 %v490
      %v492 = vlaneseq
      %v493 = vshrl.u32 %v492, 7
      %v494 = vsub.s32 %v491, %v493
      %v495 = vrot.slane %v481, %v494
      %v496 = vcombine.high %v488, %v488
      %v497 = vcombine.high %v495, %v495
      %v498 = vcombine.high %v290, %v290
      %v500 = vunpack.c.l.s4 1983009808
      %v501 = vunpack.c.0.s8 %v500
      %v502 = vlaneseq
      %v503 = vshrl.u32 %v502, 7
      %v504 = vsub.s32 %v501, %v503
      %v505 = vrot.slane %v290, %v504
      %v507 = vunpack.c.l.s4 1983009808
      %v508 = vunpack.c.0.s8 %v507
      %v509 = vlaneseq
      %v510 = vshrl.u32 %v509, 7
      %v511 = vsub.s32 %v508, %v510
      %v512 = vrot.slane %v498, %v511
      %v513 = vcombine.high %v505, %v505
      %v514 = vcombine.high %v512, %v512
      %v515 = vcombine.high %v291, %v291
      %v517 = vunpack.c.l.s4 1983009808
      %v518 = vunpack.c.0.s8 %v517
      %v519 = vlaneseq
      %v520 = vshrl.u32 %v519, 7
      %v521 = vsub.s32 %v518, %v520
      %v522 = vrot.slane %v291, %v521
      %v524 = vunpack.c.l.s4 1983009808
      %v525 = vunpack.c.0.s8 %v524
      %v526 = vlaneseq
      %v527 = vshrl.u32 %v526, 7
      %v528 = vsub.s32 %v525, %v527
      %v529 = vrot.slane %v515, %v528
      %v530 = vcombine.high %v522, %v522
      %v531 = vcombine.high %v529, %v529
      %v532 = vcombine.high %v292, %v292
      %v534 = vunpack.c.l.s4 1983009808
      %v535 = vunpack.c.0.s8 %v534
      %v536 = vlaneseq
      %v537 = vshrl.u32 %v536, 7
      %v538 = vsub.s32 %v535, %v537
      %v539 = vrot.slane %v292, %v538
      %v541 = vunpack.c.l.s4 1983009808
      %v542 = vunpack.c.0.s8 %v541
      %v543 = vlaneseq
      %v544 = vshrl.u32 %v543, 7
      %v545 = vsub.s32 %v542, %v544
      %v546 = vrot.slane %v532, %v545
      %v547 = vcombine.high %v539, %v539
      %v548 = vcombine.high %v546, %v546
      %v549 = vcombine.high %v293, %v293
      %v551 = vunpack.c.l.s4 1983009808
      %v552 = vunpack.c.0.s8 %v551
      %v553 = vlaneseq
      %v554 = vshrl.u32 %v553, 7
      %v555 = vsub.s32 %v552, %v554
      %v556 = vrot.slane %v293, %v555
      %v558 = vunpack.c.l.s4 1983009808
      %v559 = vunpack.c.0.s8 %v558
      %v560 = vlaneseq
      %v561 = vshrl.u32 %v560, 7
      %v562 = vsub.s32 %v559, %v561
      %v563 = vrot.slane %v549, %v562
      %v564 = vcombine.high %v556, %v556
      %v565 = vcombine.high %v563, %v563
      %v566 = vcombine.high %v294, %v294
      %v568 = vunpack.c.l.s4 1983009808
      %v569 = vunpack.c.0.s8 %v568
      %v570 = vlaneseq
      %v571 = vshrl.u32 %v570, 7
      %v572 = vsub.s32 %v569, %v571
      %v573 = vrot.slane %v294, %v572
      %v575 = vunpack.c.l.s4 1983009808
      %v576 = vunpack.c.0.s8 %v575
      %v577 = vlaneseq
      %v578 = vshrl.u32 %v577, 7
      %v579 = vsub.s32 %v576, %v578
      %v580 = vrot.slane %v566, %v579
      %v581 = vcombine.high %v573, %v573
      %v582 = vcombine.high %v580, %v580
      %v583 = vcombine.high %v295, %v295
      %v585 = vunpack.c.l.s4 1983009808
      %v586 = vunpack.c.0.s8 %v585
      %v587 = vlaneseq
      %v588 = vshrl.u32 %v587, 7
      %v589 = vsub.s32 %v586, %v588
      %v590 = vrot.slane %v295, %v589
      %v592 = vunpack.c.l.s4 1983009808
      %v593 = vunpack.c.0.s8 %v592
      %v594 = vlaneseq
      %v595 = vshrl.u32 %v594, 7
      %v596 = vsub.s32 %v593, %v595
      %v597 = vrot.slane %v583, %v596
      %v598 = vcombine.high %v590, %v590
      %v599 = vcombine.high %v597, %v597
      %v600 = vcombine.high %v296, %v296
      %v602 = vunpack.c.l.s4 1983009808
      %v603 = vunpack.c.0.s8 %v602
      %v604 = vlaneseq
      %v605 = vshrl.u32 %v604, 7
      %v606 = vsub.s32 %v603, %v605
      %v607 = vrot.slane %v296, %v606
      %v609 = vunpack.c.l.s4 1983009808
      %v610 = vunpack.c.0.s8 %v609
      %v611 = vlaneseq
      %v612 = vshrl.u32 %v611, 7
      %v613 = vsub.s32 %v610, %v612
      %v614 = vrot.slane %v600, %v613
      %v615 = vcombine.high %v607, %v607
      %v616 = vcombine.high %v614, %v614
      %v617 = vcombine.high %v297, %v297
      %v619 = vunpack.c.l.s4 1983009808
      %v620 = vunpack.c.0.s8 %v619
      %v621 = vlaneseq
      %v622 = vshrl.u32 %v621, 7
      %v623 = vsub.s32 %v620, %v622
      %v624 = vrot.slane %v297, %v623
      %v626 = vunpack.c.l.s4 1983009808
      %v627 = vunpack.c.0.s8 %v626
      %v628 = vlaneseq
      %v629 = vshrl.u32 %v628, 7
      %v630 = vsub.s32 %v627, %v629
      %v631 = vrot.slane %v617, %v630
      %v632 = vcombine.high %v624, %v624
      %v633 = vcombine.high %v631, %v631
      %v634 = vcombine.high %v298, %v298
      %v636 = vunpack.c.l.s4 1983009808
      %v637 = vunpack.c.0.s8 %v636
      %v638 = vlaneseq
      %v639 = vshrl.u32 %v638, 7
      %v640 = vsub.s32 %v637, %v639
      %v641 = vrot.slane %v298, %v640
      %v643 = vunpack.c.l.s4 1983009808
      %v644 = vunpack.c.0.s8 %v643
      %v645 = vlaneseq
      %v646 = vshrl.u32 %v645, 7
      %v647 = vsub.s32 %v644, %v646
      %v648 = vrot.slane %v634, %v647
      %v649 = vcombine.high %v641, %v641
      %v650 = vcombine.high %v648, %v648
      %v651 = vcombine.high %v299, %v299
      %v653 = vunpack.c.l.s4 1983009808
      %v654 = vunpack.c.0.s8 %v653
      %v655 = vlaneseq
      %v656 = vshrl.u32 %v655, 7
      %v657 = vsub.s32 %v654, %v656
      %v658 = vrot.slane %v299, %v657
      %v660 = vunpack.c.l.s4 1983009808
      %v661 = vunpack.c.0.s8 %v660
      %v662 = vlaneseq
      %v663 = vshrl.u32 %v662, 7
      %v664 = vsub.s32 %v661, %v663
      %v665 = vrot.slane %v651, %v664
      %v666 = vcombine.high %v658, %v658
      %v667 = vcombine.high %v665, %v665
      %v668 = vcombine.high %v300, %v300
      %v670 = vunpack.c.l.s4 1983009808
      %v671 = vunpack.c.0.s8 %v670
      %v672 = vlaneseq
      %v673 = vshrl.u32 %v672, 7
      %v674 = vsub.s32 %v671, %v673
      %v675 = vrot.slane %v300, %v674
      %v677 = vunpack.c.l.s4 1983009808
      %v678 = vunpack.c.0.s8 %v677
      %v679 = vlaneseq
      %v680 = vshrl.u32 %v679, 7
      %v681 = vsub.s32 %v678, %v680
      %v682 = vrot.slane %v668, %v681
      %v683 = vcombine.high %v675, %v675
      %v684 = vcombine.high %v682, %v682
      %v685 = vcombine.high %v301, %v301
      %v687 = vunpack.c.l.s4 1983009808
      %v688 = vunpack.c.0.s8 %v687
      %v689 = vlaneseq
      %v690 = vshrl.u32 %v689, 7
      %v691 = vsub.s32 %v688, %v690
      %v692 = vrot.slane %v301, %v691
      %v694 = vunpack.c.l.s4 1983009808
      %v695 = vunpack.c.0.s8 %v694
      %v696 = vlaneseq
      %v697 = vshrl.u32 %v696, 7
      %v698 = vsub.s32 %v695, %v697
      %v699 = vrot.slane %v685, %v698
      %v700 = vcombine.high %v692, %v692
      %v701 = vcombine.high %v699, %v699
      %v702 = vcombine.high %v302, %v302
      %v704 = vunpack.c.l.s4 1983009808
      %v705 = vunpack.c.0.s8 %v704
      %v706 = vlaneseq
      %v707 = vshrl.u32 %v706, 7
      %v708 = vsub.s32 %v705, %v707
      %v709 = vrot.slane %v302, %v708
      %v711 = vunpack.c.l.s4 1983009808
      %v712 = vunpack.c.0.s8 %v711
      %v713 = vlaneseq
      %v714 = vshrl.u32 %v713, 7
      %v715 = vsub.s32 %v712, %v714
      %v716 = vrot.slane %v702, %v715
      %v717 = vcombine.high %v709, %v709
      %v718 = vcombine.high %v716, %v716
      %v719 = vcombine.high %v303, %v303
      %v721 = vunpack.c.l.s4 1983009808
      %v722 = vunpack.c.0.s8 %v721
      %v723 = vlaneseq
      %v724 = vshrl.u32 %v723, 7
      %v725 = vsub.s32 %v722, %v724
      %v726 = vrot.slane %v303, %v725
      %v728 = vunpack.c.l.s4 1983009808
      %v729 = vunpack.c.0.s8 %v728
      %v730 = vlaneseq
      %v731 = vshrl.u32 %v730, 7
      %v732 = vsub.s32 %v729, %v731
      %v733 = vrot.slane %v719, %v732
      %v734 = vcombine.high %v726, %v726
      %v735 = vcombine.high %v733, %v733
      %v736 = vcombine.high %v304, %v304
      %v738 = vunpack.c.l.s4 1983009808
      %v739 = vunpack.c.0.s8 %v738
      %v740 = vlaneseq
      %v741 = vshrl.u32 %v740, 7
      %v742 = vsub.s32 %v739, %v741
      %v743 = vrot.slane %v304, %v742
      %v745 = vunpack.c.l.s4 1983009808
      %v746 = vunpack.c.0.s8 %v745
      %v747 = vlaneseq
      %v748 = vshrl.u32 %v747, 7
      %v749 = vsub.s32 %v746, %v748
      %v750 = vrot.slane %v736, %v749
      %v751 = vcombine.high %v743, %v743
      %v752 = vcombine.high %v750, %v750
      %v753 = vcombine.high %v305, %v305
      %v755 = vunpack.c.l.s4 1983009808
      %v756 = vunpack.c.0.s8 %v755
      %v757 = vlaneseq
      %v758 = vshrl.u32 %v757, 7
      %v759 = vsub.s32 %v756, %v758
      %v760 = vrot.slane %v305, %v759
      %v762 = vunpack.c.l.s4 1983009808
      %v763 = vunpack.c.0.s8 %v762
      %v764 = vlaneseq
      %v765 = vshrl.u32 %v764, 7
      %v766 = vsub.s32 %v763, %v765
      %v767 = vrot.slane %v753, %v766
      %v768 = vcombine.high %v760, %v760
      %v769 = vcombine.high %v767, %v767
      %v770 = vcombine.high %v306, %v306
      %v772 = vunpack.c.l.s4 1983009808
      %v773 = vunpack.c.0.s8 %v772
      %v774 = vlaneseq
      %v775 = vshrl.u32 %v774, 7
      %v776 = vsub.s32 %v773, %v775
      %v777 = vrot.slane %v306, %v776
      %v779 = vunpack.c.l.s4 1983009808
      %v780 = vunpack.c.0.s8 %v779
      %v781 = vlaneseq
      %v782 = vshrl.u32 %v781, 7
      %v783 = vsub.s32 %v780, %v782
      %v784 = vrot.slane %v770, %v783
      %v785 = vcombine.high %v777, %v777
      %v786 = vcombine.high %v784, %v784
      %v787 = vcombine.high %v307, %v307
      %v789 = vunpack.c.l.s4 1983009808
      %v790 = vunpack.c.0.s8 %v789
      %v791 = vlaneseq
      %v792 = vshrl.u32 %v791, 7
      %v793 = vsub.s32 %v790, %v792
      %v794 = vrot.slane %v307, %v793
      %v796 = vunpack.c.l.s4 1983009808
      %v797 = vunpack.c.0.s8 %v796
      %v798 = vlaneseq
      %v799 = vshrl.u32 %v798, 7
      %v800 = vsub.s32 %v797, %v799
      %v801 = vrot.slane %v787, %v800
      %v802 = vcombine.high %v794, %v794
      %v803 = vcombine.high %v801, %v801
      %v804 = vcombine.high %v308, %v308
      %v806 = vunpack.c.l.s4 1983009808
      %v807 = vunpack.c.0.s8 %v806
      %v808 = vlaneseq
      %v809 = vshrl.u32 %v808, 7
      %v810 = vsub.s32 %v807, %v809
      %v811 = vrot.slane %v308, %v810
      %v813 = vunpack.c.l.s4 1983009808
      %v814 = vunpack.c.0.s8 %v813
      %v815 = vlaneseq
      %v816 = vshrl.u32 %v815, 7
      %v817 = vsub.s32 %v814, %v816
      %v818 = vrot.slane %v804, %v817
      %v819 = vcombine.high %v811, %v811
      %v820 = vcombine.high %v818, %v818
      %v821 = vcombine.high %v309, %v309
      %v823 = vunpack.c.l.s4 1983009808
      %v824 = vunpack.c.0.s8 %v823
      %v825 = vlaneseq
      %v826 = vshrl.u32 %v825, 7
      %v827 = vsub.s32 %v824, %v826
      %v828 = vrot.slane %v309, %v827
      %v830 = vunpack.c.l.s4 1983009808
      %v831 = vunpack.c.0.s8 %v830
      %v832 = vlaneseq
      %v833 = vshrl.u32 %v832, 7
      %v834 = vsub.s32 %v831, %v833
      %v835 = vrot.slane %v821, %v834
      %v836 = vcombine.high %v828, %v828
      %v837 = vcombine.high %v835, %v835
      %v838 = vcombine.high %v310, %v310
      %v840 = vunpack.c.l.s4 1983009808
      %v841 = vunpack.c.0.s8 %v840
      %v842 = vlaneseq
      %v843 = vshrl.u32 %v842, 7
      %v844 = vsub.s32 %v841, %v843
      %v845 = vrot.slane %v310, %v844
      %v847 = vunpack.c.l.s4 1983009808
      %v848 = vunpack.c.0.s8 %v847
      %v849 = vlaneseq
      %v850 = vshrl.u32 %v849, 7
      %v851 = vsub.s32 %v848, %v850
      %v852 = vrot.slane %v838, %v851
      %v853 = vcombine.high %v845, %v845
      %v854 = vcombine.high %v852, %v852
      %v855 = vcombine.high %v311, %v311
      %v857 = vunpack.c.l.s4 1983009808
      %v858 = vunpack.c.0.s8 %v857
      %v859 = vlaneseq
      %v860 = vshrl.u32 %v859, 7
      %v861 = vsub.s32 %v858, %v860
      %v862 = vrot.slane %v311, %v861
      %v864 = vunpack.c.l.s4 1983009808
      %v865 = vunpack.c.0.s8 %v864
      %v866 = vlaneseq
      %v867 = vshrl.u32 %v866, 7
      %v868 = vsub.s32 %v865, %v867
      %v869 = vrot.slane %v855, %v868
      %v870 = vcombine.high %v862, %v862
      %v871 = vcombine.high %v869, %v869
      %v872 = vcombine.high %v312, %v312
      %v874 = vunpack.c.l.s4 1983009808
      %v875 = vunpack.c.0.s8 %v874
      %v876 = vlaneseq
      %v877 = vshrl.u32 %v876, 7
      %v878 = vsub.s32 %v875, %v877
      %v879 = vrot.slane %v312, %v878
      %v881 = vunpack.c.l.s4 1983009808
      %v882 = vunpack.c.0.s8 %v881
      %v883 = vlaneseq
      %v884 = vshrl.u32 %v883, 7
      %v885 = vsub.s32 %v882, %v884
      %v886 = vrot.slane %v872, %v885
      %v887 = vcombine.high %v879, %v879
      %v888 = vcombine.high %v886, %v886
      %v1017 = vrot.slane %v352, 7
      %v1018 = vrot.slane %v1017, 2
      %v1019 = vrot.slane %v360, 7
      %v1020 = vrot.slane %v1019, 2
      %v1021 = vrot.slane %v359, 7
      %v1022 = vrot.slane %v1021, 2
      %v1023 = vrot.slane %v361, 7
      %v1024 = vrot.slane %v1023, 2
      %v1025 = vrot.slane %v369, 7
      %v1026 = vrot.slane %v1025, 2
      %v1027 = vrot.slane %v377, 7
      %v1028 = vrot.slane %v1027, 2
      %v1029 = vrot.slane %v376, 7
      %v1030 = vrot.slane %v1029, 2
      %v1031 = vrot.slane %v378, 7
      %v1032 = vrot.slane %v1031, 2
      %v1033 = vrot.slane %v386, 7
      %v1034 = vrot.slane %v1033, 2
      %v1035 = vrot.slane %v394, 7
      %v1036 = vrot.slane %v1035, 2
      %v1037 = vrot.slane %v393, 7
      %v1038 = vrot.slane %v1037, 2
      %v1039 = vrot.slane %v395, 7
      %v1040 = vrot.slane %v1039, 2
      %v1041 = vrot.slane %v403, 7
      %v1042 = vrot.slane %v1041, 2
      %v1043 = vrot.slane %v411, 7
      %v1044 = vrot.slane %v1043, 2
      %v1045 = vrot.slane %v410, 7
      %v1046 = vrot.slane %v1045, 2
      %v1047 = vrot.slane %v412, 7
      %v1048 = vrot.slane %v1047, 2
      %v1049 = vrot.slane %v420, 7
      %v1050 = vrot.slane %v1049, 2
      %v1051 = vrot.slane %v428, 7
      %v1052 = vrot.slane %v1051, 2
      %v1053 = vrot.slane %v427, 7
      %v1054 = vrot.slane %v1053, 2
      %v1055 = vrot.slane %v429, 7
      %v1056 = vrot.slane %v1055, 2
      %v1057 = vrot.slane %v437, 7
      %v1058 = vrot.slane %v1057, 2
      %v1059 = vrot.slane %v445, 7
      %v1060 = vrot.slane %v1059, 2
      %v1061 = vrot.slane %v444, 7
      %v1062 = vrot.slane %v1061, 2
      %v1063 = vrot.slane %v446, 7
      %v1064 = vrot.slane %v1063, 2
      %v1065 = vrot.slane %v454, 7
      %v1066 = vrot.slane %v1065, 2
      %v1067 = vrot.slane %v462, 7
      %v1068 = vrot.slane %v1067, 2
      %v1069 = vrot.slane %v461, 7
      %v1070 = vrot.slane %v1069, 2
      %v1071 = vrot.slane %v463, 7
      %v1072 = vrot.slane %v1071, 2
      %v1073 = vrot.slane %v471, 7
      %v1074 = vrot.slane %v1073, 2
      %v1075 = vrot.slane %v479, 7
      %v1076 = vrot.slane %v1075, 2
      %v1077 = vrot.slane %v478, 7
      %v1078 = vrot.slane %v1077, 2
      %v1079 = vrot.slane %v480, 7
      %v1080 = vrot.slane %v1079, 2
      %v1081 = vrot.slane %v488, 7
      %v1082 = vrot.slane %v1081, 2
      %v1083 = vrot.slane %v496, 7
      %v1084 = vrot.slane %v1083, 2
      %v1085 = vrot.slane %v495, 7
      %v1086 = vrot.slane %v1085, 2
      %v1087 = vrot.slane %v497, 7
      %v1088 = vrot.slane %v1087, 2
      %v1089 = vrot.slane %v505, 7
      %v1090 = vrot.slane %v1089, 2
      %v1091 = vrot.slane %v513, 7
      %v1092 = vrot.slane %v1091, 2
      %v1093 = vrot.slane %v512, 7
      %v1094 = vrot.slane %v1093, 2
      %v1095 = vrot.slane %v514, 7
      %v1096 = vrot.slane %v1095, 2
      %v1097 = vrot.slane %v522, 7
      %v1098 = vrot.slane %v1097, 2
      %v1099 = vrot.slane %v530, 7
      %v1100 = vrot.slane %v1099, 2
      %v1101 = vrot.slane %v529, 7
      %v1102 = vrot.slane %v1101, 2
      %v1103 = vrot.slane %v531, 7
      %v1104 = vrot.slane %v1103, 2
      %v1105 = vrot.slane %v539, 7
      %v1106 = vrot.slane %v1105, 2
      %v1107 = vrot.slane %v547, 7
      %v1108 = vrot.slane %v1107, 2
      %v1109 = vrot.slane %v546, 7
      %v1110 = vrot.slane %v1109, 2
      %v1111 = vrot.slane %v548, 7
      %v1112 = vrot.slane %v1111, 2
      %v1113 = vrot.slane %v556, 7
      %v1114 = vrot.slane %v1113, 2
      %v1115 = vrot.slane %v564, 7
      %v1116 = vrot.slane %v1115, 2
      %v1117 = vrot.slane %v563, 7
      %v1118 = vrot.slane %v1117, 2
      %v1119 = vrot.slane %v565, 7
      %v1120 = vrot.slane %v1119, 2
      %v1121 = vrot.slane %v573, 7
      %v1122 = vrot.slane %v1121, 2
      %v1123 = vrot.slane %v581, 7
      %v1124 = vrot.slane %v1123, 2
      %v1125 = vrot.slane %v580, 7
      %v1126 = vrot.slane %v1125, 2
      %v1127 = vrot.slane %v582, 7
      %v1128 = vrot.slane %v1127, 2
      %v1129 = vrot.slane %v590, 7
      %v1130 = vrot.slane %v1129, 2
      %v1131 = vrot.slane %v598, 7
      %v1132 = vrot.slane %v1131, 2
      %v1133 = vrot.slane %v597, 7
      %v1134 = vrot.slane %v1133, 2
      %v1135 = vrot.slane %v599, 7
      %v1136 = vrot.slane %v1135, 2
      %v1137 = vrot.slane %v607, 7
      %v1138 = vrot.slane %v1137, 2
      %v1139 = vrot.slane %v615, 7
      %v1140 = vrot.slane %v1139, 2
      %v1141 = vrot.slane %v614, 7
      %v1142 = vrot.slane %v1141, 2
      %v1143 = vrot.slane %v616, 7
      %v1144 = vrot.slane %v1143, 2
      %v1145 = vrot.slane %v624, 7
      %v1146 = vrot.slane %v1145, 2
      %v1147 = vrot.slane %v632, 7
      %v1148 = vrot.slane %v1147, 2
      %v1149 = vrot.slane %v631, 7
      %v1150 = vrot.slane %v1149, 2
      %v1151 = vrot.slane %v633, 7
      %v1152 = vrot.slane %v1151, 2
      %v1153 = vrot.slane %v641, 7
      %v1154 = vrot.slane %v1153, 2
      %v1155 = vrot.slane %v649, 7
      %v1156 = vrot.slane %v1155, 2
      %v1157 = vrot.slane %v648, 7
      %v1158 = vrot.slane %v1157, 2
      %v1159 = vrot.slane %v650, 7
      %v1160 = vrot.slane %v1159, 2
      %v1161 = vrot.slane %v658, 7
      %v1162 = vrot.slane %v1161, 2
      %v1163 = vrot.slane %v666, 7
      %v1164 = vrot.slane %v1163, 2
      %v1165 = vrot.slane %v665, 7
      %v1166 = vrot.slane %v1165, 2
      %v1167 = vrot.slane %v667, 7
      %v1168 = vrot.slane %v1167, 2
      %v1169 = vrot.slane %v675, 7
      %v1170 = vrot.slane %v1169, 2
      %v1171 = vrot.slane %v683, 7
      %v1172 = vrot.slane %v1171, 2
      %v1173 = vrot.slane %v682, 7
      %v1174 = vrot.slane %v1173, 2
      %v1175 = vrot.slane %v684, 7
      %v1176 = vrot.slane %v1175, 2
      %v1177 = vrot.slane %v692, 7
      %v1178 = vrot.slane %v1177, 2
      %v1179 = vrot.slane %v700, 7
      %v1180 = vrot.slane %v1179, 2
      %v1181 = vrot.slane %v699, 7
      %v1182 = vrot.slane %v1181, 2
      %v1183 = vrot.slane %v701, 7
      %v1184 = vrot.slane %v1183, 2
      %v1185 = vrot.slane %v709, 7
      %v1186 = vrot.slane %v1185, 2
      %v1187 = vrot.slane %v717, 7
      %v1188 = vrot.slane %v1187, 2
      %v1189 = vrot.slane %v716, 7
      %v1190 = vrot.slane %v1189, 2
      %v1191 = vrot.slane %v718, 7
      %v1192 = vrot.slane %v1191, 2
      %v1193 = vrot.slane %v726, 7
      %v1194 = vrot.slane %v1193, 2
      %v1195 = vrot.slane %v734, 7
      %v1196 = vrot.slane %v1195, 2
      %v1197 = vrot.slane %v733, 7
      %v1198 = vrot.slane %v1197, 2
      %v1199 = vrot.slane %v735, 7
      %v1200 = vrot.slane %v1199, 2
      %v1201 = vrot.slane %v743, 7
      %v1202 = vrot.slane %v1201, 2
      %v1203 = vrot.slane %v751, 7
      %v1204 = vrot.slane %v1203, 2
      %v1205 = vrot.slane %v750, 7
      %v1206 = vrot.slane %v1205, 2
      %v1207 = vrot.slane %v752, 7
      %v1208 = vrot.slane %v1207, 2
      %v1209 = vrot.slane %v760, 7
      %v1210 = vrot.slane %v1209, 2
      %v1211 = vrot.slane %v768, 7
      %v1212 = vrot.slane %v1211, 2
      %v1213 = vrot.slane %v767, 7
      %v1214 = vrot.slane %v1213, 2
      %v1215 = vrot.slane %v769, 7
      %v1216 = vrot.slane %v1215, 2
      %v1217 = vrot.slane %v777, 7
      %v1218 = vrot.slane %v1217, 2
      %v1219 = vrot.slane %v785, 7
      %v1220 = vrot.slane %v1219, 2
      %v1221 = vrot.slane %v784, 7
      %v1222 = vrot.slane %v1221, 2
      %v1223 = vrot.slane %v786, 7
      %v1224 = vrot.slane %v1223, 2
      %v1225 = vrot.slane %v794, 7
      %v1226 = vrot.slane %v1225, 2
      %v1227 = vrot.slane %v802, 7
      %v1228 = vrot.slane %v1227, 2
      %v1229 = vrot.slane %v801, 7
      %v1230 = vrot.slane %v1229, 2
      %v1231 = vrot.slane %v803, 7
      %v1232 = vrot.slane %v1231, 2
      %v1233 = vrot.slane %v811, 7
      %v1234 = vrot.slane %v1233, 2
      %v1235 = vrot.slane %v819, 7
      %v1236 = vrot.slane %v1235, 2
      %v1237 = vrot.slane %v818, 7
      %v1238 = vrot.slane %v1237, 2
      %v1239 = vrot.slane %v820, 7
      %v1240 = vrot.slane %v1239, 2
      %v1241 = vrot.slane %v828, 7
      %v1242 = vrot.slane %v1241, 2
      %v1243 = vrot.slane %v836, 7
      %v1244 = vrot.slane %v1243, 2
      %v1245 = vrot.slane %v835, 7
      %v1246 = vrot.slane %v1245, 2
      %v1247 = vrot.slane %v837, 7
      %v1248 = vrot.slane %v1247, 2
      %v1249 = vrot.slane %v845, 7
      %v1250 = vrot.slane %v1249, 2
      %v1251 = vrot.slane %v853, 7
      %v1252 = vrot.slane %v1251, 2
      %v1253 = vrot.slane %v852, 7
      %v1254 = vrot.slane %v1253, 2
      %v1255 = vrot.slane %v854, 7
      %v1256 = vrot.slane %v1255, 2
      %v1257 = vrot.slane %v862, 7
      %v1258 = vrot.slane %v1257, 2
      %v1259 = vrot.slane %v870, 7
      %v1260 = vrot.slane %v1259, 2
      %v1261 = vrot.slane %v869, 7
      %v1262 = vrot.slane %v1261, 2
      %v1263 = vrot.slane %v871, 7
      %v1264 = vrot.slane %v1263, 2
      %v1265 = vrot.slane %v879, 7
      %v1266 = vrot.slane %v1265, 2
      %v1267 = vrot.slane %v887, 7
      %v1268 = vrot.slane %v1267, 2
      %v1269 = vrot.slane %v886, 7
      %v1270 = vrot.slane %v1269, 2
      %v1271 = vrot.slane %v888, 7
      %v1272 = vrot.slane %v1271, 2
      %v1401 = vmax.f32 %v352, %v1018
      %v1402 = vmax.f32 %v360, %v1020
      %v1403 = vmax.f32 %v359, %v1022
      %v1404 = vmax.f32 %v361, %v1024
      %v1405 = vmax.f32 %v369, %v1026
      %v1406 = vmax.f32 %v377, %v1028
      %v1407 = vmax.f32 %v376, %v1030
      %v1408 = vmax.f32 %v378, %v1032
      %v1409 = vmax.f32 %v386, %v1034
      %v1410 = vmax.f32 %v394, %v1036
      %v1411 = vmax.f32 %v393, %v1038
      %v1412 = vmax.f32 %v395, %v1040
      %v1413 = vmax.f32 %v403, %v1042
      %v1414 = vmax.f32 %v411, %v1044
      %v1415 = vmax.f32 %v410, %v1046
      %v1416 = vmax.f32 %v412, %v1048
      %v1417 = vmax.f32 %v420, %v1050
      %v1418 = vmax.f32 %v428, %v1052
      %v1419 = vmax.f32 %v427, %v1054
      %v1420 = vmax.f32 %v429, %v1056
      %v1421 = vmax.f32 %v437, %v1058
      %v1422 = vmax.f32 %v445, %v1060
      %v1423 = vmax.f32 %v444, %v1062
      %v1424 = vmax.f32 %v446, %v1064
      %v1425 = vmax.f32 %v454, %v1066
      %v1426 = vmax.f32 %v462, %v1068
      %v1427 = vmax.f32 %v461, %v1070
      %v1428 = vmax.f32 %v463, %v1072
      %v1429 = vmax.f32 %v471, %v1074
      %v1430 = vmax.f32 %v479, %v1076
      %v1431 = vmax.f32 %v478, %v1078
      %v1432 = vmax.f32 %v480, %v1080
      %v1433 = vmax.f32 %v488, %v1082
      %v1434 = vmax.f32 %v496, %v1084
      %v1435 = vmax.f32 %v495, %v1086
      %v1436 = vmax.f32 %v497, %v1088
      %v1437 = vmax.f32 %v505, %v1090
      %v1438 = vmax.f32 %v513, %v1092
      %v1439 = vmax.f32 %v512, %v1094
      %v1440 = vmax.f32 %v514, %v1096
      %v1441 = vmax.f32 %v522, %v1098
      %v1442 = vmax.f32 %v530, %v1100
      %v1443 = vmax.f32 %v529, %v1102
      %v1444 = vmax.f32 %v531, %v1104
      %v1445 = vmax.f32 %v539, %v1106
      %v1446 = vmax.f32 %v547, %v1108
      %v1447 = vmax.f32 %v546, %v1110
      %v1448 = vmax.f32 %v548, %v1112
      %v1449 = vmax.f32 %v556, %v1114
      %v1450 = vmax.f32 %v564, %v1116
      %v1451 = vmax.f32 %v563, %v1118
      %v1452 = vmax.f32 %v565, %v1120
      %v1453 = vmax.f32 %v573, %v1122
      %v1454 = vmax.f32 %v581, %v1124
      %v1455 = vmax.f32 %v580, %v1126
      %v1456 = vmax.f32 %v582, %v1128
      %v1457 = vmax.f32 %v590, %v1130
      %v1458 = vmax.f32 %v598, %v1132
      %v1459 = vmax.f32 %v597, %v1134
      %v1460 = vmax.f32 %v599, %v1136
      %v1461 = vmax.f32 %v607, %v1138
      %v1462 = vmax.f32 %v615, %v1140
      %v1463 = vmax.f32 %v614, %v1142
      %v1464 = vmax.f32 %v616, %v1144
      %v1465 = vmax.f32 %v624, %v1146
      %v1466 = vmax.f32 %v632, %v1148
      %v1467 = vmax.f32 %v631, %v1150
      %v1468 = vmax.f32 %v633, %v1152
      %v1469 = vmax.f32 %v641, %v1154
      %v1470 = vmax.f32 %v649, %v1156
      %v1471 = vmax.f32 %v648, %v1158
      %v1472 = vmax.f32 %v650, %v1160
      %v1473 = vmax.f32 %v658, %v1162
      %v1474 = vmax.f32 %v666, %v1164
      %v1475 = vmax.f32 %v665, %v1166
      %v1476 = vmax.f32 %v667, %v1168
      %v1477 = vmax.f32 %v675, %v1170
      %v1478 = vmax.f32 %v683, %v1172
      %v1479 = vmax.f32 %v682, %v1174
      %v1480 = vmax.f32 %v684, %v1176
      %v1481 = vmax.f32 %v692, %v1178
      %v1482 = vmax.f32 %v700, %v1180
      %v1483 = vmax.f32 %v699, %v1182
      %v1484 = vmax.f32 %v701, %v1184
      %v1485 = vmax.f32 %v709, %v1186
      %v1486 = vmax.f32 %v717, %v1188
      %v1487 = vmax.f32 %v716, %v1190
      %v1488 = vmax.f32 %v718, %v1192
      %v1489 = vmax.f32 %v726, %v1194
      %v1490 = vmax.f32 %v734, %v1196
      %v1491 = vmax.f32 %v733, %v1198
      %v1492 = vmax.f32 %v735, %v1200
      %v1493 = vmax.f32 %v743, %v1202
      %v1494 = vmax.f32 %v751, %v1204
      %v1495 = vmax.f32 %v750, %v1206
      %v1496 = vmax.f32 %v752, %v1208
      %v1497 = vmax.f32 %v760, %v1210
      %v1498 = vmax.f32 %v768, %v1212
      %v1499 = vmax.f32 %v767, %v1214
      %v1500 = vmax.f32 %v769, %v1216
      %v1501 = vmax.f32 %v777, %v1218
      %v1502 = vmax.f32 %v785, %v1220
      %v1503 = vmax.f32 %v784, %v1222
      %v1504 = vmax.f32 %v786, %v1224
      %v1505 = vmax.f32 %v794, %v1226
      %v1506 = vmax.f32 %v802, %v1228
      %v1507 = vmax.f32 %v801, %v1230
      %v1508 = vmax.f32 %v803, %v1232
      %v1509 = vmax.f32 %v811, %v1234
      %v1510 = vmax.f32 %v819, %v1236
      %v1511 = vmax.f32 %v818, %v1238
      %v1512 = vmax.f32 %v820, %v1240
      %v1513 = vmax.f32 %v828, %v1242
      %v1514 = vmax.f32 %v836, %v1244
      %v1515 = vmax.f32 %v835, %v1246
      %v1516 = vmax.f32 %v837, %v1248
      %v1517 = vmax.f32 %v845, %v1250
      %v1518 = vmax.f32 %v853, %v1252
      %v1519 = vmax.f32 %v852, %v1254
      %v1520 = vmax.f32 %v854, %v1256
      %v1521 = vmax.f32 %v862, %v1258
      %v1522 = vmax.f32 %v870, %v1260
      %v1523 = vmax.f32 %v869, %v1262
      %v1524 = vmax.f32 %v871, %v1264
      %v1525 = vmax.f32 %v879, %v1266
      %v1526 = vmax.f32 %v887, %v1268
      %v1527 = vmax.f32 %v886, %v1270
      %v1528 = vmax.f32 %v888, %v1272
      %v1529 = vmax.f32 %v1401, %v1409
      %v1530 = vmax.f32 %v1402, %v1410
      %v1531 = vmax.f32 %v1403, %v1411
      %v1532 = vmax.f32 %v1404, %v1412
      %v1533 = vmax.f32 %v1405, %v1413
      %v1534 = vmax.f32 %v1406, %v1414
      %v1535 = vmax.f32 %v1407, %v1415
      %v1536 = vmax.f32 %v1408, %v1416
      %v1537 = vmax.f32 %v1417, %v1425
      %v1538 = vmax.f32 %v1418, %v1426
      %v1539 = vmax.f32 %v1419, %v1427
      %v1540 = vmax.f32 %v1420, %v1428
      %v1541 = vmax.f32 %v1421, %v1429
      %v1542 = vmax.f32 %v1422, %v1430
      %v1543 = vmax.f32 %v1423, %v1431
      %v1544 = vmax.f32 %v1424, %v1432
      %v1545 = vmax.f32 %v1433, %v1441
      %v1546 = vmax.f32 %v1434, %v1442
      %v1547 = vmax.f32 %v1435, %v1443
      %v1548 = vmax.f32 %v1436, %v1444
      %v1549 = vmax.f32 %v1437, %v1445
      %v1550 = vmax.f32 %v1438, %v1446
      %v1551 = vmax.f32 %v1439, %v1447
      %v1552 = vmax.f32 %v1440, %v1448
      %v1553 = vmax.f32 %v1449, %v1457
      %v1554 = vmax.f32 %v1450, %v1458
      %v1555 = vmax.f32 %v1451, %v1459
      %v1556 = vmax.f32 %v1452, %v1460
      %v1557 = vmax.f32 %v1453, %v1461
      %v1558 = vmax.f32 %v1454, %v1462
      %v1559 = vmax.f32 %v1455, %v1463
      %v1560 = vmax.f32 %v1456, %v1464
      %v1561 = vmax.f32 %v1465, %v1473
      %v1562 = vmax.f32 %v1466, %v1474
      %v1563 = vmax.f32 %v1467, %v1475
      %v1564 = vmax.f32 %v1468, %v1476
      %v1565 = vmax.f32 %v1469, %v1477
      %v1566 = vmax.f32 %v1470, %v1478
      %v1567 = vmax.f32 %v1471, %v1479
      %v1568 = vmax.f32 %v1472, %v1480
      %v1569 = vmax.f32 %v1481, %v1489
      %v1570 = vmax.f32 %v1482, %v1490
      %v1571 = vmax.f32 %v1483, %v1491
      %v1572 = vmax.f32 %v1484, %v1492
      %v1573 = vmax.f32 %v1485, %v1493
      %v1574 = vmax.f32 %v1486, %v1494
      %v1575 = vmax.f32 %v1487, %v1495
      %v1576 = vmax.f32 %v1488, %v1496
      %v1577 = vmax.f32 %v1497, %v1505
      %v1578 = vmax.f32 %v1498, %v1506
      %v1579 = vmax.f32 %v1499, %v1507
      %v1580 = vmax.f32 %v1500, %v1508
      %v1581 = vmax.f32 %v1501, %v1509
      %v1582 = vmax.f32 %v1502, %v1510
      %v1583 = vmax.f32 %v1503, %v1511
      %v1584 = vmax.f32 %v1504, %v1512
      %v1585 = vmax.f32 %v1513, %v1521
      %v1586 = vmax.f32 %v1514, %v1522
      %v1587 = vmax.f32 %v1515, %v1523
      %v1588 = vmax.f32 %v1516, %v1524
      %v1589 = vmax.f32 %v1517, %v1525
      %v1590 = vmax.f32 %v1518, %v1526
      %v1591 = vmax.f32 %v1519, %v1527
      %v1592 = vmax.f32 %v1520, %v1528
      %v1657 = vlaneseq
      %v1658 = vshrl.u32 %v1657, 7
      %v1659 = vsub.s32 0, %v1658
      %v1660 = vrot.slane %v1529, %v1659
      %v1661 = vlaneseq
      %v1662 = vshrl.u32 %v1661, 7
      %v1663 = vsub.s32 0, %v1662
      %v1664 = vrot.slane %v1530, %v1663
      %v1665 = vlaneseq
      %v1666 = vshrl.u32 %v1665, 7
      %v1667 = vsub.s32 0, %v1666
      %v1668 = vrot.slane %v1531, %v1667
      %v1669 = vlaneseq
      %v1670 = vshrl.u32 %v1669, 7
      %v1671 = vsub.s32 0, %v1670
      %v1672 = vrot.slane %v1532, %v1671
      %v1673 = vlaneseq
      %v1674 = vshrl.u32 %v1673, 7
      %v1675 = vsub.s32 0, %v1674
      %v1676 = vrot.slane %v1533, %v1675
      %v1677 = vlaneseq
      %v1678 = vshrl.u32 %v1677, 7
      %v1679 = vsub.s32 0, %v1678
      %v1680 = vrot.slane %v1534, %v1679
      %v1681 = vlaneseq
      %v1682 = vshrl.u32 %v1681, 7
      %v1683 = vsub.s32 0, %v1682
      %v1684 = vrot.slane %v1535, %v1683
      %v1685 = vlaneseq
      %v1686 = vshrl.u32 %v1685, 7
      %v1687 = vsub.s32 0, %v1686
      %v1688 = vrot.slane %v1536, %v1687
      %v1689 = vlaneseq
      %v1690 = vshrl.u32 %v1689, 7
      %v1691 = vsub.s32 0, %v1690
      %v1692 = vrot.slane %v1537, %v1691
      %v1693 = vlaneseq
      %v1694 = vshrl.u32 %v1693, 7
      %v1695 = vsub.s32 0, %v1694
      %v1696 = vrot.slane %v1538, %v1695
      %v1697 = vlaneseq
      %v1698 = vshrl.u32 %v1697, 7
      %v1699 = vsub.s32 0, %v1698
      %v1700 = vrot.slane %v1539, %v1699
      %v1701 = vlaneseq
      %v1702 = vshrl.u32 %v1701, 7
      %v1703 = vsub.s32 0, %v1702
      %v1704 = vrot.slane %v1540, %v1703
      %v1705 = vlaneseq
      %v1706 = vshrl.u32 %v1705, 7
      %v1707 = vsub.s32 0, %v1706
      %v1708 = vrot.slane %v1541, %v1707
      %v1709 = vlaneseq
      %v1710 = vshrl.u32 %v1709, 7
      %v1711 = vsub.s32 0, %v1710
      %v1712 = vrot.slane %v1542, %v1711
      %v1713 = vlaneseq
      %v1714 = vshrl.u32 %v1713, 7
      %v1715 = vsub.s32 0, %v1714
      %v1716 = vrot.slane %v1543, %v1715
      %v1717 = vlaneseq
      %v1718 = vshrl.u32 %v1717, 7
      %v1719 = vsub.s32 0, %v1718
      %v1720 = vrot.slane %v1544, %v1719
      %v1721 = vlaneseq
      %v1722 = vshrl.u32 %v1721, 7
      %v1723 = vsub.s32 0, %v1722
      %v1724 = vrot.slane %v1545, %v1723
      %v1725 = vlaneseq
      %v1726 = vshrl.u32 %v1725, 7
      %v1727 = vsub.s32 0, %v1726
      %v1728 = vrot.slane %v1546, %v1727
      %v1729 = vlaneseq
      %v1730 = vshrl.u32 %v1729, 7
      %v1731 = vsub.s32 0, %v1730
      %v1732 = vrot.slane %v1547, %v1731
      %v1733 = vlaneseq
      %v1734 = vshrl.u32 %v1733, 7
      %v1735 = vsub.s32 0, %v1734
      %v1736 = vrot.slane %v1548, %v1735
      %v1737 = vlaneseq
      %v1738 = vshrl.u32 %v1737, 7
      %v1739 = vsub.s32 0, %v1738
      %v1740 = vrot.slane %v1549, %v1739
      %v1741 = vlaneseq
      %v1742 = vshrl.u32 %v1741, 7
      %v1743 = vsub.s32 0, %v1742
      %v1744 = vrot.slane %v1550, %v1743
      %v1745 = vlaneseq
      %v1746 = vshrl.u32 %v1745, 7
      %v1747 = vsub.s32 0, %v1746
      %v1748 = vrot.slane %v1551, %v1747
      %v1749 = vlaneseq
      %v1750 = vshrl.u32 %v1749, 7
      %v1751 = vsub.s32 0, %v1750
      %v1752 = vrot.slane %v1552, %v1751
      %v1753 = vlaneseq
      %v1754 = vshrl.u32 %v1753, 7
      %v1755 = vsub.s32 0, %v1754
      %v1756 = vrot.slane %v1553, %v1755
      %v1757 = vlaneseq
      %v1758 = vshrl.u32 %v1757, 7
      %v1759 = vsub.s32 0, %v1758
      %v1760 = vrot.slane %v1554, %v1759
      %v1761 = vlaneseq
      %v1762 = vshrl.u32 %v1761, 7
      %v1763 = vsub.s32 0, %v1762
      %v1764 = vrot.slane %v1555, %v1763
      %v1765 = vlaneseq
      %v1766 = vshrl.u32 %v1765, 7
      %v1767 = vsub.s32 0, %v1766
      %v1768 = vrot.slane %v1556, %v1767
      %v1769 = vlaneseq
      %v1770 = vshrl.u32 %v1769, 7
      %v1771 = vsub.s32 0, %v1770
      %v1772 = vrot.slane %v1557, %v1771
      %v1773 = vlaneseq
      %v1774 = vshrl.u32 %v1773, 7
      %v1775 = vsub.s32 0, %v1774
      %v1776 = vrot.slane %v1558, %v1775
      %v1777 = vlaneseq
      %v1778 = vshrl.u32 %v1777, 7
      %v1779 = vsub.s32 0, %v1778
      %v1780 = vrot.slane %v1559, %v1779
      %v1781 = vlaneseq
      %v1782 = vshrl.u32 %v1781, 7
      %v1783 = vsub.s32 0, %v1782
      %v1784 = vrot.slane %v1560, %v1783
      %v1785 = vlaneseq
      %v1786 = vshrl.u32 %v1785, 7
      %v1787 = vsub.s32 0, %v1786
      %v1788 = vrot.slane %v1561, %v1787
      %v1789 = vlaneseq
      %v1790 = vshrl.u32 %v1789, 7
      %v1791 = vsub.s32 0, %v1790
      %v1792 = vrot.slane %v1562, %v1791
      %v1793 = vlaneseq
      %v1794 = vshrl.u32 %v1793, 7
      %v1795 = vsub.s32 0, %v1794
      %v1796 = vrot.slane %v1563, %v1795
      %v1797 = vlaneseq
      %v1798 = vshrl.u32 %v1797, 7
      %v1799 = vsub.s32 0, %v1798
      %v1800 = vrot.slane %v1564, %v1799
      %v1801 = vlaneseq
      %v1802 = vshrl.u32 %v1801, 7
      %v1803 = vsub.s32 0, %v1802
      %v1804 = vrot.slane %v1565, %v1803
      %v1805 = vlaneseq
      %v1806 = vshrl.u32 %v1805, 7
      %v1807 = vsub.s32 0, %v1806
      %v1808 = vrot.slane %v1566, %v1807
      %v1809 = vlaneseq
      %v1810 = vshrl.u32 %v1809, 7
      %v1811 = vsub.s32 0, %v1810
      %v1812 = vrot.slane %v1567, %v1811
      %v1813 = vlaneseq
      %v1814 = vshrl.u32 %v1813, 7
      %v1815 = vsub.s32 0, %v1814
      %v1816 = vrot.slane %v1568, %v1815
      %v1817 = vlaneseq
      %v1818 = vshrl.u32 %v1817, 7
      %v1819 = vsub.s32 0, %v1818
      %v1820 = vrot.slane %v1569, %v1819
      %v1821 = vlaneseq
      %v1822 = vshrl.u32 %v1821, 7
      %v1823 = vsub.s32 0, %v1822
      %v1824 = vrot.slane %v1570, %v1823
      %v1825 = vlaneseq
      %v1826 = vshrl.u32 %v1825, 7
      %v1827 = vsub.s32 0, %v1826
      %v1828 = vrot.slane %v1571, %v1827
      %v1829 = vlaneseq
      %v1830 = vshrl.u32 %v1829, 7
      %v1831 = vsub.s32 0, %v1830
      %v1832 = vrot.slane %v1572, %v1831
      %v1833 = vlaneseq
      %v1834 = vshrl.u32 %v1833, 7
      %v1835 = vsub.s32 0, %v1834
      %v1836 = vrot.slane %v1573, %v1835
      %v1837 = vlaneseq
      %v1838 = vshrl.u32 %v1837, 7
      %v1839 = vsub.s32 0, %v1838
      %v1840 = vrot.slane %v1574, %v1839
      %v1841 = vlaneseq
      %v1842 = vshrl.u32 %v1841, 7
      %v1843 = vsub.s32 0, %v1842
      %v1844 = vrot.slane %v1575, %v1843
      %v1845 = vlaneseq
      %v1846 = vshrl.u32 %v1845, 7
      %v1847 = vsub.s32 0, %v1846
      %v1848 = vrot.slane %v1576, %v1847
      %v1849 = vlaneseq
      %v1850 = vshrl.u32 %v1849, 7
      %v1851 = vsub.s32 0, %v1850
      %v1852 = vrot.slane %v1577, %v1851
      %v1853 = vlaneseq
      %v1854 = vshrl.u32 %v1853, 7
      %v1855 = vsub.s32 0, %v1854
      %v1856 = vrot.slane %v1578, %v1855
      %v1857 = vlaneseq
      %v1858 = vshrl.u32 %v1857, 7
      %v1859 = vsub.s32 0, %v1858
      %v1860 = vrot.slane %v1579, %v1859
      %v1861 = vlaneseq
      %v1862 = vshrl.u32 %v1861, 7
      %v1863 = vsub.s32 0, %v1862
      %v1864 = vrot.slane %v1580, %v1863
      %v1865 = vlaneseq
      %v1866 = vshrl.u32 %v1865, 7
      %v1867 = vsub.s32 0, %v1866
      %v1868 = vrot.slane %v1581, %v1867
      %v1869 = vlaneseq
      %v1870 = vshrl.u32 %v1869, 7
      %v1871 = vsub.s32 0, %v1870
      %v1872 = vrot.slane %v1582, %v1871
      %v1873 = vlaneseq
      %v1874 = vshrl.u32 %v1873, 7
      %v1875 = vsub.s32 0, %v1874
      %v1876 = vrot.slane %v1583, %v1875
      %v1877 = vlaneseq
      %v1878 = vshrl.u32 %v1877, 7
      %v1879 = vsub.s32 0, %v1878
      %v1880 = vrot.slane %v1584, %v1879
      %v1881 = vlaneseq
      %v1882 = vshrl.u32 %v1881, 7
      %v1883 = vsub.s32 0, %v1882
      %v1884 = vrot.slane %v1585, %v1883
      %v1885 = vlaneseq
      %v1886 = vshrl.u32 %v1885, 7
      %v1887 = vsub.s32 0, %v1886
      %v1888 = vrot.slane %v1586, %v1887
      %v1889 = vlaneseq
      %v1890 = vshrl.u32 %v1889, 7
      %v1891 = vsub.s32 0, %v1890
      %v1892 = vrot.slane %v1587, %v1891
      %v1893 = vlaneseq
      %v1894 = vshrl.u32 %v1893, 7
      %v1895 = vsub.s32 0, %v1894
      %v1896 = vrot.slane %v1588, %v1895
      %v1897 = vlaneseq
      %v1898 = vshrl.u32 %v1897, 7
      %v1899 = vsub.s32 0, %v1898
      %v1900 = vrot.slane %v1589, %v1899
      %v1901 = vlaneseq
      %v1902 = vshrl.u32 %v1901, 7
      %v1903 = vsub.s32 0, %v1902
      %v1904 = vrot.slane %v1590, %v1903
      %v1905 = vlaneseq
      %v1906 = vshrl.u32 %v1905, 7
      %v1907 = vsub.s32 0, %v1906
      %v1908 = vrot.slane %v1591, %v1907
      %v1909 = vlaneseq
      %v1910 = vshrl.u32 %v1909, 7
      %v1911 = vsub.s32 0, %v1910
      %v1912 = vrot.slane %v1592, %v1911
      %vm1913 = vcmask 1041409
      %v1914 = vsel %vm1913, %v1664, %v1660
      %vm1915 = vcmask 1042434
      %v1916 = vsel %vm1915, %v1668, %v1914
      %vm1917 = vcmask 1043459
      %v1918 = vsel %vm1917, %v1672, %v1916
      %vm1919 = vcmask 1044484
      %v1920 = vsel %vm1919, %v1676, %v1918
      %vm1921 = vcmask 1045509
      %v1922 = vsel %vm1921, %v1680, %v1920
      %vm1923 = vcmask 1046534
      %v1924 = vsel %vm1923, %v1684, %v1922
      %vm1925 = vcmask 1047559
      %v1926 = vsel %vm1925, %v1688, %v1924
      %v1927 = vsel %vm1913, %v1696, %v1692
      %v1928 = vsel %vm1915, %v1700, %v1927
      %v1929 = vsel %vm1917, %v1704, %v1928
      %v1930 = vsel %vm1919, %v1708, %v1929
      %v1931 = vsel %vm1921, %v1712, %v1930
      %v1932 = vsel %vm1923, %v1716, %v1931
      %v1933 = vsel %vm1925, %v1720, %v1932
      %v1934 = vsel %vm1913, %v1728, %v1724
      %v1935 = vsel %vm1915, %v1732, %v1934
      %v1936 = vsel %vm1917, %v1736, %v1935
      %v1937 = vsel %vm1919, %v1740, %v1936
      %v1938 = vsel %vm1921, %v1744, %v1937
      %v1939 = vsel %vm1923, %v1748, %v1938
      %v1940 = vsel %vm1925, %v1752, %v1939
      %v1941 = vsel %vm1913, %v1760, %v1756
      %v1942 = vsel %vm1915, %v1764, %v1941
      %v1943 = vsel %vm1917, %v1768, %v1942
      %v1944 = vsel %vm1919, %v1772, %v1943
      %v1945 = vsel %vm1921, %v1776, %v1944
      %v1946 = vsel %vm1923, %v1780, %v1945
      %v1947 = vsel %vm1925, %v1784, %v1946
      %v1948 = vsel %vm1913, %v1792, %v1788
      %v1949 = vsel %vm1915, %v1796, %v1948
      %v1950 = vsel %vm1917, %v1800, %v1949
      %v1951 = vsel %vm1919, %v1804, %v1950
      %v1952 = vsel %vm1921, %v1808, %v1951
      %v1953 = vsel %vm1923, %v1812, %v1952
      %v1954 = vsel %vm1925, %v1816, %v1953
      %v1955 = vsel %vm1913, %v1824, %v1820
      %v1956 = vsel %vm1915, %v1828, %v1955
      %v1957 = vsel %vm1917, %v1832, %v1956
      %v1958 = vsel %vm1919, %v1836, %v1957
      %v1959 = vsel %vm1921, %v1840, %v1958
      %v1960 = vsel %vm1923, %v1844, %v1959
      %v1961 = vsel %vm1925, %v1848, %v1960
      %v1962 = vsel %vm1913, %v1856, %v1852
      %v1963 = vsel %vm1915, %v1860, %v1962
      %v1964 = vsel %vm1917, %v1864, %v1963
      %v1965 = vsel %vm1919, %v1868, %v1964
      %v1966 = vsel %vm1921, %v1872, %v1965
      %v1967 = vsel %vm1923, %v1876, %v1966
      %v1968 = vsel %vm1925, %v1880, %v1967
      %v1969 = vsel %vm1913, %v1888, %v1884
      %v1970 = vsel %vm1915, %v1892, %v1969
      %v1971 = vsel %vm1917, %v1896, %v1970
      %v1972 = vsel %vm1919, %v1900, %v1971
      %v1973 = vsel %vm1921, %v1904, %v1972
      %v1974 = vsel %vm1923, %v1908, %v1973
      %v1975 = vsel %vm1925, %v1912, %v1974
      %vm1984 = vcmask 64512
      %1985 = vst.msk [vmem:[%s170] sm:$0xff] %vm1984, %v1926
      %1986 = vst.msk [vmem:[%s170 + $0x8] sm:$0xff] %vm1984, %v1933
      %1987 = vst.msk [vmem:[%s170 + $0x10] sm:$0xff] %vm1984, %v1940
      %1988 = vst.msk [vmem:[%s170 + $0x18] sm:$0xff] %vm1984, %v1947
      %1989 = vst.msk [vmem:[%s170 + $0x20] sm:$0xff] %vm1984, %v1954
      %1990 = vst.msk [vmem:[%s170 + $0x28] sm:$0xff] %vm1984, %v1961
      %1991 = vst.msk [vmem:[%s170 + $0x30] sm:$0xff] %vm1984, %v1968
      %1992 = vst.msk [vmem:[%s170 + $0x38] sm:$0xff] %vm1984, %v1975
      %p1993 = scmp.lt.s32.totalorder %s14, 1
      %s1994 = scalar_select %p1993, %s14, 1
      %s1995 = smul.addr %s1994, 8
      %s1996 = smul.addr %s1995, 8
      %s1997 = scalar_lea.vmem %s3, %s1996
      // Predicated region
      $region33: #{conv_block_forward.3} parent=31 // pred_check
        %p1998 = pneg %p100
      $region34: #{conv_block_forward.3} parent=31 // pred_check_branch
        %2000 = sbr.rel (%p1998) target = $region36
      $region35: #{conv_block_forward.3} parent=31 // pred_region
        _
      $region36: #{conv_block_forward.3} parent=31 // pred_fallthru
        _
    $region32: #{conv_block_forward.3} parent=5 // pred_fallthru
      _
    %p2001 = scmp.le.s32.totalorder 2, %s9
    // Predicated region
    $region37: #{conv_block_forward.3} parent=5 // pred_check
      %p2002 = pneg %p2001
    $region38: #{conv_block_forward.3} parent=5 // pred_check_branch
      %2004 = sbr.rel (%p2002) target = $region40
    $region39: #{conv_block_forward.3} parent=5 // pred_region
      %s2005 = ssub.s32 %s9, 2
      // Predicated region
      $region41: #{conv_block_forward.3} parent=39 // pred_check
        %p2006 = pneg %p106
      $region42: #{conv_block_forward.3} parent=39 // pred_check_branch
        %2008 = sbr.rel (%p2006) target = $region44
      $region43: #{conv_block_forward.3} parent=39 // pred_region
        %p2009 = scmp.lt.s32.totalorder %s15, 1
        %s2010 = scalar_select %p2009, %s15, 1
        %s2011 = smul.addr %s2010, 8
        %s2012 = smul.addr %s2011, 8
        %s2013 = scalar_lea.vmem %s3, %s2012
      $region44: #{conv_block_forward.3} parent=39 // pred_fallthru
        _
    $region40: #{conv_block_forward.3} parent=5 // pred_fallthru
      _
  $region6: #{conv_block_forward.3} parent=0 // loop_footer
    %s13 = sadd.s32 1, %s9
  $region7: #{conv_block_forward.3} parent=0 // loop_footer_branch
    %8 = sbr.rel target = $region3
  $region8: #{conv_block_forward.3} parent=0 // loop_exit
    _

// kernel: conv_block_forward.2
$region0: #{conv_block_forward.2}
  #allocation0 [shape = 'u32[]', space=smem, size = 0x4, offset = 0x4, fixed_abs, tag = 'smem constant byte address 0x4 - core index']
  #allocation1 [shape = 'u32[144,128]{1,0:T(1,128)}', space=vmem, size = 0x12000, scoped, tag = 'internal scratch']
  #allocation2 [shape = 'f32[1,18,18,4]{3,2,1,0:T(8,128)}', space=vmem, size = 0x36000, scoped, tag = 'scratch operand']
  %s0 = inlined_call_operand.vmem [shape: f32[2,16,16,4], index: 0, kind: input, shape index: {}]
  %s1 = inlined_call_operand.vmem [shape: f32[3,12,8], index: 1, kind: input, shape index: {}]
  %s2 = inlined_call_operand.vmem [shape: f32[2,256,8], index: 2, kind: output, shape index: {0}]
  %s3 = inlined_call_operand.vmem [shape: f32[2,1,8], index: 3, kind: output, shape index: {1}]
  %s4 = inlined_call_operand.vmem [shape: f32[2,1,8], index: 4, kind: output, shape index: {2}]
  %5 = xla_tuple %s2, %s3, %s4
  %s6 = sld [smem:[#allocation0]]
  $region57: #{conv_block_forward.2} parent=0
    _
  %s8 = ssub.s32 1, %s6
  %s9 = scalar_select 0, %s8, %s6
  loop: start=0, step=1, limit=4
  $region2: #{conv_block_forward.2} parent=0 // loop_pre_header
    _
  $region3: #{conv_block_forward.2} parent=0 // loop_header
    %s11 = sphi 0, %s15
    %p12 = scmp.ge.s32.totalorder %s11, 4
    %s21 = sphi 0, %s23
    %s24 = sphi 0, %s21
    %s25 = sphi 0, %s24
    %s41 = sphi 0, %s25
    %s45 = sphi 0, %s45
    %s47 = sphi 0, %s45
    %s48 = sphi 0, %s47
    %s62 = sphi 0, %s48
    %s68 = sphi 0, %s70
    %s71 = sphi 0, %s68
    %s72 = sphi 0, %s71
    %s88 = sphi 0, %s72
    %s94 = sphi 0, %s96
    %s97 = sphi 0, %s94
    %s98 = sphi 0, %s97
    %s114 = sphi 0, %s98
    %s120 = sphi 0, %s122
    %s123 = sphi 0, %s120
    %s124 = sphi 0, %s123
    %s140 = sphi 0, %s124
  $region4: #{conv_block_forward.2} parent=0 // loop_header_branch
    %14 = sbr.rel (%p12) target = $region8
  $region5: #{conv_block_forward.2} parent=0 // loop_body
    %s16 = ssub.s32 %s11, 1
    %s17 = ssub.s32 %s11, 2
    %s18 = sadd.s32 %s11, 1
    %s19 = ssub.s32 %s11, %s18
    %p20 = scmp.eq.s32.totalorder %s19, 0
    %s22 = sadd.s32 %s21, 1
    %s23 = scalar_select %p20, %s21, %s22
    %p26 = pneg %p20
    %p27 = scmp.eq.s32.totalorder %s11, 1
    %p28 = por %p26, %p27
    %p29 = scmp.ne.s32.totalorder %s21, %s24
    %p30 = scmp.eq.s32.totalorder %s11, 0
    %p31 = por %p29, %p30
    %p32 = scmp.ne.s32.totalorder %s21, %s24
    %p33 = scmp.eq.s32.totalorder %s16, 1
    %p34 = por %p32, %p33
    %p35 = scmp.ne.s32.totalorder %s24, %s25
    %p36 = scmp.eq.s32.totalorder %s16, 0
    %p37 = por %p35, %p36
    %p38 = scmp.ne.s32.totalorder %s24, %s25
    %p39 = scmp.eq.s32.totalorder %s17, 1
    %p40 = por %p38, %p39
    %p42 = scmp.ne.s32.totalorder %s25, %s41
    %p43 = scmp.eq.s32.totalorder %s17, 0
    %p44 = por %p42, %p43
    %s46 = sadd.s32 %s45, 1
    %p49 = scmp.eq.s32.totalorder %s11, 1
    %p50 = scmp.ne.s32.totalorder %s45, %s47
    %p51 = scmp.eq.s32.totalorder %s11, 0
    %p52 = por %p50, %p51
    %p53 = scmp.ne.s32.totalorder %s45, %s47
    %p54 = scmp.eq.s32.totalorder %s16, 1
    %p55 = por %p53, %p54
    %p56 = scmp.ne.s32.totalorder %s47, %s48
    %p57 = scmp.eq.s32.totalorder %s16, 0
    %p58 = por %p56, %p57
    %p59 = scmp.ne.s32.totalorder %s47, %s48
    %p60 = scmp.eq.s32.totalorder %s17, 1
    %p61 = por %p59, %p60
    %p63 = scmp.ne.s32.totalorder %s48, %s62
    %p64 = scmp.eq.s32.totalorder %s17, 0
    %p65 = por %p63, %p64
    %s66 = ssub.s32 %s11, %s18
    %p67 = scmp.eq.s32.totalorder %s66, 0
    %s69 = sadd.s32 %s68, 1
    %s70 = scalar_select %p67, %s68, %s69
    %p73 = pneg %p67
    %p74 = scmp.eq.s32.totalorder %s11, 1
    %p75 = por %p73, %p74
    %p76 = scmp.ne.s32.totalorder %s68, %s71
    %p77 = scmp.eq.s32.totalorder %s11, 0
    %p78 = por %p76, %p77
    %p79 = scmp.ne.s32.totalorder %s68, %s71
    %p80 = scmp.eq.s32.totalorder %s16, 1
    %p81 = por %p79, %p80
    %p82 = scmp.ne.s32.totalorder %s71, %s72
    %p83 = scmp.eq.s32.totalorder %s16, 0
    %p84 = por %p82, %p83
    %p85 = scmp.ne.s32.totalorder %s71, %s72
    %p86 = scmp.eq.s32.totalorder %s17, 1
    %p87 = por %p85, %p86
    %p89 = scmp.ne.s32.totalorder %s72, %s88
    %p90 = scmp.eq.s32.totalorder %s17, 0
    %p91 = por %p89, %p90
    %s92 = ssub.s32 %s11, %s18
    %p93 = scmp.eq.s32.totalorder %s92, 0
    %s95 = sadd.s32 %s94, 1
    %s96 = scalar_select %p93, %s94, %s95
    %p99 = pneg %p93
    %p100 = scmp.eq.s32.totalorder %s11, 1
    %p101 = por %p99, %p100
    %p102 = scmp.ne.s32.totalorder %s94, %s97
    %p103 = scmp.eq.s32.totalorder %s11, 0
    %p104 = por %p102, %p103
    %p105 = scmp.ne.s32.totalorder %s94, %s97
    %p106 = scmp.eq.s32.totalorder %s16, 1
    %p107 = por %p105, %p106
    %p108 = scmp.ne.s32.totalorder %s97, %s98
    %p109 = scmp.eq.s32.totalorder %s16, 0
    %p110 = por %p108, %p109
    %p111 = scmp.ne.s32.totalorder %s97, %s98
    %p112 = scmp.eq.s32.totalorder %s17, 1
    %p113 = por %p111, %p112
    %p115 = scmp.ne.s32.totalorder %s98, %s114
    %p116 = scmp.eq.s32.totalorder %s17, 0
    %p117 = por %p115, %p116
    %s118 = ssub.s32 %s11, %s18
    %p119 = scmp.eq.s32.totalorder %s118, 0
    %s121 = sadd.s32 %s120, 1
    %s122 = scalar_select %p119, %s120, %s121
    %p125 = pneg %p119
    %p126 = scmp.eq.s32.totalorder %s11, 1
    %p127 = por %p125, %p126
    %p128 = scmp.ne.s32.totalorder %s120, %s123
    %p129 = scmp.eq.s32.totalorder %s11, 0
    %p130 = por %p128, %p129
    %p131 = scmp.ne.s32.totalorder %s120, %s123
    %p132 = scmp.eq.s32.totalorder %s16, 1
    %p133 = por %p131, %p132
    %p134 = scmp.ne.s32.totalorder %s123, %s124
    %p135 = scmp.eq.s32.totalorder %s16, 0
    %p136 = por %p134, %p135
    %p137 = scmp.ne.s32.totalorder %s123, %s124
    %p138 = scmp.eq.s32.totalorder %s17, 1
    %p139 = por %p137, %p138
    %p141 = scmp.ne.s32.totalorder %s124, %s140
    %p142 = scmp.eq.s32.totalorder %s17, 0
    %p143 = por %p141, %p142
    %p144 = scmp.le.s32.totalorder 1, %s11
    %p145 = scmp.lt.s32.totalorder %s11, 3
    %p146 = pnand %p144, %p145
    %p147 = pneg %p146
    // Predicated region
    $region9: #{conv_block_forward.2} parent=5 // pred_check
      _
    $region10: #{conv_block_forward.2} parent=5 // pred_check_branch
      %149 = sbr.rel (%p146) target = $region12
    $region11: #{conv_block_forward.2} parent=5 // pred_region
      %s150 = ssub.s32 %s11, 1
      // Predicated region
      $region13: #{conv_block_forward.2} parent=11 // pred_check
        %p151 = pneg %p58
      $region14: #{conv_block_forward.2} parent=11 // pred_check_branch
        %153 = sbr.rel (%p151) target = $region16
      $region15: #{conv_block_forward.2} parent=11 // pred_region
        _
      $region16: #{conv_block_forward.2} parent=11 // pred_fallthru
        _
    $region12: #{conv_block_forward.2} parent=5 // pred_fallthru
      _
    %p154 = scmp.lt.s32.totalorder %s11, 2
    // Predicated region
    $region17: #{conv_block_forward.2} parent=5 // pred_check
      %p155 = pneg %p154
    $region18: #{conv_block_forward.2} parent=5 // pred_check_branch
      %157 = sbr.rel (%p155) target = $region20
    $region19: #{conv_block_forward.2} parent=5 // pred_region
      // Predicated region
      $region21: #{conv_block_forward.2} parent=19 // pred_check
        %p158 = pneg %p31
      $region22: #{conv_block_forward.2} parent=19 // pred_check_branch
        %160 = sbr.rel (%p158) target = $region24
      $region23: #{conv_block_forward.2} parent=19 // pred_region
        %p161 = scmp.lt.s32.totalorder %s11, 1
        %s162 = scalar_select %p161, %s11, 1
        %s163 = smul.addr %s162, 32
        %s164 = smul.addr %s163, 8
        %s165 = scalar_lea.vmem %s0, %s164
      $region24: #{conv_block_forward.2} parent=19 // pred_fallthru
        _
    $region20: #{conv_block_forward.2} parent=5 // pred_fallthru
      _
    %p166 = scmp.le.s32.totalorder 1, %s11
    %p167 = scmp.lt.s32.totalorder %s11, 3
    %p168 = pnand %p166, %p167
    %p169 = pneg %p168
    // Predicated region
    $region25: #{conv_block_forward.2} parent=5 // pred_check
      _
    $region26: #{conv_block_forward.2} parent=5 // pred_check_branch
      %171 = sbr.rel (%p168) target = $region28
    $region27: #{conv_block_forward.2} parent=5 // pred_region
      %s172 = ssub.s32 %s11, 1
      %p173 = scmp.lt.s32.totalorder %s16, 1
      %s174 = scalar_select %p173, %s16, 1
      %s175 = smul.addr %s174, 32
      %s176 = smul.addr %s175, 8
      %s177 = scalar_lea.vmem %s0, %s176
      %p178 = pneg %p37
      %p179 = pneg %p34
      %p180 = pneg %p58
      %p181 = pneg %p55
      %p182 = pneg %p84
      %p183 = pneg %p81
      %p184 = scmp.lt.s32.totalorder %s16, 1
      %s185 = scalar_select %p184, %s16, 1
      %s186 = smul.addr %s185, 32
      %s187 = smul.addr %s186, 8
      %s188 = scalar_lea.vmem %s2, %s187
      %p189 = pneg %p110
      %p190 = pneg %p107
      %p191 = scmp.lt.s32.totalorder %s16, 1
      %s192 = scalar_select %p191, %s16, 1
      %s193 = scalar_lea.vmem %s3, %s192
      %p194 = pneg %p136
      %p195 = pneg %p133
      %p196 = scmp.lt.s32.totalorder %s16, 1
      %s197 = scalar_select %p196, %s16, 1
      %s198 = scalar_lea.vmem %s4, %s197
      %p199 = scmp.lt.s32.totalorder %s16, 1
      %s200 = scalar_select %p199, %s16, 1
      %s201 = smul.addr %s200, 32
      %s202 = smul.addr %s201, 8
      %s203 = scalar_lea.vmem %s0, %s202
      %p204 = scmp.lt.s32.totalorder %s16, 1
      %s205 = scalar_select %p204, %s16, 1
      %s206 = smul.addr %s205, 32
      %s207 = smul.addr %s206, 8
      %s208 = scalar_lea.vmem %s2, %s207
      %p209 = scmp.lt.s32.totalorder %s16, 1
      %s210 = scalar_select %p209, %s16, 1
      %s211 = scalar_lea.vmem %s3, %s210
      %p212 = scmp.lt.s32.totalorder %s16, 1
      %s213 = scalar_select %p212, %s16, 1
      %s214 = scalar_lea.vmem %s4, %s213
      %vm215 = vcmask 31744
      %216 = vst.msk [vmem:[#allocation2] sm:$0xff] %vm215, 0.0
      %217 = vst.msk [vmem:[#allocation2 + $0x8] sm:$0xff] %vm215, 0.0
      %vm218 = vcmask 25600
      %219 = vst.msk [vmem:[#allocation2 + $0x10] sm:$0x3] %vm218, 0.0
      %220 = vst.msk [vmem:[#allocation2 + $0x18] sm:$0xff] %vm215, 0.0
      %221 = vst.msk [vmem:[#allocation2 + $0x20] sm:$0xff] %vm215, 0.0
      %222 = vst.msk [vmem:[#allocation2 + $0x28] sm:$0x3] %vm218, 0.0
      %223 = vst.msk [vmem:[#allocation2 + $0x30] sm:$0xff] %vm215, 0.0
      %224 = vst.msk [vmem:[#allocation2 + $0x38] sm:$0xff] %vm215, 0.0
      %225 = vst.msk [vmem:[#allocation2 + $0x40] sm:$0x3] %vm218, 0.0
      %226 = vst.msk [vmem:[#allocation2 + $0x48] sm:$0xff] %vm215, 0.0
      %227 = vst.msk [vmem:[#allocation2 + $0x50] sm:$0xff] %vm215, 0.0
      %228 = vst.msk [vmem:[#allocation2 + $0x58] sm:$0x3] %vm218, 0.0
      %229 = vst.msk [vmem:[#allocation2 + $0x60] sm:$0xff] %vm215, 0.0
      %230 = vst.msk [vmem:[#allocation2 + $0x68] sm:$0xff] %vm215, 0.0
      %231 = vst.msk [vmem:[#allocation2 + $0x70] sm:$0x3] %vm218, 0.0
      %232 = vst.msk [vmem:[#allocation2 + $0x78] sm:$0xff] %vm215, 0.0
      %233 = vst.msk [vmem:[#allocation2 + $0x80] sm:$0xff] %vm215, 0.0
      %234 = vst.msk [vmem:[#allocation2 + $0x88] sm:$0x3] %vm218, 0.0
      %235 = vst.msk [vmem:[#allocation2 + $0x90] sm:$0xff] %vm215, 0.0
      %236 = vst.msk [vmem:[#allocation2 + $0x98] sm:$0xff] %vm215, 0.0
      %237 = vst.msk [vmem:[#allocation2 + $0xa0] sm:$0x3] %vm218, 0.0
      %238 = vst.msk [vmem:[#allocation2 + $0xa8] sm:$0xff] %vm215, 0.0
      %239 = vst.msk [vmem:[#allocation2 + $0xb0] sm:$0xff] %vm215, 0.0
      %240 = vst.msk [vmem:[#allocation2 + $0xb8] sm:$0x3] %vm218, 0.0
      %241 = vst.msk [vmem:[#allocation2 + $0xc0] sm:$0xff] %vm215, 0.0
      %242 = vst.msk [vmem:[#allocation2 + $0xc8] sm:$0xff] %vm215, 0.0
      %243 = vst.msk [vmem:[#allocation2 + $0xd0] sm:$0x3] %vm218, 0.0
      %244 = vst.msk [vmem:[#allocation2 + $0xd8] sm:$0xff] %vm215, 0.0
      %245 = vst.msk [vmem:[#allocation2 + $0xe0] sm:$0xff] %vm215, 0.0
      %246 = vst.msk [vmem:[#allocation2 + $0xe8] sm:$0x3] %vm218, 0.0
      %247 = vst.msk [vmem:[#allocation2 + $0xf0] sm:$0xff] %vm215, 0.0
      %248 = vst.msk [vmem:[#allocation2 + $0xf8] sm:$0xff] %vm215, 0.0
      %249 = vst.msk [vmem:[#allocation2 + $0x100] sm:$0x3] %vm218, 0.0
      %250 = vst.msk [vmem:[#allocation2 + $0x108] sm:$0xff] %vm215, 0.0
      %251 = vst.msk [vmem:[#allocation2 + $0x110] sm:$0xff] %vm215, 0.0
      %252 = vst.msk [vmem:[#allocation2 + $0x118] sm:$0x3] %vm218, 0.0
      %253 = vst.msk [vmem:[#allocation2 + $0x120] sm:$0xff] %vm215, 0.0
      %254 = vst.msk [vmem:[#allocation2 + $0x128] sm:$0xff] %vm215, 0.0
      %255 = vst.msk [vmem:[#allocation2 + $0x130] sm:$0x3] %vm218, 0.0
      %256 = vst.msk [vmem:[#allocation2 + $0x138] sm:$0xff] %vm215, 0.0
      %257 = vst.msk [vmem:[#allocation2 + $0x140] sm:$0xff] %vm215, 0.0
      %258 = vst.msk [vmem:[#allocation2 + $0x148] sm:$0x3] %vm218, 0.0
      %259 = vst.msk [vmem:[#allocation2 + $0x150] sm:$0xff] %vm215, 0.0
      %260 = vst.msk [vmem:[#allocation2 + $0x158] sm:$0xff] %vm215, 0.0
      %261 = vst.msk [vmem:[#allocation2 + $0x160] sm:$0x3] %vm218, 0.0
      %262 = vst.msk [vmem:[#allocation2 + $0x168] sm:$0xff] %vm215, 0.0
      %263 = vst.msk [vmem:[#allocation2 + $0x170] sm:$0xff] %vm215, 0.0
      %264 = vst.msk [vmem:[#allocation2 + $0x178] sm:$0x3] %vm218, 0.0
      %265 = vst.msk [vmem:[#allocation2 + $0x180] sm:$0xff] %vm215, 0.0
      %266 = vst.msk [vmem:[#allocation2 + $0x188] sm:$0xff] %vm215, 0.0
      %267 = vst.msk [vmem:[#allocation2 + $0x190] sm:$0x3] %vm218, 0.0
      %268 = vst.msk [vmem:[#allocation2 + $0x198] sm:$0xff] %vm215, 0.0
      %269 = vst.msk [vmem:[#allocation2 + $0x1a0] sm:$0xff] %vm215, 0.0
      %270 = vst.msk [vmem:[#allocation2 + $0x1a8] sm:$0x3] %vm218, 0.0
      %v271 = vld [vmem:[%s203] sm:$0xff]
      %v272 = vld [vmem:[%s203 + $0x8] sm:$0xff]
      %v273 = vld [vmem:[%s203 + $0x10] sm:$0xff]
      %v274 = vld [vmem:[%s203 + $0x18] sm:$0xff]
      %v275 = vld [vmem:[%s203 + $0x20] sm:$0xff]
      %v276 = vld [vmem:[%s203 + $0x28] sm:$0xff]
      %v277 = vld [vmem:[%s203 + $0x30] sm:$0xff]
      %v278 = vld [vmem:[%s203 + $0x38] sm:$0xff]
      %v279 = vld [vmem:[%s203 + $0x40] sm:$0xff]
      %v280 = vld [vmem:[%s203 + $0x48] sm:$0xff]
      %v281 = vld [vmem:[%s203 + $0x50] sm:$0xff]
      %v282 = vld [vmem:[%s203 + $0x58] sm:$0xff]
      %v283 = vld [vmem:[%s203 + $0x60] sm:$0xff]
      %v284 = vld [vmem:[%s203 + $0x68] sm:$0xff]
      %v285 = vld [vmem:[%s203 + $0x70] sm:$0xff]
      %v286 = vld [vmem:[%s203 + $0x78] sm:$0xff]
      %v287 = vld [vmem:[%s203 + $0x80] sm:$0xff]
      %v288 = vld [vmem:[%s203 + $0x88] sm:$0xff]
      %v289 = vld [vmem:[%s203 + $0x90] sm:$0xff]
      %v290 = vld [vmem:[%s203 + $0x98] sm:$0xff]
      %v291 = vld [vmem:[%s203 + $0xa0] sm:$0xff]
      %v292 = vld [vmem:[%s203 + $0xa8] sm:$0xff]
      %v293 = vld [vmem:[%s203 + $0xb0] sm:$0xff]
      %v294 = vld [vmem:[%s203 + $0xb8] sm:$0xff]
      %v295 = vld [vmem:[%s203 + $0xc0] sm:$0xff]
      %v296 = vld [vmem:[%s203 + $0xc8] sm:$0xff]
      %v297 = vld [vmem:[%s203 + $0xd0] sm:$0xff]
      %v298 = vld [vmem:[%s203 + $0xd8] sm:$0xff]
      %v299 = vld [vmem:[%s203 + $0xe0] sm:$0xff]
      %v300 = vld [vmem:[%s203 + $0xe8] sm:$0xff]
      %v301 = vld [vmem:[%s203 + $0xf0] sm:$0xff]
      %v302 = vld [vmem:[%s203 + $0xf8] sm:$0xff]
      %s303 = scalar_lea.vmem [#allocation2], 24
      %304 = vst.msk [vmem:[%s303 + $0x1] sm:$0xff] %vm215, %v271
      %305 = vst.msk [vmem:[%s303 + $0x9] sm:$0xff] %vm215, %v272
      %306 = vst.msk [vmem:[%s303 + $0x19] sm:$0xff] %vm215, %v273
      %307 = vst.msk [vmem:[%s303 + $0x21] sm:$0xff] %vm215, %v274
      %308 = vst.msk [vmem:[%s303 + $0x31] sm:$0xff] %vm215, %v275
      %309 = vst.msk [vmem:[%s303 + $0x39] sm:$0xff] %vm215, %v276
      %310 = vst.msk [vmem:[%s303 + $0x49] sm:$0xff] %vm215, %v277
      %311 = vst.msk [vmem:[%s303 + $0x51] sm:$0xff] %vm215, %v278
      %312 = vst.msk [vmem:[%s303 + $0x61] sm:$0xff] %vm215, %v279
      %313 = vst.msk [vmem:[%s303 + $0x69] sm:$0xff] %vm215, %v280
      %314 = vst.msk [vmem:[%s303 + $0x79] sm:$0xff] %vm215, %v281
      %315 = vst.msk [vmem:[%s303 + $0x81] sm:$0xff] %vm215, %v282
      %316 = vst.msk [vmem:[%s303 + $0x91] sm:$0xff] %vm215, %v283
      %317 = vst.msk [vmem:[%s303 + $0x99] sm:$0xff] %vm215, %v284
      %318 = vst.msk [vmem:[%s303 + $0xa9] sm:$0xff] %vm215, %v285
      %319 = vst.msk [vmem:[%s303 + $0xb1] sm:$0xff] %vm215, %v286
      %320 = vst.msk [vmem:[%s303 + $0xc1] sm:$0xff] %vm215, %v287
      %321 = vst.msk [vmem:[%s303 + $0xc9] sm:$0xff] %vm215, %v288
      %322 = vst.msk [vmem:[%s303 + $0xd9] sm:$0xff] %vm215, %v289
      %323 = vst.msk [vmem:[%s303 + $0xe1] sm:$0xff] %vm215, %v290
      %324 = vst.msk [vmem:[%s303 + $0xf1] sm:$0xff] %vm215, %v291
      %325 = vst.msk [vmem:[%s303 + $0xf9] sm:$0xff] %vm215, %v292
      %326 = vst.msk [vmem:[%s303 + $0x109] sm:$0xff] %vm215, %v293
      %327 = vst.msk [vmem:[%s303 + $0x111] sm:$0xff] %vm215, %v294
      %328 = vst.msk [vmem:[%s303 + $0x121] sm:$0xff] %vm215, %v295
      %329 = vst.msk [vmem:[%s303 + $0x129] sm:$0xff] %vm215, %v296
      %330 = vst.msk [vmem:[%s303 + $0x139] sm:$0xff] %vm215, %v297
      %331 = vst.msk [vmem:[%s303 + $0x141] sm:$0xff] %vm215, %v298
      %332 = vst.msk [vmem:[%s303 + $0x151] sm:$0xff] %vm215, %v299
      %333 = vst.msk [vmem:[%s303 + $0x159] sm:$0xff] %vm215, %v300
      %334 = vst.msk [vmem:[%s303 + $0x169] sm:$0xff] %vm215, %v301
      %335 = vst.msk [vmem:[%s303 + $0x171] sm:$0xff] %vm215, %v302
      %v336 = vld [vmem:[#allocation2] sm:$0xff]
      %v337 = vld [vmem:[#allocation2 + $0x8] sm:$0xff]
      %v338 = vld [vmem:[#allocation2 + $0x18] sm:$0xff]
      %v339 = vld [vmem:[#allocation2 + $0x20] sm:$0xff]
      %v340 = vld [vmem:[#allocation2 + $0x30] sm:$0xff]
      %v341 = vld [vmem:[#allocation2 + $0x38] sm:$0xff]
      %v342 = vld [vmem:[#allocation2 + $0x48] sm:$0xff]
      %v343 = vld [vmem:[#allocation2 + $0x50] sm:$0xff]
      %v344 = vld [vmem:[#allocation2 + $0x60] sm:$0xff]
      %v345 = vld [vmem:[#allocation2 + $0x68] sm:$0xff]
      %v346 = vld [vmem:[#allocation2 + $0x78] sm:$0xff]
      %v347 = vld [vmem:[#allocation2 + $0x80] sm:$0xff]
      %v348 = vld [vmem:[#allocation2 + $0x90] sm:$0xff]
      %v349 = vld [vmem:[#allocation2 + $0x98] sm:$0xff]
      %v350 = vld [vmem:[#allocation2 + $0xa8] sm:$0xff]
      %v351 = vld [vmem:[#allocation2 + $0xb0] sm:$0xff]
      %v352 = vld [vmem:[#allocation2 + $0xc0] sm:$0xff]
      %v353 = vld [vmem:[#allocation2 + $0xc8] sm:$0xff]
      %v354 = vld [vmem:[#allocation2 + $0xd8] sm:$0xff]
      %v355 = vld [vmem:[#allocation2 + $0xe0] sm:$0xff]
      %v356 = vld [vmem:[#allocation2 + $0xf0] sm:$0xff]
      %v357 = vld [vmem:[#allocation2 + $0xf8] sm:$0xff]
      %v358 = vld [vmem:[#allocation2 + $0x108] sm:$0xff]
      %v359 = vld [vmem:[#allocation2 + $0x110] sm:$0xff]
      %v360 = vld [vmem:[#allocation2 + $0x120] sm:$0xff]
      %v361 = vld [vmem:[#allocation2 + $0x128] sm:$0xff]
      %v362 = vld [vmem:[#allocation2 + $0x138] sm:$0xff]
      %v363 = vld [vmem:[#allocation2 + $0x140] sm:$0xff]
      %v364 = vld [vmem:[#allocation2 + $0x150] sm:$0xff]
      %v365 = vld [vmem:[#allocation2 + $0x158] sm:$0xff]
      %v366 = vld [vmem:[#allocation2 + $0x168] sm:$0xff]
      %v367 = vld [vmem:[#allocation2 + $0x170] sm:$0xff]
      %v368 = vld [vmem:[#allocation2 + $0x180] sm:$0xff]
      %v369 = vld [vmem:[#allocation2 + $0x188] sm:$0xff]
      %v370 = vld [vmem:[#allocation2 + $0x198] sm:$0xff]
      %v371 = vld [vmem:[#allocation2 + $0x1a0] sm:$0xff]
      %404 = vrot.lane.b32.xlu0 %v338, 4
      %v405 = vpop.permute.xlu0 %404
      %406 = vrot.lane.b32.xlu0 %v339, 4
      %v407 = vpop.permute.xlu0 %406
      %408 = vrot.lane.b32.xlu0 %v340, 4
      %v409 = vpop.permute.xlu0 %408
      %410 = vrot.lane.b32.xlu0 %v341, 4
      %v411 = vpop.permute.xlu0 %410
      %412 = vrot.lane.b32.xlu0 %v342, 4
      %v413 = vpop.permute.xlu0 %412
      %414 = vrot.lane.b32.xlu0 %v343, 4
      %v415 = vpop.permute.xlu0 %414
      %416 = vrot.lane.b32.xlu0 %v344, 4
      %v417 = vpop.permute.xlu0 %416
      %418 = vrot.lane.b32.xlu0 %v345, 4
      %v419 = vpop.permute.xlu0 %418
      %420 = vrot.lane.b32.xlu0 %v346, 4
      %v421 = vpop.permute.xlu0 %420
      %422 = vrot.lane.b32.xlu0 %v347, 4
      %v423 = vpop.permute.xlu0 %422
      %424 = vrot.lane.b32.xlu0 %v348, 4
      %v425 = vpop.permute.xlu0 %424
      %426 = vrot.lane.b32.xlu0 %v349, 4
      %v427 = vpop.permute.xlu0 %426
      %428 = vrot.lane.b32.xlu0 %v350, 4
      %v429 = vpop.permute.xlu0 %428
      %430 = vrot.lane.b32.xlu0 %v351, 4
      %v431 = vpop.permute.xlu0 %430
      %432 = vrot.lane.b32.xlu0 %v352, 4
      %v433 = vpop.permute.xlu0 %432
      %434 = vrot.lane.b32.xlu0 %v353, 4
      %v435 = vpop.permute.xlu0 %434
      %436 = vrot.lane.b32.xlu0 %v354, 4
      %v437 = vpop.permute.xlu0 %436
      %438 = vrot.lane.b32.xlu0 %v355, 4
      %v439 = vpop.permute.xlu0 %438
      %440 = vrot.lane.b32.xlu0 %v356, 4
      %v441 = vpop.permute.xlu0 %440
      %442 = vrot.lane.b32.xlu0 %v357, 4
      %v443 = vpop.permute.xlu0 %442
      %444 = vrot.lane.b32.xlu0 %v358, 4
      %v445 = vpop.permute.xlu0 %444
      %446 = vrot.lane.b32.xlu0 %v359, 4
      %v447 = vpop.permute.xlu0 %446
      %448 = vrot.lane.b32.xlu0 %v360, 4
      %v449 = vpop.permute.xlu0 %448
      %450 = vrot.lane.b32.xlu0 %v361, 4
      %v451 = vpop.permute.xlu0 %450
      %452 = vrot.lane.b32.xlu0 %v362, 4
      %v453 = vpop.permute.xlu0 %452
      %454 = vrot.lane.b32.xlu0 %v363, 4
      %v455 = vpop.permute.xlu0 %454
      %456 = vrot.lane.b32.xlu0 %v364, 4
      %v457 = vpop.permute.xlu0 %456
      %458 = vrot.lane.b32.xlu0 %v365, 4
      %v459 = vpop.permute.xlu0 %458
      %460 = vrot.lane.b32.xlu0 %v366, 4
      %v461 = vpop.permute.xlu0 %460
      %462 = vrot.lane.b32.xlu0 %v367, 4
      %v463 = vpop.permute.xlu0 %462
      %464 = vrot.lane.b32.xlu0 %v368, 4
      %v465 = vpop.permute.xlu0 %464
      %466 = vrot.lane.b32.xlu0 %v369, 4
      %v467 = vpop.permute.xlu0 %466
      %502 = vrot.lane.b32.xlu0 %v340, 8
      %v503 = vpop.permute.xlu0 %502
      %504 = vrot.lane.b32.xlu0 %v341, 8
      %v505 = vpop.permute.xlu0 %504
      %506 = vrot.lane.b32.xlu0 %v342, 8
      %v507 = vpop.permute.xlu0 %506
      %508 = vrot.lane.b32.xlu0 %v343, 8
      %v509 = vpop.permute.xlu0 %508
      %510 = vrot.lane.b32.xlu0 %v344, 8
      %v511 = vpop.permute.xlu0 %510
      %512 = vrot.lane.b32.xlu0 %v345, 8
      %v513 = vpop.permute.xlu0 %512
      %514 = vrot.lane.b32.xlu0 %v346, 8
      %v515 = vpop.permute.xlu0 %514
      %516 = vrot.lane.b32.xlu0 %v347, 8
      %v517 = vpop.permute.xlu0 %516
      %518 = vrot.lane.b32.xlu0 %v348, 8
      %v519 = vpop.permute.xlu0 %518
      %520 = vrot.lane.b32.xlu0 %v349, 8
      %v521 = vpop.permute.xlu0 %520
      %522 = vrot.lane.b32.xlu0 %v350, 8
      %v523 = vpop.permute.xlu0 %522
      %524 = vrot.lane.b32.xlu0 %v351, 8
      %v525 = vpop.permute.xlu0 %524
      %526 = vrot.lane.b32.xlu0 %v352, 8
      %v527 = vpop.permute.xlu0 %526
      %528 = vrot.lane.b32.xlu0 %v353, 8
      %v529 = vpop.permute.xlu0 %528
      %530 = vrot.lane.b32.xlu0 %v354, 8
      %v531 = vpop.permute.xlu0 %530
      %532 = vrot.lane.b32.xlu0 %v355, 8
      %v533 = vpop.permute.xlu0 %532
      %534 = vrot.lane.b32.xlu0 %v356, 8
      %v535 = vpop.permute.xlu0 %534
      %536 = vrot.lane.b32.xlu0 %v357, 8
      %v537 = vpop.permute.xlu0 %536
      %538 = vrot.lane.b32.xlu0 %v358, 8
      %v539 = vpop.permute.xlu0 %538
      %540 = vrot.lane.b32.xlu0 %v359, 8
      %v541 = vpop.permute.xlu0 %540
      %542 = vrot.lane.b32.xlu0 %v360, 8
      %v543 = vpop.permute.xlu0 %542
      %544 = vrot.lane.b32.xlu0 %v361, 8
      %v545 = vpop.permute.xlu0 %544
      %546 = vrot.lane.b32.xlu0 %v362, 8
      %v547 = vpop.permute.xlu0 %546
      %548 = vrot.lane.b32.xlu0 %v363, 8
      %v549 = vpop.permute.xlu0 %548
      %550 = vrot.lane.b32.xlu0 %v364, 8
      %v551 = vpop.permute.xlu0 %550
      %552 = vrot.lane.b32.xlu0 %v365, 8
      %v553 = vpop.permute.xlu0 %552
      %554 = vrot.lane.b32.xlu0 %v366, 8
      %v555 = vpop.permute.xlu0 %554
      %556 = vrot.lane.b32.xlu0 %v367, 8
      %v557 = vpop.permute.xlu0 %556
      %558 = vrot.lane.b32.xlu0 %v368, 8
      %v559 = vpop.permute.xlu0 %558
      %560 = vrot.lane.b32.xlu0 %v369, 8
      %v561 = vpop.permute.xlu0 %560
      %562 = vrot.lane.b32.xlu0 %v370, 8
      %v563 = vpop.permute.xlu0 %562
      %564 = vrot.lane.b32.xlu0 %v371, 8
      %v565 = vpop.permute.xlu0 %564
      %v598 = vsel %vm215, %v336, %v405
      %v599 = vsel %vm215, %v337, %v407
      %v600 = vsel %vm215, %v338, %v409
      %v601 = vsel %vm215, %v339, %v411
      %v602 = vsel %vm215, %v340, %v413
      %v603 = vsel %vm215, %v341, %v415
      %v604 = vsel %vm215, %v342, %v417
      %v605 = vsel %vm215, %v343, %v419
      %v606 = vsel %vm215, %v344, %v421
      %v607 = vsel %vm215, %v345, %v423
      %v608 = vsel %vm215, %v346, %v425
      %v609 = vsel %vm215, %v347, %v427
      %v610 = vsel %vm215, %v348, %v429
      %v611 = vsel %vm215, %v349, %v431
      %v612 = vsel %vm215, %v350, %v433
      %v613 = vsel %vm215, %v351, %v435
      %v614 = vsel %vm215, %v352, %v437
      %v615 = vsel %vm215, %v353, %v439
      %v616 = vsel %vm215, %v354, %v441
      %v617 = vsel %vm215, %v355, %v443
      %v618 = vsel %vm215, %v356, %v445
      %v619 = vsel %vm215, %v357, %v447
      %v620 = vsel %vm215, %v358, %v449
      %v621 = vsel %vm215, %v359, %v451
      %v622 = vsel %vm215, %v360, %v453
      %v623 = vsel %vm215, %v361, %v455
      %v624 = vsel %vm215, %v362, %v457
      %v625 = vsel %vm215, %v363, %v459
      %v626 = vsel %vm215, %v364, %v461
      %v627 = vsel %vm215, %v365, %v463
      %v628 = vsel %vm215, %v366, %v465
      %v629 = vsel %vm215, %v367, %v467
      %vm630 = vcmask 64512
      %v631 = vsel %vm630, %v598, %v503
      %v632 = vsel %vm630, %v599, %v505
      %v633 = vsel %vm630, %v600, %v507
      %v634 = vsel %vm630, %v601, %v509
      %v635 = vsel %vm630, %v602, %v511
      %v636 = vsel %vm630, %v603, %v513
      %v637 = vsel %vm630, %v604, %v515
      %v638 = vsel %vm630, %v605, %v517
      %v639 = vsel %vm630, %v606, %v519
      %v640 = vsel %vm630, %v607, %v521
      %v641 = vsel %vm630, %v608, %v523
      %v642 = vsel %vm630, %v609, %v525
      %v643 = vsel %vm630, %v610, %v527
      %v644 = vsel %vm630, %v611, %v529
      %v645 = vsel %vm630, %v612, %v531
      %v646 = vsel %vm630, %v613, %v533
      %v647 = vsel %vm630, %v614, %v535
      %v648 = vsel %vm630, %v615, %v537
      %v649 = vsel %vm630, %v616, %v539
      %v650 = vsel %vm630, %v617, %v541
      %v651 = vsel %vm630, %v618, %v543
      %v652 = vsel %vm630, %v619, %v545
      %v653 = vsel %vm630, %v620, %v547
      %v654 = vsel %vm630, %v621, %v549
      %v655 = vsel %vm630, %v622, %v551
      %v656 = vsel %vm630, %v623, %v553
      %v657 = vsel %vm630, %v624, %v555
      %v658 = vsel %vm630, %v625, %v557
      %v659 = vsel %vm630, %v626, %v559
      %v660 = vsel %vm630, %v627, %v561
      %v661 = vsel %vm630, %v628, %v563
      %v662 = vsel %vm630, %v629, %v565
      %v663 = vld [vmem:[%s1] sm:$0xff]
      %v664 = vld [vmem:[%s1 + $0x8] sm:$0xf]
      %v665 = vld [vmem:[#allocation2 + $0x1] sm:$0xff]
      %v666 = vld [vmem:[#allocation2 + $0x9] sm:$0xff]
      %v667 = vld [vmem:[#allocation2 + $0x19] sm:$0xff]
      %v668 = vld [vmem:[#allocation2 + $0x21] sm:$0xff]
      %v669 = vld [vmem:[#allocation2 + $0x31] sm:$0xff]
      %v670 = vld [vmem:[#allocation2 + $0x39] sm:$0xff]
      %v671 = vld [vmem:[#allocation2 + $0x49] sm:$0xff]
      %v672 = vld [vmem:[#allocation2 + $0x51] sm:$0xff]
      %v673 = vld [vmem:[#allocation2 + $0x61] sm:$0xff]
      %v674 = vld [vmem:[#allocation2 + $0x69] sm:$0xff]
      %v675 = vld [vmem:[#allocation2 + $0x79] sm:$0xff]
      %v676 = vld [vmem:[#allocation2 + $0x81] sm:$0xff]
      %v677 = vld [vmem:[#allocation2 + $0x91] sm:$0xff]
      %v678 = vld [vmem:[#allocation2 + $0x99] sm:$0xff]
      %v679 = vld [vmem:[#allocation2 + $0xa9] sm:$0xff]
      %v680 = vld [vmem:[#allocation2 + $0xb1] sm:$0xff]
      %v681 = vld [vmem:[#allocation2 + $0xc1] sm:$0xff]
      %v682 = vld [vmem:[#allocation2 + $0xc9] sm:$0xff]
      %v683 = vld [vmem:[#allocation2 + $0xd9] sm:$0xff]
      %v684 = vld [vmem:[#allocation2 + $0xe1] sm:$0xff]
      %v685 = vld [vmem:[#allocation2 + $0xf1] sm:$0xff]
      %v686 = vld [vmem:[#allocation2 + $0xf9] sm:$0xff]
      %v687 = vld [vmem:[#allocation2 + $0x109] sm:$0xff]
      %v688 = vld [vmem:[#allocation2 + $0x111] sm:$0xff]
      %v689 = vld [vmem:[#allocation2 + $0x121] sm:$0xff]
      %v690 = vld [vmem:[#allocation2 + $0x129] sm:$0xff]
      %v691 = vld [vmem:[#allocation2 + $0x139] sm:$0xff]
      %v692 = vld [vmem:[#allocation2 + $0x141] sm:$0xff]
      %v693 = vld [vmem:[#allocation2 + $0x151] sm:$0xff]
      %v694 = vld [vmem:[#allocation2 + $0x159] sm:$0xff]
      %v695 = vld [vmem:[#allocation2 + $0x169] sm:$0xff]
      %v696 = vld [vmem:[#allocation2 + $0x171] sm:$0xff]
      %v697 = vld [vmem:[#allocation2 + $0x181] sm:$0xff]
      %v698 = vld [vmem:[#allocation2 + $0x189] sm:$0xff]
      %v699 = vld [vmem:[#allocation2 + $0x199] sm:$0xff]
      %v700 = vld [vmem:[#allocation2 + $0x1a1] sm:$0xff]
      %733 = vrot.lane.b32.xlu0 %v667, 4
      %v734 = vpop.permute.xlu0 %733
      %735 = vrot.lane.b32.xlu0 %v668, 4
      %v736 = vpop.permute.xlu0 %735
      %737 = vrot.lane.b32.xlu0 %v669, 4
      %v738 = vpop.permute.xlu0 %737
      %739 = vrot.lane.b32.xlu0 %v670, 4
      %v740 = vpop.permute.xlu0 %739
      %741 = vrot.lane.b32.xlu0 %v671, 4
      %v742 = vpop.permute.xlu0 %741
      %743 = vrot.lane.b32.xlu0 %v672, 4
      %v744 = vpop.permute.xlu0 %743
      %745 = vrot.lane.b32.xlu0 %v673, 4
      %v746 = vpop.permute.xlu0 %745
      %747 = vrot.lane.b32.xlu0 %v674, 4
      %v748 = vpop.permute.xlu0 %747
      %749 = vrot.lane.b32.xlu0 %v675, 4
      %v750 = vpop.permute.xlu0 %749
      %751 = vrot.lane.b32.xlu0 %v676, 4
      %v752 = vpop.permute.xlu0 %751
      %753 = vrot.lane.b32.xlu0 %v677, 4
      %v754 = vpop.permute.xlu0 %753
      %755 = vrot.lane.b32.xlu0 %v678, 4
      %v756 = vpop.permute.xlu0 %755
      %757 = vrot.lane.b32.xlu0 %v679, 4
      %v758 = vpop.permute.xlu0 %757
      %759 = vrot.lane.b32.xlu0 %v680, 4
      %v760 = vpop.permute.xlu0 %759
      %761 = vrot.lane.b32.xlu0 %v681, 4
      %v762 = vpop.permute.xlu0 %761
      %763 = vrot.lane.b32.xlu0 %v682, 4
      %v764 = vpop.permute.xlu0 %763
      %765 = vrot.lane.b32.xlu0 %v683, 4
      %v766 = vpop.permute.xlu0 %765
      %767 = vrot.lane.b32.xlu0 %v684, 4
      %v768 = vpop.permute.xlu0 %767
      %769 = vrot.lane.b32.xlu0 %v685, 4
      %v770 = vpop.permute.xlu0 %769
      %771 = vrot.lane.b32.xlu0 %v686, 4
      %v772 = vpop.permute.xlu0 %771
      %773 = vrot.lane.b32.xlu0 %v687, 4
      %v774 = vpop.permute.xlu0 %773
      %775 = vrot.lane.b32.xlu0 %v688, 4
      %v776 = vpop.permute.xlu0 %775
      %777 = vrot.lane.b32.xlu0 %v689, 4
      %v778 = vpop.permute.xlu0 %777
      %779 = vrot.lane.b32.xlu0 %v690, 4
      %v780 = vpop.permute.xlu0 %779
      %781 = vrot.lane.b32.xlu0 %v691, 4
      %v782 = vpop.permute.xlu0 %781
      %783 = vrot.lane.b32.xlu0 %v692, 4
      %v784 = vpop.permute.xlu0 %783
      %785 = vrot.lane.b32.xlu0 %v693, 4
      %v786 = vpop.permute.xlu0 %785
      %787 = vrot.lane.b32.xlu0 %v694, 4
      %v788 = vpop.permute.xlu0 %787
      %789 = vrot.lane.b32.xlu0 %v695, 4
      %v790 = vpop.permute.xlu0 %789
      %791 = vrot.lane.b32.xlu0 %v696, 4
      %v792 = vpop.permute.xlu0 %791
      %793 = vrot.lane.b32.xlu0 %v697, 4
      %v794 = vpop.permute.xlu0 %793
      %795 = vrot.lane.b32.xlu0 %v698, 4
      %v796 = vpop.permute.xlu0 %795
      %831 = vrot.lane.b32.xlu0 %v669, 8
      %v832 = vpop.permute.xlu0 %831
      %833 = vrot.lane.b32.xlu0 %v670, 8
      %v834 = vpop.permute.xlu0 %833
      %835 = vrot.lane.b32.xlu0 %v671, 8
      %v836 = vpop.permute.xlu0 %835
      %837 = vrot.lane.b32.xlu0 %v672, 8
      %v838 = vpop.permute.xlu0 %837
      %839 = vrot.lane.b32.xlu0 %v673, 8
      %v840 = vpop.permute.xlu0 %839
      %841 = vrot.lane.b32.xlu0 %v674, 8
      %v842 = vpop.permute.xlu0 %841
      %843 = vrot.lane.b32.xlu0 %v675, 8
      %v844 = vpop.permute.xlu0 %843
      %845 = vrot.lane.b32.xlu0 %v676, 8
      %v846 = vpop.permute.xlu0 %845
      %847 = vrot.lane.b32.xlu0 %v677, 8
      %v848 = vpop.permute.xlu0 %847
      %849 = vrot.lane.b32.xlu0 %v678, 8
      %v850 = vpop.permute.xlu0 %849
      %851 = vrot.lane.b32.xlu0 %v679, 8
      %v852 = vpop.permute.xlu0 %851
      %853 = vrot.lane.b32.xlu0 %v680, 8
      %v854 = vpop.permute.xlu0 %853
      %855 = vrot.lane.b32.xlu0 %v681, 8
      %v856 = vpop.permute.xlu0 %855
      %857 = vrot.lane.b32.xlu0 %v682, 8
      %v858 = vpop.permute.xlu0 %857
      %859 = vrot.lane.b32.xlu0 %v683, 8
      %v860 = vpop.permute.xlu0 %859
      %861 = vrot.lane.b32.xlu0 %v684, 8
      %v862 = vpop.permute.xlu0 %861
      %863 = vrot.lane.b32.xlu0 %v685, 8
      %v864 = vpop.permute.xlu0 %863
      %865 = vrot.lane.b32.xlu0 %v686, 8
      %v866 = vpop.permute.xlu0 %865
      %867 = vrot.lane.b32.xlu0 %v687, 8
      %v868 = vpop.permute.xlu0 %867
      %869 = vrot.lane.b32.xlu0 %v688, 8
      %v870 = vpop.permute.xlu0 %869
      %871 = vrot.lane.b32.xlu0 %v689, 8
      %v872 = vpop.permute.xlu0 %871
      %873 = vrot.lane.b32.xlu0 %v690, 8
      %v874 = vpop.permute.xlu0 %873
      %875 = vrot.lane.b32.xlu0 %v691, 8
      %v876 = vpop.permute.xlu0 %875
      %877 = vrot.lane.b32.xlu0 %v692, 8
      %v878 = vpop.permute.xlu0 %877
      %879 = vrot.lane.b32.xlu0 %v693, 8
      %v880 = vpop.permute.xlu0 %879
      %881 = vrot.lane.b32.xlu0 %v694, 8
      %v882 = vpop.permute.xlu0 %881
      %883 = vrot.lane.b32.xlu0 %v695, 8
      %v884 = vpop.permute.xlu0 %883
      %885 = vrot.lane.b32.xlu0 %v696, 8
      %v886 = vpop.permute.xlu0 %885
      %887 = vrot.lane.b32.xlu0 %v697, 8
      %v888 = vpop.permute.xlu0 %887
      %889 = vrot.lane.b32.xlu0 %v698, 8
      %v890 = vpop.permute.xlu0 %889
      %891 = vrot.lane.b32.xlu0 %v699, 8
      %v892 = vpop.permute.xlu0 %891
      %893 = vrot.lane.b32.xlu0 %v700, 8
      %v894 = vpop.permute.xlu0 %893
      %v927 = vsel %vm215, %v665, %v734
      %v928 = vsel %vm215, %v666, %v736
      %v929 = vsel %vm215, %v667, %v738
      %v930 = vsel %vm215, %v668, %v740
      %v931 = vsel %vm215, %v669, %v742
      %v932 = vsel %vm215, %v670, %v744
      %v933 = vsel %vm215, %v671, %v746
      %v934 = vsel %vm215, %v672, %v748
      %v935 = vsel %vm215, %v673, %v750
      %v936 = vsel %vm215, %v674, %v752
      %v937 = vsel %vm215, %v675, %v754
      %v938 = vsel %vm215, %v676, %v756
      %v939 = vsel %vm215, %v677, %v758
      %v940 = vsel %vm215, %v678, %v760
      %v941 = vsel %vm215, %v679, %v762
      %v942 = vsel %vm215, %v680, %v764
      %v943 = vsel %vm215, %v681, %v766
      %v944 = vsel %vm215, %v682, %v768
      %v945 = vsel %vm215, %v683, %v770
      %v946 = vsel %vm215, %v684, %v772
      %v947 = vsel %vm215, %v685, %v774
      %v948 = vsel %vm215, %v686, %v776
      %v949 = vsel %vm215, %v687, %v778
      %v950 = vsel %vm215, %v688, %v780
      %v951 = vsel %vm215, %v689, %v782
      %v952 = vsel %vm215, %v690, %v784
      %v953 = vsel %vm215, %v691, %v786
      %v954 = vsel %vm215, %v692, %v788
      %v955 = vsel %vm215, %v693, %v790
      %v956 = vsel %vm215, %v694, %v792
      %v957 = vsel %vm215, %v695, %v794
      %v958 = vsel %vm215, %v696, %v796
      %v959 = vsel %vm630, %v927, %v832
      %v960 = vsel %vm630, %v928, %v834
      %v961 = vsel %vm630, %v929, %v836
      %v962 = vsel %vm630, %v930, %v838
      %v963 = vsel %vm630, %v931, %v840
      %v964 = vsel %vm630, %v932, %v842
      %v965 = vsel %vm630, %v933, %v844
      %v966 = vsel %vm630, %v934, %v846
      %v967 = vsel %vm630, %v935, %v848
      %v968 = vsel %vm630, %v936, %v850
      %v969 = vsel %vm630, %v937, %v852
      %v970 = vsel %vm630, %v938, %v854
      %v971 = vsel %vm630, %v939, %v856
      %v972 = vsel %vm630, %v940, %v858
      %v973 = vsel %vm630, %v941, %v860
      %v974 = vsel %vm630, %v942, %v862
      %v975 = vsel %vm630, %v943, %v864
      %v976 = vsel %vm630, %v944, %v866
      %v977 = vsel %vm630, %v945, %v868
      %v978 = vsel %vm630, %v946, %v870
      %v979 = vsel %vm630, %v947, %v872
      %v980 = vsel %vm630, %v948, %v874
      %v981 = vsel %vm630, %v949, %v876
      %v982 = vsel %vm630, %v950, %v878
      %v983 = vsel %vm630, %v951, %v880
      %v984 = vsel %vm630, %v952, %v882
      %v985 = vsel %vm630, %v953, %v884
      %v986 = vsel %vm630, %v954, %v886
      %v987 = vsel %vm630, %v955, %v888
      %v988 = vsel %vm630, %v956, %v890
      %v989 = vsel %vm630, %v957, %v892
      %v990 = vsel %vm630, %v958, %v894
      %s991 = scalar_lea.vmem %s1, 16
      %v992 = vld [vmem:[%s991] sm:$0xff]
      %v993 = vld [vmem:[%s991 + $0x8] sm:$0xf]
      %vm994 = vcmask 97280
      %v996 = vsel %vm994, %v959, 0
      %v999 = vsel %vm994, %v960, 0
      %v1002 = vsel %vm994, %v961, 0
      %v1005 = vsel %vm994, %v962, 0
      %v1008 = vsel %vm994, %v963, 0
      %v1011 = vsel %vm994, %v964, 0
      %v1014 = vsel %vm994, %v965, 0
      %v1017 = vsel %vm994, %v966, 0
      %v1020 = vsel %vm994, %v967, 0
      %v1023 = vsel %vm994, %v968, 0
      %v1026 = vsel %vm994, %v969, 0
      %v1029 = vsel %vm994, %v970, 0
      %v1032 = vsel %vm994, %v971, 0
      %v1035 = vsel %vm994, %v972, 0
      %v1038 = vsel %vm994, %v973, 0
      %v1041 = vsel %vm994, %v974, 0
      %v1044 = vsel %vm994, %v975, 0
      %v1047 = vsel %vm994, %v976, 0
      %v1050 = vsel %vm994, %v977, 0
      %v1053 = vsel %vm994, %v978, 0
      %v1056 = vsel %vm994, %v979, 0
      %v1059 = vsel %vm994, %v980, 0
      %v1062 = vsel %vm994, %v981, 0
      %v1065 = vsel %vm994, %v982, 0
      %v1068 = vsel %vm994, %v983, 0
      %v1071 = vsel %vm994, %v984, 0
      %v1074 = vsel %vm994, %v985, 0
      %v1077 = vsel %vm994, %v986, 0
      %v1080 = vsel %vm994, %v987, 0
      %v1083 = vsel %vm994, %v988, 0
      %v1086 = vsel %vm994, %v989, 0
      %v1089 = vsel %vm994, %v990, 0
      %vm1091 = vcmask 1043456
      %v1093 = vsel %vm1091, %v993, 0
      %1095 = vmatprep.subr.mxu0 0.0
      %1096 = vmatpush1.msra.mxu0 0.0
      %1097 = vmatprep.subr.mxu0 0.0
      %1098 = vmatpush1.msra.mxu0 0.0
      %1099 = vmatprep.subr.mxu0 0.0
      %1100 = vmatpush1.msra.mxu0 0.0
      %1101 = vmatprep.subr.mxu0 0.0
      %1102 = vmatpush1.msra.mxu0 0.0
      %1103 = vmatprep.subr.mxu0 0.0
      %1104 = vmatpush1.msra.mxu0 0.0
      %1105 = vmatprep.subr.mxu0 0.0
      %1106 = vmatpush1.msra.mxu0 0.0
      %1107 = vmatprep.subr.mxu0 0.0
      %1108 = vmatpush1.msra.mxu0 0.0
      %1109 = vmatprep.subr.mxu0 0.0
      %1110 = vmatpush1.msra.mxu0 0.0
      %1111 = vmatprep.subr.mxu0 0.0
      %1112 = vmatpush1.msra.mxu0 0.0
      %1113 = vmatprep.subr.mxu0 0.0
      %1114 = vmatpush1.msra.mxu0 0.0
      %1115 = vmatprep.subr.mxu0 0.0
      %1116 = vmatpush1.msra.mxu0 0.0
      %1117 = vmatprep.subr.mxu0 0.0
      %1118 = vmatpush1.msra.mxu0 0.0
      %1119 = vmatprep.subr.mxu0 0.0
      %1120 = vmatpush1.msra.mxu0 0.0
      %1121 = vmatprep.subr.mxu0 0.0
      %1122 = vmatpush1.msra.mxu0 0.0
      %1123 = vmatprep.subr.mxu0 0.0
      %1124 = vmatpush1.msra.mxu0 %v1093
      %1125 = vmatprep.subr.mxu0 0.0
      %1126 = vmatpush1.msra.mxu0 %v992
      %1127 = vmatprep.subr.mxu0 0.0
      %1128 = vmatpush2.msra.mxu0 0.0
      %1129 = vmatprep.subr.mxu0 0.0
      %1130 = vmatpush2.msra.mxu0 0.0
      %1131 = vmatprep.subr.mxu0 0.0
      %1132 = vmatpush2.msra.mxu0 0.0
      %1133 = vmatprep.subr.mxu0 0.0
      %1134 = vmatpush2.msra.mxu0 0.0
      %1135 = vmatprep.subr.mxu0 0.0
      %1136 = vmatpush2.msra.mxu0 0.0
      %1137 = vmatprep.subr.mxu0 0.0
      %1138 = vmatpush2.msra.mxu0 0.0
      %1139 = vmatprep.subr.mxu0 0.0
      %1140 = vmatpush2.msra.mxu0 0.0
      %1141 = vmatprep.subr.mxu0 0.0
      %1142 = vmatpush2.msra.mxu0 0.0
      %1143 = vmatprep.subr.mxu0 0.0
      %1144 = vmatpush2.msra.mxu0 0.0
      %1145 = vmatprep.subr.mxu0 0.0
      %1146 = vmatpush2.msra.mxu0 0.0
      %1147 = vmatprep.subr.mxu0 0.0
      %1148 = vmatpush2.msra.mxu0 0.0
      %1149 = vmatprep.subr.mxu0 0.0
      %1150 = vmatpush2.msra.mxu0 0.0
      %1151 = vmatprep.subr.mxu0 0.0
      %1152 = vmatpush2.msra.mxu0 0.0
      %1153 = vmatprep.subr.mxu0 0.0
      %1154 = vmatpush2.msra.mxu0 0.0
      %1155 = vmatprep.subr.mxu0 0.0
      %1156 = vmatpush2.msra.mxu0 0.0
      %1157 = vmatprep.subr.mxu0 0.0
      %1158 = vmatpush2.msra.mxu0 0.0
      %1159 = vmatprep.mubr.f32.mxu0 0.0
      %1160 = vmatmul.mubr.f32.gmra.mxu0 %v996
      %v1161 = vpop.f32.mrf.mxu0
      %v1162 = vadd.f32 0.0, %v1161
      %v1163 = vpop.f32.mrf.mxu0
      %1164 = vmatprep.mubr.f32.mxu0 0.0
      %1165 = vmatmul.mubr.f32.gmra.mxu0 %v999
      %v1166 = vpop.f32.mrf.mxu0
      %v1167 = vadd.f32 0.0, %v1166
      %v1168 = vpop.f32.mrf.mxu0
      %1169 = vmatprep.mubr.f32.mxu0 0.0
      %1170 = vmatmul.mubr.f32.gmra.mxu0 %v1002
      %v1171 = vpop.f32.mrf.mxu0
      %v1172 = vadd.f32 0.0, %v1171
      %v1173 = vpop.f32.mrf.mxu0
      %1174 = vmatprep.mubr.f32.mxu0 0.0
      %1175 = vmatmul.mubr.f32.gmra.mxu0 %v1005
      %v1176 = vpop.f32.mrf.mxu0
      %v1177 = vadd.f32 0.0, %v1176
      %v1178 = vpop.f32.mrf.mxu0
      %1179 = vmatprep.mubr.f32.mxu0 0.0
      %1180 = vmatmul.mubr.f32.gmra.mxu0 %v1008
      %v1181 = vpop.f32.mrf.mxu0
      %v1182 = vadd.f32 0.0, %v1181
      %v1183 = vpop.f32.mrf.mxu0
      %1184 = vmatprep.mubr.f32.mxu0 0.0
      %1185 = vmatmul.mubr.f32.gmra.mxu0 %v1011
      %v1186 = vpop.f32.mrf.mxu0
      %v1187 = vadd.f32 0.0, %v1186
      %v1188 = vpop.f32.mrf.mxu0
      %1189 = vmatprep.mubr.f32.mxu0 0.0
      %1190 = vmatmul.mubr.f32.gmra.mxu0 %v1014
      %v1191 = vpop.f32.mrf.mxu0
      %v1192 = vadd.f32 0.0, %v1191
      %v1193 = vpop.f32.mrf.mxu0
      %1194 = vmatprep.mubr.f32.mxu0 0.0
      %1195 = vmatmul.mubr.f32.gmra.mxu0 %v1017
      %v1196 = vpop.f32.mrf.mxu0
      %v1197 = vadd.f32 0.0, %v1196
      %v1198 = vpop.f32.mrf.mxu0
      %1199 = vmatprep.mubr.f32.mxu0 0.0
      %1200 = vmatmul.mubr.f32.gmra.mxu0 %v1020
      %v1201 = vpop.f32.mrf.mxu0
      %v1202 = vadd.f32 0.0, %v1201
      %v1203 = vpop.f32.mrf.mxu0
      %1204 = vmatprep.mubr.f32.mxu0 0.0
      %1205 = vmatmul.mubr.f32.gmra.mxu0 %v1023
      %v1206 = vpop.f32.mrf.mxu0
      %v1207 = vadd.f32 0.0, %v1206
      %v1208 = vpop.f32.mrf.mxu0
      %1209 = vmatprep.mubr.f32.mxu0 0.0
      %1210 = vmatmul.mubr.f32.gmra.mxu0 %v1026
      %v1211 = vpop.f32.mrf.mxu0
      %v1212 = vadd.f32 0.0, %v1211
      %v1213 = vpop.f32.mrf.mxu0
      %1214 = vmatprep.mubr.f32.mxu0 0.0
      %1215 = vmatmul.mubr.f32.gmra.mxu0 %v1029
      %v1216 = vpop.f32.mrf.mxu0
      %v1217 = vadd.f32 0.0, %v1216
      %v1218 = vpop.f32.mrf.mxu0
      %1219 = vmatprep.mubr.f32.mxu0 0.0
      %1220 = vmatmul.mubr.f32.gmra.mxu0 %v1032
      %v1221 = vpop.f32.mrf.mxu0
      %v1222 = vadd.f32 0.0, %v1221
      %v1223 = vpop.f32.mrf.mxu0
      %1224 = vmatprep.mubr.f32.mxu0 0.0
      %1225 = vmatmul.mubr.f32.gmra.mxu0 %v1035
      %v1226 = vpop.f32.mrf.mxu0
      %v1227 = vadd.f32 0.0, %v1226
      %v1228 = vpop.f32.mrf.mxu0
      %1229 = vmatprep.mubr.f32.mxu0 0.0
      %1230 = vmatmul.mubr.f32.gmra.mxu0 %v1038
      %v1231 = vpop.f32.mrf.mxu0
      %v1232 = vadd.f32 0.0, %v1231
      %v1233 = vpop.f32.mrf.mxu0
      %1234 = vmatprep.mubr.f32.mxu0 0.0
      %1235 = vmatmul.mubr.f32.gmra.mxu0 %v1041
      %v1236 = vpop.f32.mrf.mxu0
      %v1237 = vadd.f32 0.0, %v1236
      %v1238 = vpop.f32.mrf.mxu0
      %1239 = vmatprep.mubr.f32.mxu0 0.0
      %1240 = vmatmul.mubr.f32.gmra.mxu0 %v1044
      %v1241 = vpop.f32.mrf.mxu0
      %v1242 = vadd.f32 0.0, %v1241
      %v1243 = vpop.f32.mrf.mxu0
      %1244 = vmatprep.mubr.f32.mxu0 0.0
      %1245 = vmatmul.mubr.f32.gmra.mxu0 %v1047
      %v1246 = vpop.f32.mrf.mxu0
      %v1247 = vadd.f32 0.0, %v1246
      %v1248 = vpop.f32.mrf.mxu0
      %1249 = vmatprep.mubr.f32.mxu0 0.0
      %1250 = vmatmul.mubr.f32.gmra.mxu0 %v1050
      %v1251 = vpop.f32.mrf.mxu0
      %v1252 = vadd.f32 0.0, %v1251
      %v1253 = vpop.f32.mrf.mxu0
      %1254 = vmatprep.mubr.f32.mxu0 0.0
      %1255 = vmatmul.mubr.f32.gmra.mxu0 %v1053
      %v1256 = vpop.f32.mrf.mxu0
      %v1257 = vadd.f32 0.0, %v1256
      %v1258 = vpop.f32.mrf.mxu0
      %1259 = vmatprep.mubr.f32.mxu0 0.0
      %1260 = vmatmul.mubr.f32.gmra.mxu0 %v1056
      %v1261 = vpop.f32.mrf.mxu0
      %v1262 = vadd.f32 0.0, %v1261
      %v1263 = vpop.f32.mrf.mxu0
      %1264 = vmatprep.mubr.f32.mxu0 0.0
      %1265 = vmatmul.mubr.f32.gmra.mxu0 %v1059
      %v1266 = vpop.f32.mrf.mxu0
      %v1267 = vadd.f32 0.0, %v1266
      %v1268 = vpop.f32.mrf.mxu0
      %1269 = vmatprep.mubr.f32.mxu0 0.0
      %1270 = vmatmul.mubr.f32.gmra.mxu0 %v1062
      %v1271 = vpop.f32.mrf.mxu0
      %v1272 = vadd.f32 0.0, %v1271
      %v1273 = vpop.f32.mrf.mxu0
      %1274 = vmatprep.mubr.f32.mxu0 0.0
      %1275 = vmatmul.mubr.f32.gmra.mxu0 %v1065
      %v1276 = vpop.f32.mrf.mxu0
      %v1277 = vadd.f32 0.0, %v1276
      %v1278 = vpop.f32.mrf.mxu0
      %1279 = vmatprep.mubr.f32.mxu0 0.0
      %1280 = vmatmul.mubr.f32.gmra.mxu0 %v1068
      %v1281 = vpop.f32.mrf.mxu0
      %v1282 = vadd.f32 0.0, %v1281
      %v1283 = vpop.f32.mrf.mxu0
      %1284 = vmatprep.mubr.f32.mxu0 0.0
      %1285 = vmatmul.mubr.f32.gmra.mxu0 %v1071
      %v1286 = vpop.f32.mrf.mxu0
      %v1287 = vadd.f32 0.0, %v1286
      %v1288 = vpop.f32.mrf.mxu0
      %1289 = vmatprep.mubr.f32.mxu0 0.0
      %1290 = vmatmul.mubr.f32.gmra.mxu0 %v1074
      %v1291 = vpop.f32.mrf.mxu0
      %v1292 = vadd.f32 0.0, %v1291
      %v1293 = vpop.f32.mrf.mxu0
      %1294 = vmatprep.mubr.f32.mxu0 0.0
      %1295 = vmatmul.mubr.f32.gmra.mxu0 %v1077
      %v1296 = vpop.f32.mrf.mxu0
      %v1297 = vadd.f32 0.0, %v1296
      %v1298 = vpop.f32.mrf.mxu0
      %1299 = vmatprep.mubr.f32.mxu0 0.0
      %1300 = vmatmul.mubr.f32.gmra.mxu0 %v1080
      %v1301 = vpop.f32.mrf.mxu0
      %v1302 = vadd.f32 0.0, %v1301
      %v1303 = vpop.f32.mrf.mxu0
      %1304 = vmatprep.mubr.f32.mxu0 0.0
      %1305 = vmatmul.mubr.f32.gmra.mxu0 %v1083
      %v1306 = vpop.f32.mrf.mxu0
      %v1307 = vadd.f32 0.0, %v1306
      %v1308 = vpop.f32.mrf.mxu0
      %1309 = vmatprep.mubr.f32.mxu0 0.0
      %1310 = vmatmul.mubr.f32.gmra.mxu0 %v1086
      %v1311 = vpop.f32.mrf.mxu0
      %v1312 = vadd.f32 0.0, %v1311
      %v1313 = vpop.f32.mrf.mxu0
      %1314 = vmatprep.mubr.f32.mxu0 0.0
      %1315 = vmatmul.mubr.f32.gmra.mxu0 %v1089
      %v1316 = vpop.f32.mrf.mxu0
      %v1317 = vadd.f32 0.0, %v1316
      %v1318 = vpop.f32.mrf.mxu0
      %1319 = vdwg.mxu0
      %v1321 = vsel %vm994, %v631, 0
      %v1324 = vsel %vm994, %v632, 0
      %v1327 = vsel %vm994, %v633, 0
      %v1330 = vsel %vm994, %v634, 0
      %v1333 = vsel %vm994, %v635, 0
      %v1336 = vsel %vm994, %v636, 0
      %v1339 = vsel %vm994, %v637, 0
      %v1342 = vsel %vm994, %v638, 0
      %v1345 = vsel %vm994, %v639, 0
      %v1348 = vsel %vm994, %v640, 0
      %v1351 = vsel %vm994, %v641, 0
      %v1354 = vsel %vm994, %v642, 0
      %v1357 = vsel %vm994, %v643, 0
      %v1360 = vsel %vm994, %v644, 0
      %v1363 = vsel %vm994, %v645, 0
      %v1366 = vsel %vm994, %v646, 0
      %v1369 = vsel %vm994, %v647, 0
      %v1372 = vsel %vm994, %v648, 0
      %v1375 = vsel %vm994, %v649, 0
      %v1378 = vsel %vm994, %v650, 0
      %v1381 = vsel %vm994, %v651, 0
      %v1384 = vsel %vm994, %v652, 0
      %v1387 = vsel %vm994, %v653, 0
      %v1390 = vsel %vm994, %v654, 0
      %v1393 = vsel %vm994, %v655, 0
      %v1396 = vsel %vm994, %v656, 0
      %v1399 = vsel %vm994, %v657, 0
      %v1402 = vsel %vm994, %v658, 0
      %v1405 = vsel %vm994, %v659, 0
      %v1408 = vsel %vm994, %v660, 0
      %v1411 = vsel %vm994, %v661, 0
      %v1414 = vsel %vm994, %v662, 0
      %v1417 = vsel %vm1091, %v664, 0
      %1419 = vmatprep.subr.mxu0 0.0
      %1420 = vmatpush1.msra.mxu0 0.0
      %1421 = vmatprep.subr.mxu0 0.0
      %1422 = vmatpush1.msra.mxu0 0.0
      %1423 = vmatprep.subr.mxu0 0.0
      %1424 = vmatpush1.msra.mxu0 0.0
      %1425 = vmatprep.subr.mxu0 0.0
      %1426 = vmatpush1.msra.mxu0 0.0
      %1427 = vmatprep.subr.mxu0 0.0
      %1428 = vmatpush1.msra.mxu0 0.0
      %1429 = vmatprep.subr.mxu0 0.0
      %1430 = vmatpush1.msra.mxu0 0.0
      %1431 = vmatprep.subr.mxu0 0.0
      %1432 = vmatpush1.msra.mxu0 0.0
      %1433 = vmatprep.subr.mxu0 0.0
      %1434 = vmatpush1.msra.mxu0 0.0
      %1435 = vmatprep.subr.mxu0 0.0
      %1436 = vmatpush1.msra.mxu0 0.0
      %1437 = vmatprep.subr.mxu0 0.0
      %1438 = vmatpush1.msra.mxu0 0.0
      %1439 = vmatprep.subr.mxu0 0.0
      %1440 = vmatpush1.msra.mxu0 0.0
      %1441 = vmatprep.subr.mxu0 0.0
      %1442 = vmatpush1.msra.mxu0 0.0
      %1443 = vmatprep.subr.mxu0 0.0
      %1444 = vmatpush1.msra.mxu0 0.0
      %1445 = vmatprep.subr.mxu0 0.0
      %1446 = vmatpush1.msra.mxu0 0.0
      %1447 = vmatprep.subr.mxu0 0.0
      %1448 = vmatpush1.msra.mxu0 %v1417
      %1449 = vmatprep.subr.mxu0 0.0
      %1450 = vmatpush1.msra.mxu0 %v663
      %1451 = vmatprep.subr.mxu0 0.0
      %1452 = vmatpush2.msra.mxu0 0.0
      %1453 = vmatprep.subr.mxu0 0.0
      %1454 = vmatpush2.msra.mxu0 0.0
      %1455 = vmatprep.subr.mxu0 0.0
      %1456 = vmatpush2.msra.mxu0 0.0
      %1457 = vmatprep.subr.mxu0 0.0
      %1458 = vmatpush2.msra.mxu0 0.0
      %1459 = vmatprep.subr.mxu0 0.0
      %1460 = vmatpush2.msra.mxu0 0.0
      %1461 = vmatprep.subr.mxu0 0.0
      %1462 = vmatpush2.msra.mxu0 0.0
      %1463 = vmatprep.subr.mxu0 0.0
      %1464 = vmatpush2.msra.mxu0 0.0
      %1465 = vmatprep.subr.mxu0 0.0
      %1466 = vmatpush2.msra.mxu0 0.0
      %1467 = vmatprep.subr.mxu0 0.0
      %1468 = vmatpush2.msra.mxu0 0.0
      %1469 = vmatprep.subr.mxu0 0.0
      %1470 = vmatpush2.msra.mxu0 0.0
      %1471 = vmatprep.subr.mxu0 0.0
      %1472 = vmatpush2.msra.mxu0 0.0
      %1473 = vmatprep.subr.mxu0 0.0
      %1474 = vmatpush2.msra.mxu0 0.0
      %1475 = vmatprep.subr.mxu0 0.0
      %1476 = vmatpush2.msra.mxu0 0.0
      %1477 = vmatprep.subr.mxu0 0.0
      %1478 = vmatpush2.msra.mxu0 0.0
      %1479 = vmatprep.subr.mxu0 0.0
      %1480 = vmatpush2.msra.mxu0 0.0
      %1481 = vmatprep.subr.mxu0 0.0
      %1482 = vmatpush2.msra.mxu0 0.0
      %1483 = vmatprep.mubr.f32.mxu0 0.0
      %1484 = vmatmul.mubr.f32.gmra.mxu0 %v1321
      %v1485 = vpop.f32.mrf.mxu0
      %v1486 = vadd.f32 %v1162, %v1485
      %v1487 = vpop.f32.mrf.mxu0
      %1488 = vmatprep.mubr.f32.mxu0 0.0
      %1489 = vmatmul.mubr.f32.gmra.mxu0 %v1324
      %v1490 = vpop.f32.mrf.mxu0
      %v1491 = vadd.f32 %v1167, %v1490
      %v1492 = vpop.f32.mrf.mxu0
      %1493 = vmatprep.mubr.f32.mxu0 0.0
      %1494 = vmatmul.mubr.f32.gmra.mxu0 %v1327
      %v1495 = vpop.f32.mrf.mxu0
      %v1496 = vadd.f32 %v1172, %v1495
      %v1497 = vpop.f32.mrf.mxu0
      %1498 = vmatprep.mubr.f32.mxu0 0.0
      %1499 = vmatmul.mubr.f32.gmra.mxu0 %v1330
      %v1500 = vpop.f32.mrf.mxu0
      %v1501 = vadd.f32 %v1177, %v1500
      %v1502 = vpop.f32.mrf.mxu0
      %1503 = vmatprep.mubr.f32.mxu0 0.0
      %1504 = vmatmul.mubr.f32.gmra.mxu0 %v1333
      %v1505 = vpop.f32.mrf.mxu0
      %v1506 = vadd.f32 %v1182, %v1505
      %v1507 = vpop.f32.mrf.mxu0
      %1508 = vmatprep.mubr.f32.mxu0 0.0
      %1509 = vmatmul.mubr.f32.gmra.mxu0 %v1336
      %v1510 = vpop.f32.mrf.mxu0
      %v1511 = vadd.f32 %v1187, %v1510
      %v1512 = vpop.f32.mrf.mxu0
      %1513 = vmatprep.mubr.f32.mxu0 0.0
      %1514 = vmatmul.mubr.f32.gmra.mxu0 %v1339
      %v1515 = vpop.f32.mrf.mxu0
      %v1516 = vadd.f32 %v1192, %v1515
      %v1517 = vpop.f32.mrf.mxu0
      %1518 = vmatprep.mubr.f32.mxu0 0.0
      %1519 = vmatmul.mubr.f32.gmra.mxu0 %v1342
      %v1520 = vpop.f32.mrf.mxu0
      %v1521 = vadd.f32 %v1197, %v1520
      %v1522 = vpop.f32.mrf.mxu0
      %1523 = vmatprep.mubr.f32.mxu0 0.0
      %1524 = vmatmul.mubr.f32.gmra.mxu0 %v1345
      %v1525 = vpop.f32.mrf.mxu0
      %v1526 = vadd.f32 %v1202, %v1525
      %v1527 = vpop.f32.mrf.mxu0
      %1528 = vmatprep.mubr.f32.mxu0 0.0
      %1529 = vmatmul.mubr.f32.gmra.mxu0 %v1348
      %v1530 = vpop.f32.mrf.mxu0
      %v1531 = vadd.f32 %v1207, %v1530
      %v1532 = vpop.f32.mrf.mxu0
      %1533 = vmatprep.mubr.f32.mxu0 0.0
      %1534 = vmatmul.mubr.f32.gmra.mxu0 %v1351
      %v1535 = vpop.f32.mrf.mxu0
      %v1536 = vadd.f32 %v1212, %v1535
      %v1537 = vpop.f32.mrf.mxu0
      %1538 = vmatprep.mubr.f32.mxu0 0.0
      %1539 = vmatmul.mubr.f32.gmra.mxu0 %v1354
      %v1540 = vpop.f32.mrf.mxu0
      %v1541 = vadd.f32 %v1217, %v1540
      %v1542 = vpop.f32.mrf.mxu0
      %1543 = vmatprep.mubr.f32.mxu0 0.0
      %1544 = vmatmul.mubr.f32.gmra.mxu0 %v1357
      %v1545 = vpop.f32.mrf.mxu0
      %v1546 = vadd.f32 %v1222, %v1545
      %v1547 = vpop.f32.mrf.mxu0
      %1548 = vmatprep.mubr.f32.mxu0 0.0
      %1549 = vmatmul.mubr.f32.gmra.mxu0 %v1360
      %v1550 = vpop.f32.mrf.mxu0
      %v1551 = vadd.f32 %v1227, %v1550
      %v1552 = vpop.f32.mrf.mxu0
      %1553 = vmatprep.mubr.f32.mxu0 0.0
      %1554 = vmatmul.mubr.f32.gmra.mxu0 %v1363
      %v1555 = vpop.f32.mrf.mxu0
      %v1556 = vadd.f32 %v1232, %v1555
      %v1557 = vpop.f32.mrf.mxu0
      %1558 = vmatprep.mubr.f32.mxu0 0.0
      %1559 = vmatmul.mubr.f32.gmra.mxu0 %v1366
      %v1560 = vpop.f32.mrf.mxu0
      %v1561 = vadd.f32 %v1237, %v1560
      %v1562 = vpop.f32.mrf.mxu0
      %1563 = vmatprep.mubr.f32.mxu0 0.0
      %1564 = vmatmul.mubr.f32.gmra.mxu0 %v1369
      %v1565 = vpop.f32.mrf.mxu0
      %v1566 = vadd.f32 %v1242, %v1565
      %v1567 = vpop.f32.mrf.mxu0
      %1568 = vmatprep.mubr.f32.mxu0 0.0
      %1569 = vmatmul.mubr.f32.gmra.mxu0 %v1372
      %v1570 = vpop.f32.mrf.mxu0
      %v1571 = vadd.f32 %v1247, %v1570
      %v1572 = vpop.f32.mrf.mxu0
      %1573 = vmatprep.mubr.f32.mxu0 0.0
      %1574 = vmatmul.mubr.f32.gmra.mxu0 %v1375
      %v1575 = vpop.f32.mrf.mxu0
      %v1576 = vadd.f32 %v1252, %v1575
      %v1577 = vpop.f32.mrf.mxu0
      %1578 = vmatprep.mubr.f32.mxu0 0.0
      %1579 = vmatmul.mubr.f32.gmra.mxu0 %v1378
      %v1580 = vpop.f32.mrf.mxu0
      %v1581 = vadd.f32 %v1257, %v1580
      %v1582 = vpop.f32.mrf.mxu0
      %1583 = vmatprep.mubr.f32.mxu0 0.0
      %1584 = vmatmul.mubr.f32.gmra.mxu0 %v1381
      %v1585 = vpop.f32.mrf.mxu0
      %v1586 = vadd.f32 %v1262, %v1585
      %v1587 = vpop.f32.mrf.mxu0
      %1588 = vmatprep.mubr.f32.mxu0 0.0
      %1589 = vmatmul.mubr.f32.gmra.mxu0 %v1384
      %v1590 = vpop.f32.mrf.mxu0
      %v1591 = vadd.f32 %v1267, %v1590
      %v1592 = vpop.f32.mrf.mxu0
      %1593 = vmatprep.mubr.f32.mxu0 0.0
      %1594 = vmatmul.mubr.f32.gmra.mxu0 %v1387
      %v1595 = vpop.f32.mrf.mxu0
      %v1596 = vadd.f32 %v1272, %v1595
      %v1597 = vpop.f32.mrf.mxu0
      %1598 = vmatprep.mubr.f32.mxu0 0.0
      %1599 = vmatmul.mubr.f32.gmra.mxu0 %v1390
      %v1600 = vpop.f32.mrf.mxu0
      %v1601 = vadd.f32 %v1277, %v1600
      %v1602 = vpop.f32.mrf.mxu0
      %1603 = vmatprep.mubr.f32.mxu0 0.0
      %1604 = vmatmul.mubr.f32.gmra.mxu0 %v1393
      %v1605 = vpop.f32.mrf.mxu0
      %v1606 = vadd.f32 %v1282, %v1605
      %v1607 = vpop.f32.mrf.mxu0
      %1608 = vmatprep.mubr.f32.mxu0 0.0
      %1609 = vmatmul.mubr.f32.gmra.mxu0 %v1396
      %v1610 = vpop.f32.mrf.mxu0
      %v1611 = vadd.f32 %v1287, %v1610
      %v1612 = vpop.f32.mrf.mxu0
      %1613 = vmatprep.mubr.f32.mxu0 0.0
      %1614 = vmatmul.mubr.f32.gmra.mxu0 %v1399
      %v1615 = vpop.f32.mrf.mxu0
      %v1616 = vadd.f32 %v1292, %v1615
      %v1617 = vpop.f32.mrf.mxu0
      %1618 = vmatprep.mubr.f32.mxu0 0.0
      %1619 = vmatmul.mubr.f32.gmra.mxu0 %v1402
      %v1620 = vpop.f32.mrf.mxu0
      %v1621 = vadd.f32 %v1297, %v1620
      %v1622 = vpop.f32.mrf.mxu0
      %1623 = vmatprep.mubr.f32.mxu0 0.0
      %1624 = vmatmul.mubr.f32.gmra.mxu0 %v1405
      %v1625 = vpop.f32.mrf.mxu0
      %v1626 = vadd.f32 %v1302, %v1625
      %v1627 = vpop.f32.mrf.mxu0
      %1628 = vmatprep.mubr.f32.mxu0 0.0
      %1629 = vmatmul.mubr.f32.gmra.mxu0 %v1408
      %v1630 = vpop.f32.mrf.mxu0
      %v1631 = vadd.f32 %v1307, %v1630
      %v1632 = vpop.f32.mrf.mxu0
      %1633 = vmatprep.mubr.f32.mxu0 0.0
      %1634 = vmatmul.mubr.f32.gmra.mxu0 %v1411
      %v1635 = vpop.f32.mrf.mxu0
      %v1636 = vadd.f32 %v1312, %v1635
      %v1637 = vpop.f32.mrf.mxu0
      %1638 = vmatprep.mubr.f32.mxu0 0.0
      %1639 = vmatmul.mubr.f32.gmra.mxu0 %v1414
      %v1640 = vpop.f32.mrf.mxu0
      %v1641 = vadd.f32 %v1317, %v1640
      %v1642 = vpop.f32.mrf.mxu0
      %1643 = vdwg.mxu0
      %v1644 = vld [vmem:[#allocation2 + $0x2] sm:$0xff]
      %v1645 = vld [vmem:[#allocation2 + $0xa] sm:$0xff]
      %v1646 = vld [vmem:[#allocation2 + $0x1a] sm:$0xff]
      %v1647 = vld [vmem:[#allocation2 + $0x22] sm:$0xff]
      %v1648 = vld [vmem:[#allocation2 + $0x32] sm:$0xff]
      %v1649 = vld [vmem:[#allocation2 + $0x3a] sm:$0xff]
      %v1650 = vld [vmem:[#allocation2 + $0x4a] sm:$0xff]
      %v1651 = vld [vmem:[#allocation2 + $0x52] sm:$0xff]
      %v1652 = vld [vmem:[#allocation2 + $0x62] sm:$0xff]
      %v1653 = vld [vmem:[#allocation2 + $0x6a] sm:$0xff]
      %v1654 = vld [vmem:[#allocation2 + $0x7a] sm:$0xff]
      %v1655 = vld [vmem:[#allocation2 + $0x82] sm:$0xff]
      %v1656 = vld [vmem:[#allocation2 + $0x92] sm:$0xff]
      %v1657 = vld [vmem:[#allocation2 + $0x9a] sm:$0xff]
      %v1658 = vld [vmem:[#allocation2 + $0xaa] sm:$0xff]
      %v1659 = vld [vmem:[#allocation2 + $0xb2] sm:$0xff]
      %v1660 = vld [vmem:[#allocation2 + $0xc2] sm:$0xff]
      %v1661 = vld [vmem:[#allocation2 + $0xca] sm:$0xff]
      %v1662 = vld [vmem:[#allocation2 + $0xda] sm:$0xff]
      %v1663 = vld [vmem:[#allocation2 + $0xe2] sm:$0xff]
      %v1664 = vld [vmem:[#allocation2 + $0xf2] sm:$0xff]
      %v1665 = vld [vmem:[#allocation2 + $0xfa] sm:$0xff]
      %v1666 = vld [vmem:[#allocation2 + $0x10a] sm:$0xff]
      %v1667 = vld [vmem:[#allocation2 + $0x112] sm:$0xff]
      %v1668 = vld [vmem:[#allocation2 + $0x122] sm:$0xff]
      %v1669 = vld [vmem:[#allocation2 + $0x12a] sm:$0xff]
      %v1670 = vld [vmem:[#allocation2 + $0x13a] sm:$0xff]
      %v1671 = vld [vmem:[#allocation2 + $0x142] sm:$0xff]
      %v1672 = vld [vmem:[#allocation2 + $0x152] sm:$0xff]
      %v1673 = vld [vmem:[#allocation2 + $0x15a] sm:$0xff]
      %v1674 = vld [vmem:[#allocation2 + $0x16a] sm:$0xff]
      %v1675 = vld [vmem:[#allocation2 + $0x172] sm:$0xff]
      %v1676 = vld [vmem:[#allocation2 + $0x182] sm:$0xff]
      %v1677 = vld [vmem:[#allocation2 + $0x18a] sm:$0xff]
      %v1678 = vld [vmem:[#allocation2 + $0x19a] sm:$0xff]
      %v1679 = vld [vmem:[#allocation2 + $0x1a2] sm:$0xff]
      %1712 = vrot.lane.b32.xlu0 %v1646, 4
      %v1713 = vpop.permute.xlu0 %1712
      %1714 = vrot.lane.b32.xlu0 %v1647, 4
      %v1715 = vpop.permute.xlu0 %1714
      %1716 = vrot.lane.b32.xlu0 %v1648, 4
      %v1717 = vpop.permute.xlu0 %1716
      %1718 = vrot.lane.b32.xlu0 %v1649, 4
      %v1719 = vpop.permute.xlu0 %1718
      %1720 = vrot.lane.b32.xlu0 %v1650, 4
      %v1721 = vpop.permute.xlu0 %1720
      %1722 = vrot.lane.b32.xlu0 %v1651, 4
      %v1723 = vpop.permute.xlu0 %1722
      %1724 = vrot.lane.b32.xlu0 %v1652, 4
      %v1725 = vpop.permute.xlu0 %1724
      %1726 = vrot.lane.b32.xlu0 %v1653, 4
      %v1727 = vpop.permute.xlu0 %1726
      %1728 = vrot.lane.b32.xlu0 %v1654, 4
      %v1729 = vpop.permute.xlu0 %1728
      %1730 = vrot.lane.b32.xlu0 %v1655, 4
      %v1731 = vpop.permute.xlu0 %1730
      %1732 = vrot.lane.b32.xlu0 %v1656, 4
      %v1733 = vpop.permute.xlu0 %1732
      %1734 = vrot.lane.b32.xlu0 %v1657, 4
      %v1735 = vpop.permute.xlu0 %1734
      %1736 = vrot.lane.b32.xlu0 %v1658, 4
      %v1737 = vpop.permute.xlu0 %1736
      %1738 = vrot.lane.b32.xlu0 %v1659, 4
      %v1739 = vpop.permute.xlu0 %1738
      %1740 = vrot.lane.b32.xlu0 %v1660, 4
      %v1741 = vpop.permute.xlu0 %1740
      %1742 = vrot.lane.b32.xlu0 %v1661, 4
      %v1743 = vpop.permute.xlu0 %1742
      %1744 = vrot.lane.b32.xlu0 %v1662, 4
      %v1745 = vpop.permute.xlu0 %1744
      %1746 = vrot.lane.b32.xlu0 %v1663, 4
      %v1747 = vpop.permute.xlu0 %1746
      %1748 = vrot.lane.b32.xlu0 %v1664, 4
      %v1749 = vpop.permute.xlu0 %1748
      %1750 = vrot.lane.b32.xlu0 %v1665, 4
      %v1751 = vpop.permute.xlu0 %1750
      %1752 = vrot.lane.b32.xlu0 %v1666, 4
      %v1753 = vpop.permute.xlu0 %1752
      %1754 = vrot.lane.b32.xlu0 %v1667, 4
      %v1755 = vpop.permute.xlu0 %1754
      %1756 = vrot.lane.b32.xlu0 %v1668, 4
      %v1757 = vpop.permute.xlu0 %1756
      %1758 = vrot.lane.b32.xlu0 %v1669, 4
      %v1759 = vpop.permute.xlu0 %1758
      %1760 = vrot.lane.b32.xlu0 %v1670, 4
      %v1761 = vpop.permute.xlu0 %1760
      %1762 = vrot.lane.b32.xlu0 %v1671, 4
      %v1763 = vpop.permute.xlu0 %1762
      %1764 = vrot.lane.b32.xlu0 %v1672, 4
      %v1765 = vpop.permute.xlu0 %1764
      %1766 = vrot.lane.b32.xlu0 %v1673, 4
      %v1767 = vpop.permute.xlu0 %1766
      %1768 = vrot.lane.b32.xlu0 %v1674, 4
      %v1769 = vpop.permute.xlu0 %1768
      %1770 = vrot.lane.b32.xlu0 %v1675, 4
      %v1771 = vpop.permute.xlu0 %1770
      %1772 = vrot.lane.b32.xlu0 %v1676, 4
      %v1773 = vpop.permute.xlu0 %1772
      %1774 = vrot.lane.b32.xlu0 %v1677, 4
      %v1775 = vpop.permute.xlu0 %1774
      %1810 = vrot.lane.b32.xlu0 %v1648, 8
      %v1811 = vpop.permute.xlu0 %1810
      %1812 = vrot.lane.b32.xlu0 %v1649, 8
      %v1813 = vpop.permute.xlu0 %1812
      %1814 = vrot.lane.b32.xlu0 %v1650, 8
      %v1815 = vpop.permute.xlu0 %1814
      %1816 = vrot.lane.b32.xlu0 %v1651, 8
      %v1817 = vpop.permute.xlu0 %1816
      %1818 = vrot.lane.b32.xlu0 %v1652, 8
      %v1819 = vpop.permute.xlu0 %1818
      %1820 = vrot.lane.b32.xlu0 %v1653, 8
      %v1821 = vpop.permute.xlu0 %1820
      %1822 = vrot.lane.b32.xlu0 %v1654, 8
      %v1823 = vpop.permute.xlu0 %1822
      %1824 = vrot.lane.b32.xlu0 %v1655, 8
      %v1825 = vpop.permute.xlu0 %1824
      %1826 = vrot.lane.b32.xlu0 %v1656, 8
      %v1827 = vpop.permute.xlu0 %1826
      %1828 = vrot.lane.b32.xlu0 %v1657, 8
      %v1829 = vpop.permute.xlu0 %1828
      %1830 = vrot.lane.b32.xlu0 %v1658, 8
      %v1831 = vpop.permute.xlu0 %1830
      %1832 = vrot.lane.b32.xlu0 %v1659, 8
      %v1833 = vpop.permute.xlu0 %1832
      %1834 = vrot.lane.b32.xlu0 %v1660, 8
      %v1835 = vpop.permute.xlu0 %1834
      %1836 = vrot.lane.b32.xlu0 %v1661, 8
      %v1837 = vpop.permute.xlu0 %1836
      %1838 = vrot.lane.b32.xlu0 %v1662, 8
      %v1839 = vpop.permute.xlu0 %1838
      %1840 = vrot.lane.b32.xlu0 %v1663, 8
      %v1841 = vpop.permute.xlu0 %1840
      %1842 = vrot.lane.b32.xlu0 %v1664, 8
      %v1843 = vpop.permute.xlu0 %1842
      %1844 = vrot.lane.b32.xlu0 %v1665, 8
      %v1845 = vpop.permute.xlu0 %1844
      %1846 = vrot.lane.b32.xlu0 %v1666, 8
      %v1847 = vpop.permute.xlu0 %1846
      %1848 = vrot.lane.b32.xlu0 %v1667, 8
      %v1849 = vpop.permute.xlu0 %1848
      %1850 = vrot.lane.b32.xlu0 %v1668, 8
      %v1851 = vpop.permute.xlu0 %1850
      %1852 = vrot.lane.b32.xlu0 %v1669, 8
      %v1853 = vpop.permute.xlu0 %1852
      %1854 = vrot.lane.b32.xlu0 %v1670, 8
      %v1855 = vpop.permute.xlu0 %1854
      %1856 = vrot.lane.b32.xlu0 %v1671, 8
      %v1857 = vpop.permute.xlu0 %1856
      %1858 = vrot.lane.b32.xlu0 %v1672, 8
      %v1859 = vpop.permute.xlu0 %1858
      %1860 = vrot.lane.b32.xlu0 %v1673, 8
      %v1861 = vpop.permute.xlu0 %1860
      %1862 = vrot.lane.b32.xlu0 %v1674, 8
      %v1863 = vpop.permute.xlu0 %1862
      %1864 = vrot.lane.b32.xlu0 %v1675, 8
      %v1865 = vpop.permute.xlu0 %1864
      %1866 = vrot.lane.b32.xlu0 %v1676, 8
      %v1867 = vpop.permute.xlu0 %1866
      %1868 = vrot.lane.b32.xlu0 %v1677, 8
      %v1869 = vpop.permute.xlu0 %1868
      %1870 = vrot.lane.b32.xlu0 %v1678, 8
      %v1871 = vpop.permute.xlu0 %1870
      %1872 = vrot.lane.b32.xlu0 %v1679, 8
      %v1873 = vpop.permute.xlu0 %1872
      %v1906 = vsel %vm215, %v1644, %v1713
      %v1907 = vsel %vm215, %v1645, %v1715
      %v1908 = vsel %vm215, %v1646, %v1717
      %v1909 = vsel %vm215, %v1647, %v1719
      %v1910 = vsel %vm215, %v1648, %v1721
      %v1911 = vsel %vm215, %v1649, %v1723
      %v1912 = vsel %vm215, %v1650, %v1725
      %v1913 = vsel %vm215, %v1651, %v1727
      %v1914 = vsel %vm215, %v1652, %v1729
      %v1915 = vsel %vm215, %v1653, %v1731
      %v1916 = vsel %vm215, %v1654, %v1733
      %v1917 = vsel %vm215, %v1655, %v1735
      %v1918 = vsel %vm215, %v1656, %v1737
      %v1919 = vsel %vm215, %v1657, %v1739
      %v1920 = vsel %vm215, %v1658, %v1741
      %v1921 = vsel %vm215, %v1659, %v1743
      %v1922 = vsel %vm215, %v1660, %v1745
      %v1923 = vsel %vm215, %v1661, %v1747
      %v1924 = vsel %vm215, %v1662, %v1749
      %v1925 = vsel %vm215, %v1663, %v1751
      %v1926 = vsel %vm215, %v1664, %v1753
      %v1927 = vsel %vm215, %v1665, %v1755
      %v1928 = vsel %vm215, %v1666, %v1757
      %v1929 = vsel %vm215, %v1667, %v1759
      %v1930 = vsel %vm215, %v1668, %v1761
      %v1931 = vsel %vm215, %v1669, %v1763
      %v1932 = vsel %vm215, %v1670, %v1765
      %v1933 = vsel %vm215, %v1671, %v1767
      %v1934 = vsel %vm215, %v1672, %v1769
      %v1935 = vsel %vm215, %v1673, %v1771
      %v1936 = vsel %vm215, %v1674, %v1773
      %v1937 = vsel %vm215, %v1675, %v1775
      %v1938 = vsel %vm630, %v1906, %v1811
      %v1939 = vsel %vm630, %v1907, %v1813
      %v1940 = vsel %vm630, %v1908, %v1815
      %v1941 = vsel %vm630, %v1909, %v1817
      %v1942 = vsel %vm630, %v1910, %v1819
      %v1943 = vsel %vm630, %v1911, %v1821
      %v1944 = vsel %vm630, %v1912, %v1823
      %v1945 = vsel %vm630, %v1913, %v1825
      %v1946 = vsel %vm630, %v1914, %v1827
      %v1947 = vsel %vm630, %v1915, %v1829
      %v1948 = vsel %vm630, %v1916, %v1831
      %v1949 = vsel %vm630, %v1917, %v1833
      %v1950 = vsel %vm630, %v1918, %v1835
      %v1951 = vsel %vm630, %v1919, %v1837
      %v1952 = vsel %vm630, %v1920, %v1839
      %v1953 = vsel %vm630, %v1921, %v1841
      %v1954 = vsel %vm630, %v1922, %v1843
      %v1955 = vsel %vm630, %v1923, %v1845
      %v1956 = vsel %vm630, %v1924, %v1847
      %v1957 = vsel %vm630, %v1925, %v1849
      %v1958 = vsel %vm630, %v1926, %v1851
      %v1959 = vsel %vm630, %v1927, %v1853
      %v1960 = vsel %vm630, %v1928, %v1855
      %v1961 = vsel %vm630, %v1929, %v1857
      %v1962 = vsel %vm630, %v1930, %v1859
      %v1963 = vsel %vm630, %v1931, %v1861
      %v1964 = vsel %vm630, %v1932, %v1863
      %v1965 = vsel %vm630, %v1933, %v1865
      %v1966 = vsel %vm630, %v1934, %v1867
      %v1967 = vsel %vm630, %v1935, %v1869
      %v1968 = vsel %vm630, %v1936, %v1871
      %v1969 = vsel %vm630, %v1937, %v1873
      %s1970 = scalar_lea.vmem %s1, 32
      %v1971 = vld [vmem:[%s1970] sm:$0xff]
      %v1972 = vld [vmem:[%s1970 + $0x8] sm:$0xf]
      %v1974 = vsel %vm994, %v1938, 0
      %v1977 = vsel %vm994, %v1939, 0
      %v1980 = vsel %vm994, %v1940, 0
      %v1983 = vsel %vm994, %v1941, 0
      %v1986 = vsel %vm994, %v1942, 0
      %v1989 = vsel %vm994, %v1943, 0
      %v1992 = vsel %vm994, %v1944, 0
      %v1995 = vsel %vm994, %v1945, 0
      %v1998 = vsel %vm994, %v1946, 0
      %v2001 = vsel %vm994, %v1947, 0
      %v2004 = vsel %vm994, %v1948, 0
      %v2007 = vsel %vm994, %v1949, 0
      %v2010 = vsel %vm994, %v1950, 0
      %v2013 = vsel %vm994, %v1951, 0
      %v2016 = vsel %vm994, %v1952, 0
      %v2019 = vsel %vm994, %v1953, 0
      %v2022 = vsel %vm994, %v1954, 0
      %v2025 = vsel %vm994, %v1955, 0
      %v2028 = vsel %vm994, %v1956, 0
      %v2031 = vsel %vm994, %v1957, 0
      %v2034 = vsel %vm994, %v1958, 0
      %v2037 = vsel %vm994, %v1959, 0
      %v2040 = vsel %vm994, %v1960, 0
      %v2043 = vsel %vm994, %v1961, 0
      %v2046 = vsel %vm994, %v1962, 0
      %v2049 = vsel %vm994, %v1963, 0
      %v2052 = vsel %vm994, %v1964, 0
      %v2055 = vsel %vm994, %v1965, 0
      %v2058 = vsel %vm994, %v1966, 0
      %v2061 = vsel %vm994, %v1967, 0
      %v2064 = vsel %vm994, %v1968, 0
      %v2067 = vsel %vm994, %v1969, 0
      %v2070 = vsel %vm1091, %v1972, 0
      %2072 = vmatprep.subr.mxu0 0.0
      %2073 = vmatpush1.msra.mxu0 0.0
      %2074 = vmatprep.subr.mxu0 0.0
      %2075 = vmatpush1.msra.mxu0 0.0
      %2076 = vmatprep.subr.mxu0 0.0
      %2077 = vmatpush1.msra.mxu0 0.0
      %2078 = vmatprep.subr.mxu0 0.0
      %2079 = vmatpush1.msra.mxu0 0.0
      %2080 = vmatprep.subr.mxu0 0.0
      %2081 = vmatpush1.msra.mxu0 0.0
      %2082 = vmatprep.subr.mxu0 0.0
      %2083 = vmatpush1.msra.mxu0 0.0
      %2084 = vmatprep.subr.mxu0 0.0
      %2085 = vmatpush1.msra.mxu0 0.0
      %2086 = vmatprep.subr.mxu0 0.0
      %2087 = vmatpush1.msra.mxu0 0.0
      %2088 = vmatprep.subr.mxu0 0.0
      %2089 = vmatpush1.msra.mxu0 0.0
      %2090 = vmatprep.subr.mxu0 0.0
      %2091 = vmatpush1.msra.mxu0 0.0
      %2092 = vmatprep.subr.mxu0 0.0
      %2093 = vmatpush1.msra.mxu0 0.0
      %2094 = vmatprep.subr.mxu0 0.0
      %2095 = vmatpush1.msra.mxu0 0.0
      %2096 = vmatprep.subr.mxu0 0.0
      %2097 = vmatpush1.msra.mxu0 0.0
      %2098 = vmatprep.subr.mxu0 0.0
      %2099 = vmatpush1.msra.mxu0 0.0
      %2100 = vmatprep.subr.mxu0 0.0
      %2101 = vmatpush1.msra.mxu0 %v2070
      %2102 = vmatprep.subr.mxu0 0.0
      %2103 = vmatpush1.msra.mxu0 %v1971
      %2104 = vmatprep.subr.mxu0 0.0
      %2105 = vmatpush2.msra.mxu0 0.0
      %2106 = vmatprep.subr.mxu0 0.0
      %2107 = vmatpush2.msra.mxu0 0.0
      %2108 = vmatprep.subr.mxu0 0.0
      %2109 = vmatpush2.msra.mxu0 0.0
      %2110 = vmatprep.subr.mxu0 0.0
      %2111 = vmatpush2.msra.mxu0 0.0
      %2112 = vmatprep.subr.mxu0 0.0
      %2113 = vmatpush2.msra.mxu0 0.0
      %2114 = vmatprep.subr.mxu0 0.0
      %2115 = vmatpush2.msra.mxu0 0.0
      %2116 = vmatprep.subr.mxu0 0.0
      %2117 = vmatpush2.msra.mxu0 0.0
      %2118 = vmatprep.subr.mxu0 0.0
      %2119 = vmatpush2.msra.mxu0 0.0
      %2120 = vmatprep.subr.mxu0 0.0
      %2121 = vmatpush2.msra.mxu0 0.0
      %2122 = vmatprep.subr.mxu0 0.0
      %2123 = vmatpush2.msra.mxu0 0.0
      %2124 = vmatprep.subr.mxu0 0.0
      %2125 = vmatpush2.msra.mxu0 0.0
      %2126 = vmatprep.subr.mxu0 0.0
      %2127 = vmatpush2.msra.mxu0 0.0
      %2128 = vmatprep.subr.mxu0 0.0
      %2129 = vmatpush2.msra.mxu0 0.0
      %2130 = vmatprep.subr.mxu0 0.0
      %2131 = vmatpush2.msra.mxu0 0.0
      %2132 = vmatprep.subr.mxu0 0.0
      %2133 = vmatpush2.msra.mxu0 0.0
      %2134 = vmatprep.subr.mxu0 0.0
      %2135 = vmatpush2.msra.mxu0 0.0
      %2136 = vmatprep.mubr.f32.mxu0 0.0
      %2137 = vmatmul.mubr.f32.gmra.mxu0 %v1974
      %v2138 = vpop.f32.mrf.mxu0
      %v2139 = vadd.f32 0.0, %v2138
      %v2140 = vpop.f32.mrf.mxu0
      %2141 = vmatprep.mubr.f32.mxu0 0.0
      %2142 = vmatmul.mubr.f32.gmra.mxu0 %v1977
      %v2143 = vpop.f32.mrf.mxu0
      %v2144 = vadd.f32 0.0, %v2143
      %v2145 = vpop.f32.mrf.mxu0
      %2146 = vmatprep.mubr.f32.mxu0 0.0
      %2147 = vmatmul.mubr.f32.gmra.mxu0 %v1980
      %v2148 = vpop.f32.mrf.mxu0
      %v2149 = vadd.f32 0.0, %v2148
      %v2150 = vpop.f32.mrf.mxu0
      %2151 = vmatprep.mubr.f32.mxu0 0.0
      %2152 = vmatmul.mubr.f32.gmra.mxu0 %v1983
      %v2153 = vpop.f32.mrf.mxu0
      %v2154 = vadd.f32 0.0, %v2153
      %v2155 = vpop.f32.mrf.mxu0
      %2156 = vmatprep.mubr.f32.mxu0 0.0
      %2157 = vmatmul.mubr.f32.gmra.mxu0 %v1986
      %v2158 = vpop.f32.mrf.mxu0
      %v2159 = vadd.f32 0.0, %v2158
      %v2160 = vpop.f32.mrf.mxu0
      %2161 = vmatprep.mubr.f32.mxu0 0.0
      %2162 = vmatmul.mubr.f32.gmra.mxu0 %v1989
      %v2163 = vpop.f32.mrf.mxu0
      %v2164 = vadd.f32 0.0, %v2163
      %v2165 = vpop.f32.mrf.mxu0
      %2166 = vmatprep.mubr.f32.mxu0 0.0
      %2167 = vmatmul.mubr.f32.gmra.mxu0 %v1992
      %v2168 = vpop.f32.mrf.mxu0
      %v2169 = vadd.f32 0.0, %v2168
      %v2170 = vpop.f32.mrf.mxu0
      %2171 = vmatprep.mubr.f32.mxu0 0.0
      %2172 = vmatmul.mubr.f32.gmra.mxu0 %v1995
      %v2173 = vpop.f32.mrf.mxu0
      %v2174 = vadd.f32 0.0, %v2173
      %v2175 = vpop.f32.mrf.mxu0
      %2176 = vmatprep.mubr.f32.mxu0 0.0
      %2177 = vmatmul.mubr.f32.gmra.mxu0 %v1998
      %v2178 = vpop.f32.mrf.mxu0
      %v2179 = vadd.f32 0.0, %v2178
      %v2180 = vpop.f32.mrf.mxu0
      %2181 = vmatprep.mubr.f32.mxu0 0.0
      %2182 = vmatmul.mubr.f32.gmra.mxu0 %v2001
      %v2183 = vpop.f32.mrf.mxu0
      %v2184 = vadd.f32 0.0, %v2183
      %v2185 = vpop.f32.mrf.mxu0
      %2186 = vmatprep.mubr.f32.mxu0 0.0
      %2187 = vmatmul.mubr.f32.gmra.mxu0 %v2004
      %v2188 = vpop.f32.mrf.mxu0
      %v2189 = vadd.f32 0.0, %v2188
      %v2190 = vpop.f32.mrf.mxu0
      %2191 = vmatprep.mubr.f32.mxu0 0.0
      %2192 = vmatmul.mubr.f32.gmra.mxu0 %v2007
      %v2193 = vpop.f32.mrf.mxu0
      %v2194 = vadd.f32 0.0, %v2193
      %v2195 = vpop.f32.mrf.mxu0
      %2196 = vmatprep.mubr.f32.mxu0 0.0
      %2197 = vmatmul.mubr.f32.gmra.mxu0 %v2010
      %v2198 = vpop.f32.mrf.mxu0
      %v2199 = vadd.f32 0.0, %v2198
      %v2200 = vpop.f32.mrf.mxu0
      %2201 = vmatprep.mubr.f32.mxu0 0.0
      %2202 = vmatmul.mubr.f32.gmra.mxu0 %v2013
      %v2203 = vpop.f32.mrf.mxu0
      %v2204 = vadd.f32 0.0, %v2203
      %v2205 = vpop.f32.mrf.mxu0
      %2206 = vmatprep.mubr.f32.mxu0 0.0
      %2207 = vmatmul.mubr.f32.gmra.mxu0 %v2016
      %v2208 = vpop.f32.mrf.mxu0
      %v2209 = vadd.f32 0.0, %v2208
      %v2210 = vpop.f32.mrf.mxu0
      %2211 = vmatprep.mubr.f32.mxu0 0.0
      %2212 = vmatmul.mubr.f32.gmra.mxu0 %v2019
      %v2213 = vpop.f32.mrf.mxu0
      %v2214 = vadd.f32 0.0, %v2213
      %v2215 = vpop.f32.mrf.mxu0
      %2216 = vmatprep.mubr.f32.mxu0 0.0
      %2217 = vmatmul.mubr.f32.gmra.mxu0 %v2022
      %v2218 = vpop.f32.mrf.mxu0
      %v2219 = vadd.f32 0.0, %v2218
      %v2220 = vpop.f32.mrf.mxu0
      %2221 = vmatprep.mubr.f32.mxu0 0.0
      %2222 = vmatmul.mubr.f32.gmra.mxu0 %v2025
      %v2223 = vpop.f32.mrf.mxu0
      %v2224 = vadd.f32 0.0, %v2223
      %v2225 = vpop.f32.mrf.mxu0
      %2226 = vmatprep.mubr.f32.mxu0 0.0
      %2227 = vmatmul.mubr.f32.gmra.mxu0 %v2028
      %v2228 = vpop.f32.mrf.mxu0
      %v2229 = vadd.f32 0.0, %v2228
      %v2230 = vpop.f32.mrf.mxu0
      %2231 = vmatprep.mubr.f32.mxu0 0.0
      %2232 = vmatmul.mubr.f32.gmra.mxu0 %v2031
      %v2233 = vpop.f32.mrf.mxu0
      %v2234 = vadd.f32 0.0, %v2233
      %v2235 = vpop.f32.mrf.mxu0
      %2236 = vmatprep.mubr.f32.mxu0 0.0
      %2237 = vmatmul.mubr.f32.gmra.mxu0 %v2034
      %v2238 = vpop.f32.mrf.mxu0
      %v2239 = vadd.f32 0.0, %v2238
      %v2240 = vpop.f32.mrf.mxu0
      %2241 = vmatprep.mubr.f32.mxu0 0.0
      %2242 = vmatmul.mubr.f32.gmra.mxu0 %v2037
      %v2243 = vpop.f32.mrf.mxu0
      %v2244 = vadd.f32 0.0, %v2243
      %v2245 = vpop.f32.mrf.mxu0
      %2246 = vmatprep.mubr.f32.mxu0 0.0
      %2247 = vmatmul.mubr.f32.gmra.mxu0 %v2040
      %v2248 = vpop.f32.mrf.mxu0
      %v2249 = vadd.f32 0.0, %v2248
      %v2250 = vpop.f32.mrf.mxu0
      %2251 = vmatprep.mubr.f32.mxu0 0.0
      %2252 = vmatmul.mubr.f32.gmra.mxu0 %v2043
      %v2253 = vpop.f32.mrf.mxu0
      %v2254 = vadd.f32 0.0, %v2253
      %v2255 = vpop.f32.mrf.mxu0
      %2256 = vmatprep.mubr.f32.mxu0 0.0
      %2257 = vmatmul.mubr.f32.gmra.mxu0 %v2046
      %v2258 = vpop.f32.mrf.mxu0
      %v2259 = vadd.f32 0.0, %v2258
      %v2260 = vpop.f32.mrf.mxu0
      %2261 = vmatprep.mubr.f32.mxu0 0.0
      %2262 = vmatmul.mubr.f32.gmra.mxu0 %v2049
      %v2263 = vpop.f32.mrf.mxu0
      %v2264 = vadd.f32 0.0, %v2263
      %v2265 = vpop.f32.mrf.mxu0
      %2266 = vmatprep.mubr.f32.mxu0 0.0
      %2267 = vmatmul.mubr.f32.gmra.mxu0 %v2052
      %v2268 = vpop.f32.mrf.mxu0
      %v2269 = vadd.f32 0.0, %v2268
      %v2270 = vpop.f32.mrf.mxu0
      %2271 = vmatprep.mubr.f32.mxu0 0.0
      %2272 = vmatmul.mubr.f32.gmra.mxu0 %v2055
      %v2273 = vpop.f32.mrf.mxu0
      %v2274 = vadd.f32 0.0, %v2273
      %v2275 = vpop.f32.mrf.mxu0
      %2276 = vmatprep.mubr.f32.mxu0 0.0
      %2277 = vmatmul.mubr.f32.gmra.mxu0 %v2058
      %v2278 = vpop.f32.mrf.mxu0
      %v2279 = vadd.f32 0.0, %v2278
      %v2280 = vpop.f32.mrf.mxu0
      %2281 = vmatprep.mubr.f32.mxu0 0.0
      %2282 = vmatmul.mubr.f32.gmra.mxu0 %v2061
      %v2283 = vpop.f32.mrf.mxu0
      %v2284 = vadd.f32 0.0, %v2283
      %v2285 = vpop.f32.mrf.mxu0
      %2286 = vmatprep.mubr.f32.mxu0 0.0
      %2287 = vmatmul.mubr.f32.gmra.mxu0 %v2064
      %v2288 = vpop.f32.mrf.mxu0
      %v2289 = vadd.f32 0.0, %v2288
      %v2290 = vpop.f32.mrf.mxu0
      %2291 = vmatprep.mubr.f32.mxu0 0.0
      %2292 = vmatmul.mubr.f32.gmra.mxu0 %v2067
      %v2293 = vpop.f32.mrf.mxu0
      %v2294 = vadd.f32 0.0, %v2293
      %v2295 = vpop.f32.mrf.mxu0
      %2296 = vdwg.mxu0
      %v2297 = vadd.f32 %v1486, %v2139
      %v2298 = vadd.f32 %v1491, %v2144
      %v2299 = vadd.f32 %v1496, %v2149
      %v2300 = vadd.f32 %v1501, %v2154
      %v2301 = vadd.f32 %v1506, %v2159
      %v2302 = vadd.f32 %v1511, %v2164
      %v2303 = vadd.f32 %v1516, %v2169
      %v2304 = vadd.f32 %v1521, %v2174
      %v2305 = vadd.f32 %v1526, %v2179
      %v2306 = vadd.f32 %v1531, %v2184
      %v2307 = vadd.f32 %v1536, %v2189
      %v2308 = vadd.f32 %v1541, %v2194
      %v2309 = vadd.f32 %v1546, %v2199
      %v2310 = vadd.f32 %v1551, %v2204
      %v2311 = vadd.f32 %v1556, %v2209
      %v2312 = vadd.f32 %v1561, %v2214
      %v2313 = vadd.f32 %v1566, %v2219
      %v2314 = vadd.f32 %v1571, %v2224
      %v2315 = vadd.f32 %v1576, %v2229
      %v2316 = vadd.f32 %v1581, %v2234
      %v2317 = vadd.f32 %v1586, %v2239
      %v2318 = vadd.f32 %v1591, %v2244
      %v2319 = vadd.f32 %v1596, %v2249
      %v2320 = vadd.f32 %v1601, %v2254
      %v2321 = vadd.f32 %v1606, %v2259
      %v2322 = vadd.f32 %v1611, %v2264
      %v2323 = vadd.f32 %v1616, %v2269
      %v2324 = vadd.f32 %v1621, %v2274
      %v2325 = vadd.f32 %v1626, %v2279
      %v2326 = vadd.f32 %v1631, %v2284
      %v2327 = vadd.f32 %v1636, %v2289
      %v2328 = vadd.f32 %v1641, %v2294
      %2329 = vst.msk [vmem:[%s208] sm:$0xff] %vm630, %v2297
      %2330 = vst.msk [vmem:[%s208 + $0x8] sm:$0xff] %vm630, %v2298
      %2331 = vst.msk [vmem:[%s208 + $0x10] sm:$0xff] %vm630, %v2299
      %2332 = vst.msk [vmem:[%s208 + $0x18] sm:$0xff] %vm630, %v2300
      %2333 = vst.msk [vmem:[%s208 + $0x20] sm:$0xff] %vm630, %v2301
      %2334 = vst.msk [vmem:[%s208 + $0x28] sm:$0xff] %vm630, %v2302
      %2335 = vst.msk [vmem:[%s208 + $0x30] sm:$0xff] %vm630, %v2303
      %2336 = vst.msk [vmem:[%s208 + $0x38] sm:$0xff] %vm630, %v2304
      %2337 = vst.msk [vmem:[%s208 + $0x40] sm:$0xff] %vm630, %v2305
      %2338 = vst.msk [vmem:[%s208 + $0x48] sm:$0xff] %vm630, %v2306
      %2339 = vst.msk [vmem:[%s208 + $0x50] sm:$0xff] %vm630, %v2307
      %2340 = vst.msk [vmem:[%s208 + $0x58] sm:$0xff] %vm630, %v2308
      %2341 = vst.msk [vmem:[%s208 + $0x60] sm:$0xff] %vm630, %v2309
      %2342 = vst.msk [vmem:[%s208 + $0x68] sm:$0xff] %vm630, %v2310
      %2343 = vst.msk [vmem:[%s208 + $0x70] sm:$0xff] %vm630, %v2311
      %2344 = vst.msk [vmem:[%s208 + $0x78] sm:$0xff] %vm630, %v2312
      %2345 = vst.msk [vmem:[%s208 + $0x80] sm:$0xff] %vm630, %v2313
      %2346 = vst.msk [vmem:[%s208 + $0x88] sm:$0xff] %vm630, %v2314
      %2347 = vst.msk [vmem:[%s208 + $0x90] sm:$0xff] %vm630, %v2315
      %2348 = vst.msk [vmem:[%s208 + $0x98] sm:$0xff] %vm630, %v2316
      %2349 = vst.msk [vmem:[%s208 + $0xa0] sm:$0xff] %vm630, %v2317
      %2350 = vst.msk [vmem:[%s208 + $0xa8] sm:$0xff] %vm630, %v2318
      %2351 = vst.msk [vmem:[%s208 + $0xb0] sm:$0xff] %vm630, %v2319
      %2352 = vst.msk [vmem:[%s208 + $0xb8] sm:$0xff] %vm630, %v2320
      %2353 = vst.msk [vmem:[%s208 + $0xc0] sm:$0xff] %vm630, %v2321
      %2354 = vst.msk [vmem:[%s208 + $0xc8] sm:$0xff] %vm630, %v2322
      %2355 = vst.msk [vmem:[%s208 + $0xd0] sm:$0xff] %vm630, %v2323
      %2356 = vst.msk [vmem:[%s208 + $0xd8] sm:$0xff] %vm630, %v2324
      %2357 = vst.msk [vmem:[%s208 + $0xe0] sm:$0xff] %vm630, %v2325
      %2358 = vst.msk [vmem:[%s208 + $0xe8] sm:$0xff] %vm630, %v2326
      %2359 = vst.msk [vmem:[%s208 + $0xf0] sm:$0xff] %vm630, %v2327
      %2360 = vst.msk [vmem:[%s208 + $0xf8] sm:$0xff] %vm630, %v2328
      %v2361 = vsel %vm630, %v2297, 0.0
      %v2362 = vsel %vm630, %v2298, 0.0
      %v2363 = vadd.f32 %v2361, %v2362
      %v2364 = vsel %vm630, %v2299, 0.0
      %v2365 = vadd.f32 %v2363, %v2364
      %v2366 = vsel %vm630, %v2300, 0.0
      %v2367 = vadd.f32 %v2365, %v2366
      %v2368 = vsel %vm630, %v2301, 0.0
      %v2369 = vadd.f32 %v2367, %v2368
      %v2370 = vsel %vm630, %v2302, 0.0
      %v2371 = vadd.f32 %v2369, %v2370
      %v2372 = vsel %vm630, %v2303, 0.0
      %v2373 = vadd.f32 %v2371, %v2372
      %v2374 = vsel %vm630, %v2304, 0.0
      %v2375 = vadd.f32 %v2373, %v2374
      %v2376 = vsel %vm630, %v2305, 0.0
      %v2377 = vadd.f32 %v2375, %v2376
      %v2378 = vsel %vm630, %v2306, 0.0
      %v2379 = vadd.f32 %v2377, %v2378
      %v2380 = vsel %vm630, %v2307, 0.0
      %v2381 = vadd.f32 %v2379, %v2380
      %v2382 = vsel %vm630, %v2308, 0.0
      %v2383 = vadd.f32 %v2381, %v2382
      %v2384 = vsel %vm630, %v2309, 0.0
      %v2385 = vadd.f32 %v2383, %v2384
      %v2386 = vsel %vm630, %v2310, 0.0
      %v2387 = vadd.f32 %v2385, %v2386
      %v2388 = vsel %vm630, %v2311, 0.0
      %v2389 = vadd.f32 %v2387, %v2388
      %v2390 = vsel %vm630, %v2312, 0.0
      %v2391 = vadd.f32 %v2389, %v2390
      %v2392 = vsel %vm630, %v2313, 0.0
      %v2393 = vadd.f32 %v2391, %v2392
      %v2394 = vsel %vm630, %v2314, 0.0
      %v2395 = vadd.f32 %v2393, %v2394
      %v2396 = vsel %vm630, %v2315, 0.0
      %v2397 = vadd.f32 %v2395, %v2396
      %v2398 = vsel %vm630, %v2316, 0.0
      %v2399 = vadd.f32 %v2397, %v2398
      %v2400 = vsel %vm630, %v2317, 0.0
      %v2401 = vadd.f32 %v2399, %v2400
      %v2402 = vsel %vm630, %v2318, 0.0
      %v2403 = vadd.f32 %v2401, %v2402
      %v2404 = vsel %vm630, %v2319, 0.0
      %v2405 = vadd.f32 %v2403, %v2404
      %v2406 = vsel %vm630, %v2320, 0.0
      %v2407 = vadd.f32 %v2405, %v2406
      %v2408 = vsel %vm630, %v2321, 0.0
      %v2409 = vadd.f32 %v2407, %v2408
      %v2410 = vsel %vm630, %v2322, 0.0
      %v2411 = vadd.f32 %v2409, %v2410
      %v2412 = vsel %vm630, %v2323, 0.0
      %v2413 = vadd.f32 %v2411, %v2412
      %v2414 = vsel %vm630, %v2324, 0.0
      %v2415 = vadd.f32 %v2413, %v2414
      %v2416 = vsel %vm630, %v2325, 0.0
      %v2417 = vadd.f32 %v2415, %v2416
      %v2418 = vsel %vm630, %v2326, 0.0
      %v2419 = vadd.f32 %v2417, %v2418
      %v2420 = vsel %vm630, %v2327, 0.0
      %v2421 = vadd.f32 %v2419, %v2420
      %v2422 = vsel %vm630, %v2328, 0.0
      %v2423 = vadd.f32 %v2421, %v2422
      %v2424 = vrot.slane %v2423, 4
      %v2425 = vadd.f32 %v2423, %v2424
      %v2426 = vrot.slane %v2425, 2
      %v2427 = vadd.f32 %v2425, %v2426
      %v2428 = vrot.slane %v2427, 1
      %v2429 = vadd.f32 %v2427, %v2428
      %v2430 = vadd.f32 %v2429, 0.0
      %v2431 = vmul.f32 %v2297, %v2297
      %v2432 = vmul.f32 %v2298, %v2298
      %v2433 = vmul.f32 %v2299, %v2299
      %v2434 = vmul.f32 %v2300, %v2300
      %v2435 = vmul.f32 %v2301, %v2301
      %v2436 = vmul.f32 %v2302, %v2302
      %v2437 = vmul.f32 %v2303, %v2303
      %v2438 = vmul.f32 %v2304, %v2304
      %v2439 = vmul.f32 %v2305, %v2305
      %v2440 = vmul.f32 %v2306, %v2306
      %v2441 = vmul.f32 %v2307, %v2307
      %v2442 = vmul.f32 %v2308, %v2308
      %v2443 = vmul.f32 %v2309, %v2309
      %v2444 = vmul.f32 %v2310, %v2310
      %v2445 = vmul.f32 %v2311, %v2311
      %v2446 = vmul.f32 %v2312, %v2312
      %v2447 = vmul.f32 %v2313, %v2313
      %v2448 = vmul.f32 %v2314, %v2314
      %v2449 = vmul.f32 %v2315, %v2315
      %v2450 = vmul.f32 %v2316, %v2316
      %v2451 = vmul.f32 %v2317, %v2317
      %v2452 = vmul.f32 %v2318, %v2318
      %v2453 = vmul.f32 %v2319, %v2319
      %v2454 = vmul.f32 %v2320, %v2320
      %v2455 = vmul.f32 %v2321, %v2321
      %v2456 = vmul.f32 %v2322, %v2322
      %v2457 = vmul.f32 %v2323, %v2323
      %v2458 = vmul.f32 %v2324, %v2324
      %v2459 = vmul.f32 %v2325, %v2325
      %v2460 = vmul.f32 %v2326, %v2326
      %v2461 = vmul.f32 %v2327, %v2327
      %v2462 = vmul.f32 %v2328, %v2328
      %v2463 = vsel %vm630, %v2431, 0.0
      %v2464 = vsel %vm630, %v2432, 0.0
      %v2465 = vadd.f32 %v2463, %v2464
      %v2466 = vsel %vm630, %v2433, 0.0
      %v2467 = vadd.f32 %v2465, %v2466
      %v2468 = vsel %vm630, %v2434, 0.0
      %v2469 = vadd.f32 %v2467, %v2468
      %v2470 = vsel %vm630, %v2435, 0.0
      %v2471 = vadd.f32 %v2469, %v2470
      %v2472 = vsel %vm630, %v2436, 0.0
      %v2473 = vadd.f32 %v2471, %v2472
      %v2474 = vsel %vm630, %v2437, 0.0
      %v2475 = vadd.f32 %v2473, %v2474
      %v2476 = vsel %vm630, %v2438, 0.0
      %v2477 = vadd.f32 %v2475, %v2476
      %v2478 = vsel %vm630, %v2439, 0.0
      %v2479 = vadd.f32 %v2477, %v2478
      %v2480 = vsel %vm630, %v2440, 0.0
      %v2481 = vadd.f32 %v2479, %v2480
      %v2482 = vsel %vm630, %v2441, 0.0
      %v2483 = vadd.f32 %v2481, %v2482
      %v2484 = vsel %vm630, %v2442, 0.0
      %v2485 = vadd.f32 %v2483, %v2484
      %v2486 = vsel %vm630, %v2443, 0.0
      %v2487 = vadd.f32 %v2485, %v2486
      %v2488 = vsel %vm630, %v2444, 0.0
      %v2489 = vadd.f32 %v2487, %v2488
      %v2490 = vsel %vm630, %v2445, 0.0
      %v2491 = vadd.f32 %v2489, %v2490
      %v2492 = vsel %vm630, %v2446, 0.0
      %v2493 = vadd.f32 %v2491, %v2492
      %v2494 = vsel %vm630, %v2447, 0.0
      %v2495 = vadd.f32 %v2493, %v2494
      %v2496 = vsel %vm630, %v2448, 0.0
      %v2497 = vadd.f32 %v2495, %v2496
      %v2498 = vsel %vm630, %v2449, 0.0
      %v2499 = vadd.f32 %v2497, %v2498
      %v2500 = vsel %vm630, %v2450, 0.0
      %v2501 = vadd.f32 %v2499, %v2500
      %v2502 = vsel %vm630, %v2451, 0.0
      %v2503 = vadd.f32 %v2501, %v2502
      %v2504 = vsel %vm630, %v2452, 0.0
      %v2505 = vadd.f32 %v2503, %v2504
      %v2506 = vsel %vm630, %v2453, 0.0
      %v2507 = vadd.f32 %v2505, %v2506
      %v2508 = vsel %vm630, %v2454, 0.0
      %v2509 = vadd.f32 %v2507, %v2508
      %v2510 = vsel %vm630, %v2455, 0.0
      %v2511 = vadd.f32 %v2509, %v2510
      %v2512 = vsel %vm630, %v2456, 0.0
      %v2513 = vadd.f32 %v2511, %v2512
      %v2514 = vsel %vm630, %v2457, 0.0
      %v2515 = vadd.f32 %v2513, %v2514
      %v2516 = vsel %vm630, %v2458, 0.0
      %v2517 = vadd.f32 %v2515, %v2516
      %v2518 = vsel %vm630, %v2459, 0.0
      %v2519 = vadd.f32 %v2517, %v2518
      %v2520 = vsel %vm630, %v2460, 0.0
      %v2521 = vadd.f32 %v2519, %v2520
      %v2522 = vsel %vm630, %v2461, 0.0
      %v2523 = vadd.f32 %v2521, %v2522
      %v2524 = vsel %vm630, %v2462, 0.0
      %v2525 = vadd.f32 %v2523, %v2524
      %v2526 = vrot.slane %v2525, 4
      %v2527 = vadd.f32 %v2525, %v2526
      %v2528 = vrot.slane %v2527, 2
      %v2529 = vadd.f32 %v2527, %v2528
      %v2530 = vrot.slane %v2529, 1
      %v2531 = vadd.f32 %v2529, %v2530
      %v2532 = vadd.f32 %v2531, 0.0
      %vm2533 = vcmask 57344
      %2534 = vst.msk [vmem:[%s211] sm:$0x1] %vm2533, %v2430
      %2535 = vst.msk [vmem:[%s214] sm:$0x1] %vm2533, %v2532
      %p2536 = scmp.lt.s32.totalorder %s16, 1
      %s2537 = scalar_select %p2536, %s16, 1
      %s2538 = smul.addr %s2537, 32
      %s2539 = smul.addr %s2538, 8
      %s2540 = scalar_lea.vmem %s2, %s2539
      %p2541 = scmp.lt.s32.totalorder %s16, 1
      %s2542 = scalar_select %p2541, %s16, 1
      %s2543 = scalar_lea.vmem %s3, %s2542
      %p2544 = scmp.lt.s32.totalorder %s16, 1
      %s2545 = scalar_select %p2544, %s16, 1
      %s2546 = scalar_lea.vmem %s4, %s2545
      // Predicated region
      $region29: #{conv_block_forward.2} parent=27 // pred_check
        %p2547 = pneg %p81
      $region30: #{conv_block_forward.2} parent=27 // pred_check_branch
        %2549 = sbr.rel (%p2547) target = $region32
      $region31: #{conv_block_forward.2} parent=27 // pred_region
        _
      $region32: #{conv_block_forward.2} parent=27 // pred_fallthru
        _
      // Predicated region
      $region33: #{conv_block_forward.2} parent=27 // pred_check
        %p2550 = pneg %p107
      $region34: #{conv_block_forward.2} parent=27 // pred_check_branch
        %2552 = sbr.rel (%p2550) target = $region36
      $region35: #{conv_block_forward.2} parent=27 // pred_region
        _
      $region36: #{conv_block_forward.2} parent=27 // pred_fallthru
        _
      // Predicated region
      $region37: #{conv_block_forward.2} parent=27 // pred_check
        %p2553 = pneg %p133
      $region38: #{conv_block_forward.2} parent=27 // pred_check_branch
        %2555 = sbr.rel (%p2553) target = $region40
      $region39: #{conv_block_forward.2} parent=27 // pred_region
        _
      $region40: #{conv_block_forward.2} parent=27 // pred_fallthru
        _
    $region28: #{conv_block_forward.2} parent=5 // pred_fallthru
      _
    %p2556 = scmp.le.s32.totalorder 2, %s11
    // Predicated region
    $region41: #{conv_block_forward.2} parent=5 // pred_check
      %p2557 = pneg %p2556
    $region42: #{conv_block_forward.2} parent=5 // pred_check_branch
      %2559 = sbr.rel (%p2557) target = $region44
    $region43: #{conv_block_forward.2} parent=5 // pred_region
      %s2560 = ssub.s32 %s11, 2
      // Predicated region
      $region45: #{conv_block_forward.2} parent=43 // pred_check
        %p2561 = pneg %p87
      $region46: #{conv_block_forward.2} parent=43 // pred_check_branch
        %2563 = sbr.rel (%p2561) target = $region48
      $region47: #{conv_block_forward.2} parent=43 // pred_region
        %p2564 = scmp.lt.s32.totalorder %s17, 1
        %s2565 = scalar_select %p2564, %s17, 1
        %s2566 = smul.addr %s2565, 32
        %s2567 = smul.addr %s2566, 8
        %s2568 = scalar_lea.vmem %s2, %s2567
      $region48: #{conv_block_forward.2} parent=43 // pred_fallthru
        _
      // Predicated region
      $region49: #{conv_block_forward.2} parent=43 // pred_check
        %p2569 = pneg %p113
      $region50: #{conv_block_forward.2} parent=43 // pred_check_branch
        %2571 = sbr.rel (%p2569) target = $region52
      $region51: #{conv_block_forward.2} parent=43 // pred_region
        %p2572 = scmp.lt.s32.totalorder %s17, 1
        %s2573 = scalar_select %p2572, %s17, 1
        %s2574 = scalar_lea.vmem %s3, %s2573
      $region52: #{conv_block_forward.2} parent=43 // pred_fallthru
        _
      // Predicated region
      $region53: #{conv_block_forward.2} parent=43 // pred_check
        %p2575 = pneg %p139
      $region54: #{conv_block_forward.2} parent=43 // pred_check_branch
        %2577 = sbr.rel (%p2575) target = $region56
      $region55: #{conv_block_forward.2} parent=43 // pred_region
        %p2578 = scmp.lt.s32.totalorder %s17, 1
        %s2579 = scalar_select %p2578, %s17, 1
        %s2580 = scalar_lea.vmem %s4, %s2579
      $region56: #{conv_block_forward.2} parent=43 // pred_fallthru
        _
    $region44: #{conv_block_forward.2} parent=5 // pred_fallthru
      _
  $region6: #{conv_block_forward.2} parent=0 // loop_footer
    %s15 = sadd.s32 1, %s11
  $region7: #{conv_block_forward.2} parent=0 // loop_footer_branch
    %10 = sbr.rel target = $region3
  $region8: #{conv_block_forward.2} parent=0 // loop_exit
    _

</llo_original>
